<compile_context>
chip_gen: v7x
topology: tpu7x:2x2x1
jax: 0.10.0
libtpu: 0.0.40
codegen_flags: <defaults>
</compile_context>

<pallas_src>
import numpy as np
import jax
import jax.numpy as jnp
from jax import lax
from jax.experimental import pallas as pl
from jax.experimental.pallas import tpu as pltpu


# ----------------------------------------------------------------------------
# Host-side constant builders
# ----------------------------------------------------------------------------
def _bilinear_matrix(in_size, out_size):
    """A (out,in) with A @ x == 1-D bilinear upsample, align_corners=True."""
    A = np.zeros((out_size, in_size), dtype=np.float32)
    if in_size == 1:
        A[:, 0] = 1.0
        return A
    scale = (in_size - 1) / (out_size - 1)
    for i in range(out_size):
        src = i * scale
        i0 = min(int(np.floor(src)), in_size - 1)
        i1 = min(i0 + 1, in_size - 1)
        f = src - i0
        A[i, i0] += 1.0 - f
        A[i, i1] += f
    return A


def _flat_layout(H, W):
    """Constants of the padded, flattened (row-major) feature-map layout."""
    Ho, Wo = 2 * H, 2 * W
    Hp, Wp = Ho + 2, Wo + 2
    s0 = (-Wp) % 128        # base offset of the padded image inside the flat row
    if s0 == 0:             # keep >= 1 so the (kh=0, kw=0) tap slice is in bounds
        s0 = 128
    # s0 + Wp is a multiple of 128 -> conv outputs are re-inserted at an
    # aligned lane offset.  Row length rounded up to a multiple of 128.
    L = -(-(s0 + Hp * Wp + 1) // 128) * 128
    return Ho, Wo, Hp, Wp, s0, L


def _upsample_to_flat_matrix(H, W):
    """(H*W, L) matrix: x0_flat @ mat == bilinearly upsampled image scattered
    directly into the zero-padded flat layout (zeros on the pad border and the
    alignment margins)."""
    Ho, Wo, Hp, Wp, s0, L = _flat_layout(H, W)
    Ah = _bilinear_matrix(H, Ho)            # (Ho, H)
    Aw = _bilinear_matrix(W, Wo)            # (Wo, W)
    K = np.einsum("ph,qw->pqhw", Ah, Aw).reshape(Ho * Wo, H * W)
    mat = np.zeros((H * W, L), dtype=np.float32)
    cols = s0 + (1 + np.arange(Ho))[:, None] * Wp + (1 + np.arange(Wo))[None, :]
    mat[:, cols.reshape(-1)] = K.T
    return mat


def _interior_mask(Ho, Wo):
    """(1, Ho*Wp) mask: 1 on real output columns, 0 on the 2 wrapped columns
    per row (they become conv2's zero horizontal padding)."""
    Wp = Wo + 2
    m = np.zeros((Ho, Wp), dtype=np.float32)
    m[:, 1:1 + Wo] = 1.0
    return m.reshape(1, Ho * Wp)


# ----------------------------------------------------------------------------
# Fused Pallas kernel: upsample + concat + conv3x3/ReLU + conv3x3/ReLU
# ----------------------------------------------------------------------------
def _make_unet_up_kernel(Cin0, Cskip, Wp, HoWp, s0):
    tap0 = s0 - 1          # flat offset of the (kh=0, kw=0) tap window
    y_off = s0 + Wp        # 128-aligned offset where a conv output re-enters

    def conv3x3_relu(buf_ref, w_ref, b_ref):
        full = buf_ref[...]                                     # (Cin, L)
        taps = [full[:, tap0 + kh * Wp + kw:
                        tap0 + kh * Wp + kw + HoWp]
                for kh in range(3) for kw in range(3)]
        col = jnp.concatenate(taps, axis=0)                     # (9*Cin, Ho*Wp)
        acc = jnp.dot(w_ref[...], col,
                      preferred_element_type=jnp.float32)       # (Cout, Ho*Wp)
        return jnp.maximum(acc + b_ref[...], 0.0)

    def kernel(up_ref, x_ref, skip_ref, w1_ref, b1_ref, w2_ref, b2_ref,
               mask_ref, o_ref, cat_buf, mid_buf):
        # Bilinear x2 upsample folded into one lane-dense matmul that lands
        # directly in the padded flat layout; skip channels are appended
        # below it (== torch.cat([up, skip], dim=1)).
        cat_buf[0:Cin0, :] = jnp.dot(x_ref[0], up_ref[...],
                                     preferred_element_type=jnp.float32)
        cat_buf[Cin0:Cin0 + Cskip, :] = skip_ref[0]

        # Conv1 + ReLU.  Zero the wrapped columns so they become conv2's
        # horizontal zero padding, then re-insert at the aligned offset.
        y1 = conv3x3_relu(cat_buf, w1_ref, b1_ref) * mask_ref[...]
        mid_buf[...] = jnp.zeros_like(mid_buf)
        mid_buf[:, y_off:y_off + HoWp] = y1

        # Conv2 + ReLU -> lane-dense (Cout, Ho*Wp) output block.
        o_ref[0] = conv3x3_relu(mid_buf, w2_ref, b2_ref)

    return kernel


def unet_up_forward(params, input0, *skips):
    """Forward of UNetUp(is_deconv=False, is_batch_norm=False, n=2) in NCHW."""
    N, Cin0, H, W = input0.shape
    Ho, Wo, Hp, Wp, s0, L = _flat_layout(H, W)
    HoWp = Ho * Wp

    skip = skips[0] if len(skips) == 1 else jnp.concatenate(skips, axis=1)
    Cskip = skip.shape[1]
    Ccat = Cin0 + Cskip
    Cout = params["b1"].shape[0]

    # Constants / weight repacking (tiny, folded at trace time).
    up_mat = jnp.asarray(_upsample_to_flat_matrix(H, W))        # (H*W, L)
    mask = jnp.asarray(_interior_mask(Ho, Wo))                  # (1, Ho*Wp)
    # im2col ordering: tap-major (kh, kw), channel-minor -> OIHW -> (O, kh, kw, I)
    w1m = jnp.transpose(params["w1"], (0, 2, 3, 1)).reshape(Cout, 9 * Ccat)
    w2m = jnp.transpose(params["w2"], (0, 2, 3, 1)).reshape(Cout, 9 * Cout)
    b1c = params["b1"].reshape(Cout, 1)
    b2c = params["b2"].reshape(Cout, 1)

    # Tiny wrapper glue: flatten x0; place the skip into the padded flat layout.
    x_flat = input0.reshape(N, Cin0, H * W)
    skip_pad = jnp.pad(skip, ((0, 0), (0, 0), (1, 1), (1, 1)))
    skip_flat = jnp.pad(skip_pad.reshape(N, Cskip, Hp * Wp),
                        ((0, 0), (0, 0), (s0, L - s0 - Hp * Wp)))

    kernel = _make_unet_up_kernel(Cin0, Cskip, Wp, HoWp, s0)

    out = pl.pallas_call(
        kernel,
        out_shape=jax.ShapeDtypeStruct((N, Cout, HoWp), jnp.float32),
        grid=(N,),
        in_specs=[
            pl.BlockSpec((H * W, L), lambda n: (0, 0)),           # UP_MAT
            pl.BlockSpec((1, Cin0, H * W), lambda n: (n, 0, 0)),  # x0 (flat)
            pl.BlockSpec((1, Cskip, L), lambda n: (n, 0, 0)),     # skip (flat)
            pl.BlockSpec((Cout, 9 * Ccat), lambda n: (0, 0)),     # w1 (im2col)
            pl.BlockSpec((Cout, 1), lambda n: (0, 0)),            # b1
            pl.BlockSpec((Cout, 9 * Cout), lambda n: (0, 0)),     # w2 (im2col)
            pl.BlockSpec((Cout, 1), lambda n: (0, 0)),            # b2
            pl.BlockSpec((1, HoWp), lambda n: (0, 0)),            # interior mask
        ],
        out_specs=pl.BlockSpec((1, Cout, HoWp), lambda n: (n, 0, 0)),
        scratch_shapes=[
            pltpu.VMEM((Ccat, L), jnp.float32),   # concat(up, skip), padded flat
            pltpu.VMEM((Cout, L), jnp.float32),   # conv1 activation, padded flat
        ],
        compiler_params=pltpu.CompilerParams(
            dimension_semantics=("parallel",)),
    )(up_mat, x_flat, skip_flat, w1m, b1c, w2m, b2c, mask)

    # Strip the 2 wrapped columns per row -> (N, Cout, Ho, Wo), already NCHW.
    return out.reshape(N, Cout, Ho, Wp)[:, :, :, 1:1 + Wo]


# ----------------------------------------------------------------------------
# Parameter init (torch: kaiming_normal_(fan_in) weights, default-uniform bias)
# ----------------------------------------------------------------------------
def init_params(key, in_ch, out_ch):
    k1, k2, k3, k4 = jax.random.split(key, 4)

    def kaiming(k, cin, cout):                      # OIHW
        fan_in = cin * 9
        std = float(np.sqrt(2.0 / fan_in))
        return jax.random.normal(k, (cout, cin, 3, 3), jnp.float32) * std

    def bias(k, cin, cout):
        bound = float(1.0 / np.sqrt(cin * 9))
        return jax.random.uniform(k, (cout,), jnp.float32, -bound, bound)

    return {
        "w1": kaiming(k1, in_ch, out_ch), "b1": bias(k2, in_ch, out_ch),
        "w2": kaiming(k3, out_ch, out_ch), "b2": bias(k4, out_ch, out_ch),
    }


# ----------------------------------------------------------------------------
# Pure-JAX reference (independent, full f32 precision) for correctness only
# ----------------------------------------------------------------------------
def reference_forward(params, input0, *skips):
    N, C, H, W = input0.shape
    ah = jnp.asarray(_bilinear_matrix(H, 2 * H))
    aw = jnp.asarray(_bilinear_matrix(W, 2 * W))
    x = jnp.einsum("ph,nchw->ncpw", ah, input0, precision=lax.Precision.HIGHEST)
    x = jnp.einsum("qw,ncpw->ncpq", aw, x, precision=lax.Precision.HIGHEST)
    for s in skips:
        x = jnp.concatenate([x, s], axis=1)

    def conv(x, w_oihw, b):
        y = lax.conv_general_dilated(
            x, w_oihw, (1, 1), ((1, 1), (1, 1)),
            dimension_numbers=("NCHW", "OIHW", "NCHW"),
            precision=lax.Precision.HIGHEST)
        return jnp.maximum(y + b.reshape(1, -1, 1, 1), 0.0)

    x = conv(x, params["w1"], params["b1"])
    x = conv(x, params["w2"], params["b2"])
    return x


if __name__ == "__main__":
    key = jax.random.PRNGKey(0)
    k_x, k_skip, k_p = jax.random.split(key, 3)

    # UNetUp(input_dim=4, output_dim=4, is_deconv=False, n_concat=2)
    N, H, W = 2, 16, 16
    input_dim, output_dim, n_concat = 4, 4, 2

    input0 = jax.random.normal(k_x, (N, input_dim, H, W), jnp.float32)
    skip = jax.random.normal(k_skip, (N, output_dim, 2 * H, 2 * W), jnp.float32)
    params = init_params(k_p, output_dim * n_concat, output_dim)

    fwd = jax.jit(unet_up_forward)
    out = jax.block_until_ready(fwd(params, input0, skip))
    assert out.shape == (N, output_dim, 2 * H, 2 * W), out.shape

    ref = reference_forward(params, input0, skip)
    # Tolerance accounts for default (single-pass bf16-product) MXU precision
    # in the kernel vs. the HIGHEST-precision f32 reference.
    np.testing.assert_allclose(np.asarray(out), np.asarray(ref),
                               rtol=5e-2, atol=5e-2)
    print("KERNEL_OK")
</pallas_src>

<mosaic_0001>
module attributes {stable_mosaic.version = 11 : i64} {
  func.func @kernel(%arg0: i32, %arg1: memref<256x1280xf32, #tpu.memory_space<vmem>>, %arg2: memref<1x4x256xf32, #tpu.memory_space<vmem>>, %arg3: memref<1x4x1280xf32, #tpu.memory_space<vmem>>, %arg4: memref<4x72xf32, #tpu.memory_space<vmem>>, %arg5: memref<4x1xf32, #tpu.memory_space<vmem>>, %arg6: memref<4x36xf32, #tpu.memory_space<vmem>>, %arg7: memref<4x1xf32, #tpu.memory_space<vmem>>, %arg8: memref<1x1088xf32, #tpu.memory_space<vmem>>, %arg9: memref<1x4x1088xf32, #tpu.memory_space<vmem>>, %arg10: memref<8x1280xf32, #tpu.memory_space<vmem>>, %arg11: memref<4x1280xf32, #tpu.memory_space<vmem>>) attributes {dimension_semantics = [#tpu.dimension_semantics<parallel>], iteration_bounds = array<i64: 2>, scalar_prefetch = 0 : i64, scratch_operands = 2 : i64, tpu.core_type = #tpu.core_type<tc>, window_params = [{pipeline_mode = #tpu.pipeline_mode<synchronous>, transform_indices = @transform_0, window_bounds = array<i64: 256, 1280>}, {transform_indices = @transform_1, window_bounds = array<i64: 1, 4, 256>}, {transform_indices = @transform_2, window_bounds = array<i64: 1, 4, 1280>}, {pipeline_mode = #tpu.pipeline_mode<synchronous>, transform_indices = @transform_3, window_bounds = array<i64: 4, 72>}, {pipeline_mode = #tpu.pipeline_mode<synchronous>, transform_indices = @transform_4, window_bounds = array<i64: 4, 1>}, {pipeline_mode = #tpu.pipeline_mode<synchronous>, transform_indices = @transform_5, window_bounds = array<i64: 4, 36>}, {pipeline_mode = #tpu.pipeline_mode<synchronous>, transform_indices = @transform_6, window_bounds = array<i64: 4, 1>}, {pipeline_mode = #tpu.pipeline_mode<synchronous>, transform_indices = @transform_7, window_bounds = array<i64: 1, 1088>}, {transform_indices = @transform_8, window_bounds = array<i64: 1, 4, 1088>}]} {
    %c0 = arith.constant 0 : index
    %c0_0 = arith.constant 0 : index
    %c0_1 = arith.constant 0 : index
    %0 = vector.load %arg2[%c0, %c0_0, %c0_1] : memref<1x4x256xf32, #tpu.memory_space<vmem>>, vector<1x4x256xf32>
    %1 = vector.shape_cast %0 : vector<1x4x256xf32> to vector<4x256xf32>
    %c0_2 = arith.constant 0 : index
    %c0_3 = arith.constant 0 : index
    %2 = vector.load %arg1[%c0_2, %c0_3] : memref<256x1280xf32, #tpu.memory_space<vmem>>, vector<256x1280xf32>
    %cst = arith.constant dense<0.000000e+00> : vector<4x1280xf32>
    %3 = tpu.matmul %1, %2, %cst {dimension_numbers = #tpu.dot_dimension_numbers<[1], [0], [0], [1], [0, 0, 1, 1], [], []>} : vector<4x256xf32>, vector<256x1280xf32>, vector<4x1280xf32> -> vector<4x1280xf32>
    %c0_4 = arith.constant 0 : index
    %c0_5 = arith.constant 0 : index
    %4 = vector.load %arg10[%c0_4, %c0_5] : memref<8x1280xf32, #tpu.memory_space<vmem>>, vector<4x1280xf32>
    tpu.vector_store %arg10[%c0_4, %c0_5], %3 {strides = array<i32>} : memref<8x1280xf32, #tpu.memory_space<vmem>>, vector<4x1280xf32>,
    %c0_6 = arith.constant 0 : index
    %c0_7 = arith.constant 0 : index
    %c0_8 = arith.constant 0 : index
    %5 = vector.load %arg3[%c0_6, %c0_7, %c0_8] : memref<1x4x1280xf32, #tpu.memory_space<vmem>>, vector<1x4x1280xf32>
    %6 = vector.shape_cast %5 : vector<1x4x1280xf32> to vector<4x1280xf32>
    %c4 = arith.constant 4 : index
    %c0_9 = arith.constant 0 : index
    %7 = vector.load %arg10[%c4, %c0_9] : memref<8x1280xf32, #tpu.memory_space<vmem>>, vector<4x1280xf32>
    tpu.vector_store %arg10[%c4, %c0_9], %6 {strides = array<i32>} : memref<8x1280xf32, #tpu.memory_space<vmem>>, vector<4x1280xf32>,
    %c0_10 = arith.constant 0 : index
    %c0_11 = arith.constant 0 : index
    %8 = vector.load %arg10[%c0_10, %c0_11] : memref<8x1280xf32, #tpu.memory_space<vmem>>, vector<8x1280xf32>
    %9 = vector.extract_strided_slice %8 {offsets = [0, 93], sizes = [8, 1088], strides = [1, 1]} : vector<8x1280xf32> to vector<8x1088xf32>
    %10 = vector.extract_strided_slice %8 {offsets = [0, 94], sizes = [8, 1088], strides = [1, 1]} : vector<8x1280xf32> to vector<8x1088xf32>
    %11 = vector.extract_strided_slice %8 {offsets = [0, 95], sizes = [8, 1088], strides = [1, 1]} : vector<8x1280xf32> to vector<8x1088xf32>
    %12 = vector.extract_strided_slice %8 {offsets = [0, 127], sizes = [8, 1088], strides = [1, 1]} : vector<8x1280xf32> to vector<8x1088xf32>
    %13 = vector.extract_strided_slice %8 {offsets = [0, 128], sizes = [8, 1088], strides = [1, 1]} : vector<8x1280xf32> to vector<8x1088xf32>
    %14 = vector.extract_strided_slice %8 {offsets = [0, 129], sizes = [8, 1088], strides = [1, 1]} : vector<8x1280xf32> to vector<8x1088xf32>
    %15 = vector.extract_strided_slice %8 {offsets = [0, 161], sizes = [8, 1088], strides = [1, 1]} : vector<8x1280xf32> to vector<8x1088xf32>
    %16 = vector.extract_strided_slice %8 {offsets = [0, 162], sizes = [8, 1088], strides = [1, 1]} : vector<8x1280xf32> to vector<8x1088xf32>
    %17 = vector.extract_strided_slice %8 {offsets = [0, 163], sizes = [8, 1088], strides = [1, 1]} : vector<8x1280xf32> to vector<8x1088xf32>
    %18 = tpu.concatenate %9, %10, %11, %12, %13, %14, %15, %16, %17 in 0 : vector<8x1088xf32>, vector<8x1088xf32>, vector<8x1088xf32>, vector<8x1088xf32>, vector<8x1088xf32>, vector<8x1088xf32>, vector<8x1088xf32>, vector<8x1088xf32>, vector<8x1088xf32> -> vector<72x1088xf32>
    %c0_12 = arith.constant 0 : index
    %c0_13 = arith.constant 0 : index
    %19 = vector.load %arg4[%c0_12, %c0_13] : memref<4x72xf32, #tpu.memory_space<vmem>>, vector<4x72xf32>
    %cst_14 = arith.constant dense<0.000000e+00> : vector<4x1088xf32>
    %20 = tpu.matmul %19, %18, %cst_14 {dimension_numbers = #tpu.dot_dimension_numbers<[1], [0], [0], [1], [0, 0, 1, 1], [], []>} : vector<4x72xf32>, vector<72x1088xf32>, vector<4x1088xf32> -> vector<4x1088xf32>
    %c0_15 = arith.constant 0 : index
    %c0_16 = arith.constant 0 : index
    %21 = vector.load %arg5[%c0_15, %c0_16] : memref<4x1xf32, #tpu.memory_space<vmem>>, vector<4x1xf32>
    %22 = vector.broadcast %21 : vector<4x1xf32> to vector<4x1088xf32>
    %23 = arith.addf %20, %22 : vector<4x1088xf32>
    %cst_17 = arith.constant 0.000000e+00 : f32
    %24 = vector.broadcast %cst_17 : f32 to vector<4x1088xf32>
    %25 = arith.maximumf %23, %24 : vector<4x1088xf32>
    %c0_18 = arith.constant 0 : index
    %c0_19 = arith.constant 0 : index
    %26 = vector.load %arg8[%c0_18, %c0_19] : memref<1x1088xf32, #tpu.memory_space<vmem>>, vector<1x1088xf32>
    %27 = vector.broadcast %26 : vector<1x1088xf32> to vector<4x1088xf32>
    %28 = arith.mulf %25, %27 : vector<4x1088xf32>
    %cst_20 = arith.constant 0.000000e+00 : f32
    %29 = vector.broadcast %cst_20 : f32 to vector<4x1280xf32>
    %c0_21 = arith.constant 0 : index
    %c0_22 = arith.constant 0 : index
    %30 = vector.load %arg11[%c0_21, %c0_22] : memref<4x1280xf32, #tpu.memory_space<vmem>>, vector<4x1280xf32>
    tpu.vector_store %arg11[%c0_21, %c0_22], %29 {strides = array<i32>} : memref<4x1280xf32, #tpu.memory_space<vmem>>, vector<4x1280xf32>,
    %c0_23 = arith.constant 0 : index
    %c128 = arith.constant 128 : index
    %31 = vector.load %arg11[%c0_23, %c128] : memref<4x1280xf32, #tpu.memory_space<vmem>>, vector<4x1088xf32>
    tpu.vector_store %arg11[%c0_23, %c128], %28 {strides = array<i32>} : memref<4x1280xf32, #tpu.memory_space<vmem>>, vector<4x1088xf32>,
    %c0_24 = arith.constant 0 : index
    %c0_25 = arith.constant 0 : index
    %32 = vector.load %arg11[%c0_24, %c0_25] : memref<4x1280xf32, #tpu.memory_space<vmem>>, vector<4x1280xf32>
    %33 = vector.extract_strided_slice %32 {offsets = [0, 93], sizes = [4, 1088], strides = [1, 1]} : vector<4x1280xf32> to vector<4x1088xf32>
    %34 = vector.extract_strided_slice %32 {offsets = [0, 94], sizes = [4, 1088], strides = [1, 1]} : vector<4x1280xf32> to vector<4x1088xf32>
    %35 = vector.extract_strided_slice %32 {offsets = [0, 95], sizes = [4, 1088], strides = [1, 1]} : vector<4x1280xf32> to vector<4x1088xf32>
    %36 = vector.extract_strided_slice %32 {offsets = [0, 127], sizes = [4, 1088], strides = [1, 1]} : vector<4x1280xf32> to vector<4x1088xf32>
    %37 = vector.extract_strided_slice %32 {offsets = [0, 128], sizes = [4, 1088], strides = [1, 1]} : vector<4x1280xf32> to vector<4x1088xf32>
    %38 = vector.extract_strided_slice %32 {offsets = [0, 129], sizes = [4, 1088], strides = [1, 1]} : vector<4x1280xf32> to vector<4x1088xf32>
    %39 = vector.extract_strided_slice %32 {offsets = [0, 161], sizes = [4, 1088], strides = [1, 1]} : vector<4x1280xf32> to vector<4x1088xf32>
    %40 = vector.extract_strided_slice %32 {offsets = [0, 162], sizes = [4, 1088], strides = [1, 1]} : vector<4x1280xf32> to vector<4x1088xf32>
    %41 = vector.extract_strided_slice %32 {offsets = [0, 163], sizes = [4, 1088], strides = [1, 1]} : vector<4x1280xf32> to vector<4x1088xf32>
    %42 = tpu.concatenate %33, %34, %35, %36, %37, %38, %39, %40, %41 in 0 : vector<4x1088xf32>, vector<4x1088xf32>, vector<4x1088xf32>, vector<4x1088xf32>, vector<4x1088xf32>, vector<4x1088xf32>, vector<4x1088xf32>, vector<4x1088xf32>, vector<4x1088xf32> -> vector<36x1088xf32>
    %c0_26 = arith.constant 0 : index
    %c0_27 = arith.constant 0 : index
    %43 = vector.load %arg6[%c0_26, %c0_27] : memref<4x36xf32, #tpu.memory_space<vmem>>, vector<4x36xf32>
    %cst_28 = arith.constant dense<0.000000e+00> : vector<4x1088xf32>
    %44 = tpu.matmul %43, %42, %cst_28 {dimension_numbers = #tpu.dot_dimension_numbers<[1], [0], [0], [1], [0, 0, 1, 1], [], []>} : vector<4x36xf32>, vector<36x1088xf32>, vector<4x1088xf32> -> vector<4x1088xf32>
    %c0_29 = arith.constant 0 : index
    %c0_30 = arith.constant 0 : index
    %45 = vector.load %arg7[%c0_29, %c0_30] : memref<4x1xf32, #tpu.memory_space<vmem>>, vector<4x1xf32>
    %46 = vector.broadcast %45 : vector<4x1xf32> to vector<4x1088xf32>
    %47 = arith.addf %44, %46 : vector<4x1088xf32>
    %cst_31 = arith.constant 0.000000e+00 : f32
    %48 = vector.broadcast %cst_31 : f32 to vector<4x1088xf32>
    %49 = arith.maximumf %47, %48 : vector<4x1088xf32>
    %c0_32 = arith.constant 0 : index
    %c0_33 = arith.constant 0 : index
    %c0_34 = arith.constant 0 : index
    %50 = vector.load %arg9[%c0_32, %c0_33, %c0_34] : memref<1x4x1088xf32, #tpu.memory_space<vmem>>, vector<1x4x1088xf32>
    %51 = vector.shape_cast %50 : vector<1x4x1088xf32> to vector<4x1088xf32>
    %52 = vector.shape_cast %49 : vector<4x1088xf32> to vector<1x4x1088xf32>
    tpu.vector_store %arg9[%c0_32, %c0_33, %c0_34], %52 {strides = array<i32>} : memref<1x4x1088xf32, #tpu.memory_space<vmem>>, vector<1x4x1088xf32>,
    return
  }
  func.func @transform_0(%arg0: i32) -> (i32, i32) {
    %c0_i32 = arith.constant 0 : i32
    %c0_i32_0 = arith.constant 0 : i32
    %c0_i32_1 = arith.constant 0 : i32
    return %c0_i32, %c0_i32_0 : i32, i32
  }
  func.func @transform_1(%arg0: i32) -> (i32, i32, i32) {
    %c0_i32 = arith.constant 0 : i32
    %c0_i32_0 = arith.constant 0 : i32
    %c0_i32_1 = arith.constant 0 : i32
    return %arg0, %c0_i32, %c0_i32_0 : i32, i32, i32
  }
  func.func @transform_2(%arg0: i32) -> (i32, i32, i32) {
    %c0_i32 = arith.constant 0 : i32
    %c0_i32_0 = arith.constant 0 : i32
    %c0_i32_1 = arith.constant 0 : i32
    return %arg0, %c0_i32, %c0_i32_0 : i32, i32, i32
  }
  func.func @transform_3(%arg0: i32) -> (i32, i32) {
    %c0_i32 = arith.constant 0 : i32
    %c0_i32_0 = arith.constant 0 : i32
    %c0_i32_1 = arith.constant 0 : i32
    return %c0_i32, %c0_i32_0 : i32, i32
  }
  func.func @transform_4(%arg0: i32) -> (i32, i32) {
    %c0_i32 = arith.constant 0 : i32
    %c0_i32_0 = arith.constant 0 : i32
    %c0_i32_1 = arith.constant 0 : i32
    return %c0_i32, %c0_i32_0 : i32, i32
  }
  func.func @transform_5(%arg0: i32) -> (i32, i32) {
    %c0_i32 = arith.constant 0 : i32
    %c0_i32_0 = arith.constant 0 : i32
    %c0_i32_1 = arith.constant 0 : i32
    return %c0_i32, %c0_i32_0 : i32, i32
  }
  func.func @transform_6(%arg0: i32) -> (i32, i32) {
    %c0_i32 = arith.constant 0 : i32
    %c0_i32_0 = arith.constant 0 : i32
    %c0_i32_1 = arith.constant 0 : i32
    return %c0_i32, %c0_i32_0 : i32, i32
  }
  func.func @transform_7(%arg0: i32) -> (i32, i32) {
    %c0_i32 = arith.constant 0 : i32
    %c0_i32_0 = arith.constant 0 : i32
    %c0_i32_1 = arith.constant 0 : i32
    return %c0_i32, %c0_i32_0 : i32, i32
  }
  func.func @transform_8(%arg0: i32) -> (i32, i32, i32) {
    %c0_i32 = arith.constant 0 : i32
    %c0_i32_0 = arith.constant 0 : i32
    %c0_i32_1 = arith.constant 0 : i32
    return %arg0, %c0_i32, %c0_i32_0 : i32, i32, i32
  }
}

</mosaic_0001>

<llo_original>
// kernel: unet_up_forward.1
$region0: #{unet_up_forward.1}
  #allocation0 [shape = 'u32[]', space=smem, size = 0x4, offset = 0x4, fixed_abs, tag = 'smem constant byte address 0x4 - core index']
  #allocation1 [shape = 'u32[144,128]{1,0:T(1,128)}', space=vmem, size = 0x12000, scoped, tag = 'internal scratch']
  #allocation2 [shape = 'f32[8,1280]{1,0:T(8,128)}', space=vmem, size = 0xa000, scoped, tag = 'scratch operand']
  #allocation3 [shape = 'f32[4,1280]{1,0:T(4,128)}', space=vmem, size = 0x5000, scoped, tag = 'scratch operand']
  %s0 = inlined_call_operand.hbm [shape: f32[256,1280], index: 0, kind: input, shape index: {}]
  %s1 = inlined_call_operand.vmem [shape: f32[2,4,256], index: 1, kind: input, shape index: {}]
  %s2 = inlined_call_operand.vmem [shape: f32[2,4,1280], index: 2, kind: input, shape index: {}]
  %s3 = inlined_call_operand.vmem [shape: f32[4,72], index: 3, kind: input, shape index: {}]
  %s4 = inlined_call_operand.vmem [shape: f32[4,1], index: 4, kind: input, shape index: {}]
  %s5 = inlined_call_operand.vmem [shape: f32[4,36], index: 5, kind: input, shape index: {}]
  %s6 = inlined_call_operand.vmem [shape: f32[4,1], index: 6, kind: input, shape index: {}]
  %s7 = inlined_call_operand.hbm [shape: f32[1,1088], index: 7, kind: input, shape index: {}]
  %s8 = inlined_call_operand.vmem [shape: f32[2,4,1088], index: 8, kind: output, shape index: {}]
  %s9 = sld [smem:[#allocation0]]
  $region73: #{unet_up_forward.1} parent=0
    _
  %s11 = ssub.s32 1, %s9
  %s12 = scalar_select 0, %s11, %s9
  $region1: #{unet_up_forward.1} parent=0
    #allocation4 [shape = 'u8[1310720]{0}', space=vmem, size = 0x140000, scoped, tag = 'input window, operand 0, single buffered']
    #allocation5 [shape = 's32[2]{0}', space=sflag, size = 0x8, scoped, tag = 'scoped memory for unet_up_forward.1']
    #allocation6 [shape = 'u8[4608]{0}', space=vmem, size = 0x1400, scoped, tag = 'input window, operand 7, single buffered']
    #allocation7 [shape = 's32[1]{0}', space=sflag, size = 0x4, scoped, tag = 'scoped memory for unet_up_forward.1']
    %13 = vsyncpa [#allocation5], 0
    %14 = vsyncpa [#allocation7], 0
    loop: start=0, step=1, limit=4
    $region2: #{unet_up_forward.1} parent=1 // loop_pre_header
      _
    $region3: #{unet_up_forward.1} parent=1 // loop_header
      %s16 = sphi 0, %s20
      %p17 = scmp.ge.s32.totalorder %s16, 4
      %s24 = sphi 0, %s24
      %s26 = sphi 0, %s24
      %s27 = sphi 0, %s26
      %s41 = sphi 0, %s27
      %s47 = sphi 0, %s49
      %s50 = sphi 0, %s47
      %s51 = sphi 0, %s50
      %s67 = sphi 0, %s51
      %s73 = sphi 0, %s75
      %s76 = sphi 0, %s73
      %s77 = sphi 0, %s76
      %s93 = sphi 0, %s77
      %s97 = sphi 0, %s97
      %s99 = sphi 0, %s97
      %s100 = sphi 0, %s99
      %s114 = sphi 0, %s100
      %s118 = sphi 0, %s118
      %s120 = sphi 0, %s118
      %s121 = sphi 0, %s120
      %s135 = sphi 0, %s121
      %s139 = sphi 0, %s139
      %s141 = sphi 0, %s139
      %s142 = sphi 0, %s141
      %s156 = sphi 0, %s142
      %s160 = sphi 0, %s160
      %s162 = sphi 0, %s160
      %s163 = sphi 0, %s162
      %s177 = sphi 0, %s163
      %s181 = sphi 0, %s181
      %s183 = sphi 0, %s181
      %s184 = sphi 0, %s183
      %s198 = sphi 0, %s184
      %s204 = sphi 0, %s206
      %s207 = sphi 0, %s204
      %s208 = sphi 0, %s207
      %s224 = sphi 0, %s208
    $region4: #{unet_up_forward.1} parent=1 // loop_header_branch
      %19 = sbr.rel (%p17) target = $region8
    $region5: #{unet_up_forward.1} parent=1 // loop_body
      %s21 = ssub.s32 %s16, 1
      %s22 = ssub.s32 %s16, 2
      %s23 = sadd.s32 %s16, 1
      %s25 = sadd.s32 %s24, 1
      %p28 = scmp.eq.s32.totalorder %s16, 1
      %p29 = scmp.ne.s32.totalorder %s24, %s26
      %p30 = scmp.eq.s32.totalorder %s16, 0
      %p31 = por %p29, %p30
      %p32 = scmp.ne.s32.totalorder %s24, %s26
      %p33 = scmp.eq.s32.totalorder %s21, 1
      %p34 = por %p32, %p33
      %p35 = scmp.ne.s32.totalorder %s26, %s27
      %p36 = scmp.eq.s32.totalorder %s21, 0
      %p37 = por %p35, %p36
      %p38 = scmp.ne.s32.totalorder %s26, %s27
      %p39 = scmp.eq.s32.totalorder %s22, 1
      %p40 = por %p38, %p39
      %p42 = scmp.ne.s32.totalorder %s27, %s41
      %p43 = scmp.eq.s32.totalorder %s22, 0
      %p44 = por %p42, %p43
      %s45 = ssub.s32 %s16, %s23
      %p46 = scmp.eq.s32.totalorder %s45, 0
      %s48 = sadd.s32 %s47, 1
      %s49 = scalar_select %p46, %s47, %s48
      %p52 = pneg %p46
      %p53 = scmp.eq.s32.totalorder %s16, 1
      %p54 = por %p52, %p53
      %p55 = scmp.ne.s32.totalorder %s47, %s50
      %p56 = scmp.eq.s32.totalorder %s16, 0
      %p57 = por %p55, %p56
      %p58 = scmp.ne.s32.totalorder %s47, %s50
      %p59 = scmp.eq.s32.totalorder %s21, 1
      %p60 = por %p58, %p59
      %p61 = scmp.ne.s32.totalorder %s50, %s51
      %p62 = scmp.eq.s32.totalorder %s21, 0
      %p63 = por %p61, %p62
      %p64 = scmp.ne.s32.totalorder %s50, %s51
      %p65 = scmp.eq.s32.totalorder %s22, 1
      %p66 = por %p64, %p65
      %p68 = scmp.ne.s32.totalorder %s51, %s67
      %p69 = scmp.eq.s32.totalorder %s22, 0
      %p70 = por %p68, %p69
      %s71 = ssub.s32 %s16, %s23
      %p72 = scmp.eq.s32.totalorder %s71, 0
      %s74 = sadd.s32 %s73, 1
      %s75 = scalar_select %p72, %s73, %s74
      %p78 = pneg %p72
      %p79 = scmp.eq.s32.totalorder %s16, 1
      %p80 = por %p78, %p79
      %p81 = scmp.ne.s32.totalorder %s73, %s76
      %p82 = scmp.eq.s32.totalorder %s16, 0
      %p83 = por %p81, %p82
      %p84 = scmp.ne.s32.totalorder %s73, %s76
      %p85 = scmp.eq.s32.totalorder %s21, 1
      %p86 = por %p84, %p85
      %p87 = scmp.ne.s32.totalorder %s76, %s77
      %p88 = scmp.eq.s32.totalorder %s21, 0
      %p89 = por %p87, %p88
      %p90 = scmp.ne.s32.totalorder %s76, %s77
      %p91 = scmp.eq.s32.totalorder %s22, 1
      %p92 = por %p90, %p91
      %p94 = scmp.ne.s32.totalorder %s77, %s93
      %p95 = scmp.eq.s32.totalorder %s22, 0
      %p96 = por %p94, %p95
      %s98 = sadd.s32 %s97, 1
      %p101 = scmp.eq.s32.totalorder %s16, 1
      %p102 = scmp.ne.s32.totalorder %s97, %s99
      %p103 = scmp.eq.s32.totalorder %s16, 0
      %p104 = por %p102, %p103
      %p105 = scmp.ne.s32.totalorder %s97, %s99
      %p106 = scmp.eq.s32.totalorder %s21, 1
      %p107 = por %p105, %p106
      %p108 = scmp.ne.s32.totalorder %s99, %s100
      %p109 = scmp.eq.s32.totalorder %s21, 0
      %p110 = por %p108, %p109
      %p111 = scmp.ne.s32.totalorder %s99, %s100
      %p112 = scmp.eq.s32.totalorder %s22, 1
      %p113 = por %p111, %p112
      %p115 = scmp.ne.s32.totalorder %s100, %s114
      %p116 = scmp.eq.s32.totalorder %s22, 0
      %p117 = por %p115, %p116
      %s119 = sadd.s32 %s118, 1
      %p122 = scmp.eq.s32.totalorder %s16, 1
      %p123 = scmp.ne.s32.totalorder %s118, %s120
      %p124 = scmp.eq.s32.totalorder %s16, 0
      %p125 = por %p123, %p124
      %p126 = scmp.ne.s32.totalorder %s118, %s120
      %p127 = scmp.eq.s32.totalorder %s21, 1
      %p128 = por %p126, %p127
      %p129 = scmp.ne.s32.totalorder %s120, %s121
      %p130 = scmp.eq.s32.totalorder %s21, 0
      %p131 = por %p129, %p130
      %p132 = scmp.ne.s32.totalorder %s120, %s121
      %p133 = scmp.eq.s32.totalorder %s22, 1
      %p134 = por %p132, %p133
      %p136 = scmp.ne.s32.totalorder %s121, %s135
      %p137 = scmp.eq.s32.totalorder %s22, 0
      %p138 = por %p136, %p137
      %s140 = sadd.s32 %s139, 1
      %p143 = scmp.eq.s32.totalorder %s16, 1
      %p144 = scmp.ne.s32.totalorder %s139, %s141
      %p145 = scmp.eq.s32.totalorder %s16, 0
      %p146 = por %p144, %p145
      %p147 = scmp.ne.s32.totalorder %s139, %s141
      %p148 = scmp.eq.s32.totalorder %s21, 1
      %p149 = por %p147, %p148
      %p150 = scmp.ne.s32.totalorder %s141, %s142
      %p151 = scmp.eq.s32.totalorder %s21, 0
      %p152 = por %p150, %p151
      %p153 = scmp.ne.s32.totalorder %s141, %s142
      %p154 = scmp.eq.s32.totalorder %s22, 1
      %p155 = por %p153, %p154
      %p157 = scmp.ne.s32.totalorder %s142, %s156
      %p158 = scmp.eq.s32.totalorder %s22, 0
      %p159 = por %p157, %p158
      %s161 = sadd.s32 %s160, 1
      %p164 = scmp.eq.s32.totalorder %s16, 1
      %p165 = scmp.ne.s32.totalorder %s160, %s162
      %p166 = scmp.eq.s32.totalorder %s16, 0
      %p167 = por %p165, %p166
      %p168 = scmp.ne.s32.totalorder %s160, %s162
      %p169 = scmp.eq.s32.totalorder %s21, 1
      %p170 = por %p168, %p169
      %p171 = scmp.ne.s32.totalorder %s162, %s163
      %p172 = scmp.eq.s32.totalorder %s21, 0
      %p173 = por %p171, %p172
      %p174 = scmp.ne.s32.totalorder %s162, %s163
      %p175 = scmp.eq.s32.totalorder %s22, 1
      %p176 = por %p174, %p175
      %p178 = scmp.ne.s32.totalorder %s163, %s177
      %p179 = scmp.eq.s32.totalorder %s22, 0
      %p180 = por %p178, %p179
      %s182 = sadd.s32 %s181, 1
      %p185 = scmp.eq.s32.totalorder %s16, 1
      %p186 = scmp.ne.s32.totalorder %s181, %s183
      %p187 = scmp.eq.s32.totalorder %s16, 0
      %p188 = por %p186, %p187
      %p189 = scmp.ne.s32.totalorder %s181, %s183
      %p190 = scmp.eq.s32.totalorder %s21, 1
      %p191 = por %p189, %p190
      %p192 = scmp.ne.s32.totalorder %s183, %s184
      %p193 = scmp.eq.s32.totalorder %s21, 0
      %p194 = por %p192, %p193
      %p195 = scmp.ne.s32.totalorder %s183, %s184
      %p196 = scmp.eq.s32.totalorder %s22, 1
      %p197 = por %p195, %p196
      %p199 = scmp.ne.s32.totalorder %s184, %s198
      %p200 = scmp.eq.s32.totalorder %s22, 0
      %p201 = por %p199, %p200
      %s202 = ssub.s32 %s16, %s23
      %p203 = scmp.eq.s32.totalorder %s202, 0
      %s205 = sadd.s32 %s204, 1
      %s206 = scalar_select %p203, %s204, %s205
      %p209 = pneg %p203
      %p210 = scmp.eq.s32.totalorder %s16, 1
      %p211 = por %p209, %p210
      %p212 = scmp.ne.s32.totalorder %s204, %s207
      %p213 = scmp.eq.s32.totalorder %s16, 0
      %p214 = por %p212, %p213
      %p215 = scmp.ne.s32.totalorder %s204, %s207
      %p216 = scmp.eq.s32.totalorder %s21, 1
      %p217 = por %p215, %p216
      %p218 = scmp.ne.s32.totalorder %s207, %s208
      %p219 = scmp.eq.s32.totalorder %s21, 0
      %p220 = por %p218, %p219
      %p221 = scmp.ne.s32.totalorder %s207, %s208
      %p222 = scmp.eq.s32.totalorder %s22, 1
      %p223 = por %p221, %p222
      %p225 = scmp.ne.s32.totalorder %s208, %s224
      %p226 = scmp.eq.s32.totalorder %s22, 0
      %p227 = por %p225, %p226
      %p228 = scmp.le.s32.totalorder 1, %s16
      %p229 = scmp.lt.s32.totalorder %s16, 3
      %p230 = pnand %p228, %p229
      %p231 = pneg %p230
      // Predicated region
      $region9: #{unet_up_forward.1} parent=5 // pred_check
        _
      $region10: #{unet_up_forward.1} parent=5 // pred_check_branch
        %233 = sbr.rel (%p230) target = $region12
      $region11: #{unet_up_forward.1} parent=5 // pred_region
        %s234 = ssub.s32 %s16, 1
        // Predicated region
        $region13: #{unet_up_forward.1} parent=11 // pred_check
          %p235 = pneg %p37
        $region14: #{unet_up_forward.1} parent=11 // pred_check_branch
          %237 = sbr.rel (%p235) target = $region16
        $region15: #{unet_up_forward.1} parent=11 // pred_region
          %s239 = ssub.s32 40960, 40960
          %240 = vsyncadd [#allocation5], %s239
          %s241 = sshll.u32 [#allocation4], 4
          %s242 = int_to_ptr.vmem [resolvable:$true] %s241
          %247 = dma.hbm_to_vmem [thread:$0]  %s0, 40960, %s242, [#allocation5], 1280, 1280, 80
        $region16: #{unet_up_forward.1} parent=11 // pred_fallthru
          _
        // Predicated region
        $region17: #{unet_up_forward.1} parent=11 // pred_check
          %p248 = pneg %p110
        $region18: #{unet_up_forward.1} parent=11 // pred_check_branch
          %250 = sbr.rel (%p248) target = $region20
        $region19: #{unet_up_forward.1} parent=11 // pred_region
          _
        $region20: #{unet_up_forward.1} parent=11 // pred_fallthru
          _
        // Predicated region
        $region21: #{unet_up_forward.1} parent=11 // pred_check
          %p251 = pneg %p131
        $region22: #{unet_up_forward.1} parent=11 // pred_check_branch
          %253 = sbr.rel (%p251) target = $region24
        $region23: #{unet_up_forward.1} parent=11 // pred_region
          _
        $region24: #{unet_up_forward.1} parent=11 // pred_fallthru
          _
        // Predicated region
        $region25: #{unet_up_forward.1} parent=11 // pred_check
          %p254 = pneg %p152
        $region26: #{unet_up_forward.1} parent=11 // pred_check_branch
          %256 = sbr.rel (%p254) target = $region28
        $region27: #{unet_up_forward.1} parent=11 // pred_region
          _
        $region28: #{unet_up_forward.1} parent=11 // pred_fallthru
          _
        // Predicated region
        $region29: #{unet_up_forward.1} parent=11 // pred_check
          %p257 = pneg %p173
        $region30: #{unet_up_forward.1} parent=11 // pred_check_branch
          %259 = sbr.rel (%p257) target = $region32
        $region31: #{unet_up_forward.1} parent=11 // pred_region
          _
        $region32: #{unet_up_forward.1} parent=11 // pred_fallthru
          _
        // Predicated region
        $region33: #{unet_up_forward.1} parent=11 // pred_check
          %p260 = pneg %p194
        $region34: #{unet_up_forward.1} parent=11 // pred_check_branch
          %262 = sbr.rel (%p260) target = $region36
        $region35: #{unet_up_forward.1} parent=11 // pred_region
          %s264 = ssub.s32 144, 144
          %265 = vsyncadd [#allocation7], %s264
          %s267 = sshll.u32 [#allocation6], 4
          %s268 = int_to_ptr.vmem [resolvable:$true] %s267
          %270 = dma.hbm_to_vmem [thread:$0]  %s7, 144, %s268, [#allocation7]
        $region36: #{unet_up_forward.1} parent=11 // pred_fallthru
          _
      $region12: #{unet_up_forward.1} parent=5 // pred_fallthru
        _
      %p271 = scmp.lt.s32.totalorder %s16, 2
      // Predicated region
      $region37: #{unet_up_forward.1} parent=5 // pred_check
        %p272 = pneg %p271
      $region38: #{unet_up_forward.1} parent=5 // pred_check_branch
        %274 = sbr.rel (%p272) target = $region40
      $region39: #{unet_up_forward.1} parent=5 // pred_region
        // Predicated region
        $region41: #{unet_up_forward.1} parent=39 // pred_check
          %p275 = pneg %p57
        $region42: #{unet_up_forward.1} parent=39 // pred_check_branch
          %277 = sbr.rel (%p275) target = $region44
        $region43: #{unet_up_forward.1} parent=39 // pred_region
          %p278 = scmp.lt.s32.totalorder %s16, 1
          %s279 = scalar_select %p278, %s16, 1
          %s280 = smul.addr %s279, 2
          %s281 = smul.addr %s280, 4
          %s282 = scalar_lea.vmem %s1, %s281
        $region44: #{unet_up_forward.1} parent=39 // pred_fallthru
          _
        // Predicated region
        $region45: #{unet_up_forward.1} parent=39 // pred_check
          %p283 = pneg %p83
        $region46: #{unet_up_forward.1} parent=39 // pred_check_branch
          %285 = sbr.rel (%p283) target = $region48
        $region47: #{unet_up_forward.1} parent=39 // pred_region
          %p286 = scmp.lt.s32.totalorder %s16, 1
          %s287 = scalar_select %p286, %s16, 1
          %s288 = smul.addr %s287, 10
          %s289 = smul.addr %s288, 4
          %s290 = scalar_lea.vmem %s2, %s289
        $region48: #{unet_up_forward.1} parent=39 // pred_fallthru
          _
      $region40: #{unet_up_forward.1} parent=5 // pred_fallthru
        _
      %p291 = scmp.le.s32.totalorder 1, %s16
      %p292 = scmp.lt.s32.totalorder %s16, 3
      %p293 = pnand %p291, %p292
      %p294 = pneg %p293
      // Predicated region
      $region49: #{unet_up_forward.1} parent=5 // pred_check
        _
      $region50: #{unet_up_forward.1} parent=5 // pred_check_branch
        %296 = sbr.rel (%p293) target = $region52
      $region51: #{unet_up_forward.1} parent=5 // pred_region
        %s297 = ssub.s32 %s16, 1
        // Predicated region
        $region53: #{unet_up_forward.1} parent=51 // pred_check
          %p298 = pneg %p37
        $region54: #{unet_up_forward.1} parent=51 // pred_check_branch
          %300 = sbr.rel (%p298) target = $region56
        $region55: #{unet_up_forward.1} parent=51 // pred_region
          %301 = dma.done [#allocation5], 40960
        $region56: #{unet_up_forward.1} parent=51 // pred_fallthru
          _
        // Predicated region
        $region57: #{unet_up_forward.1} parent=51 // pred_check
          %p302 = pneg %p194
        $region58: #{unet_up_forward.1} parent=51 // pred_check_branch
          %304 = sbr.rel (%p302) target = $region60
        $region59: #{unet_up_forward.1} parent=51 // pred_region
          %305 = dma.done [#allocation7], 144
        $region60: #{unet_up_forward.1} parent=51 // pred_fallthru
          _
        %p306 = pneg %p37
        %p307 = pneg %p34
        %p308 = scmp.lt.s32.totalorder %s21, 1
        %s309 = scalar_select %p308, %s21, 1
        %s310 = smul.addr %s309, 2
        %s311 = smul.addr %s310, 4
        %s312 = scalar_lea.vmem %s1, %s311
        %p313 = pneg %p63
        %p314 = pneg %p60
        %p315 = scmp.lt.s32.totalorder %s21, 1
        %s316 = scalar_select %p315, %s21, 1
        %s317 = smul.addr %s316, 10
        %s318 = smul.addr %s317, 4
        %s319 = scalar_lea.vmem %s2, %s318
        %p320 = pneg %p89
        %p321 = pneg %p86
        %p322 = pneg %p110
        %p323 = pneg %p107
        %p324 = pneg %p131
        %p325 = pneg %p128
        %p326 = pneg %p152
        %p327 = pneg %p149
        %p328 = pneg %p173
        %p329 = pneg %p170
        %p330 = pneg %p194
        %p331 = pneg %p191
        %p332 = pneg %p220
        %p333 = pneg %p217
        %p334 = scmp.lt.s32.totalorder %s21, 1
        %s335 = scalar_select %p334, %s21, 1
        %s336 = smul.addr %s335, 9
        %s337 = smul.addr %s336, 4
        %s338 = scalar_lea.vmem %s8, %s337
        %p339 = scmp.lt.s32.totalorder %s21, 1
        %s340 = scalar_select %p339, %s21, 1
        %s341 = smul.addr %s340, 2
        %s342 = smul.addr %s341, 4
        %s343 = scalar_lea.vmem %s1, %s342
        %p344 = scmp.lt.s32.totalorder %s21, 1
        %s345 = scalar_select %p344, %s21, 1
        %s346 = smul.addr %s345, 10
        %s347 = smul.addr %s346, 4
        %s348 = scalar_lea.vmem %s2, %s347
        %p349 = scmp.lt.s32.totalorder %s21, 1
        %s350 = scalar_select %p349, %s21, 1
        %s351 = smul.addr %s350, 9
        %s352 = smul.addr %s351, 4
        %s353 = scalar_lea.vmem %s8, %s352
        %v354 = vld [vmem:[%s343] sm:$0xff]
        %v355 = vld [vmem:[#allocation4] sm:$0xff]
        %v356 = vld [vmem:[#allocation4 + $0x8] sm:$0xff]
        %v357 = vld [vmem:[#allocation4 + $0x10] sm:$0xff]
        %v358 = vld [vmem:[#allocation4 + $0x18] sm:$0xff]
        %v359 = vld [vmem:[#allocation4 + $0x20] sm:$0xff]
        %v360 = vld [vmem:[#allocation4 + $0x28] sm:$0xff]
        %v361 = vld [vmem:[#allocation4 + $0x30] sm:$0xff]
        %v362 = vld [vmem:[#allocation4 + $0x38] sm:$0xff]
        %v363 = vld [vmem:[#allocation4 + $0x40] sm:$0xff]
        %v364 = vld [vmem:[#allocation4 + $0x48] sm:$0xff]
        %v365 = vld [vmem:[#allocation4 + $0x50] sm:$0xff]
        %v366 = vld [vmem:[#allocation4 + $0x58] sm:$0xff]
        %v367 = vld [vmem:[#allocation4 + $0x60] sm:$0xff]
        %v368 = vld [vmem:[#allocation4 + $0x68] sm:$0xff]
        %v369 = vld [vmem:[#allocation4 + $0x70] sm:$0xff]
        %v370 = vld [vmem:[#allocation4 + $0x78] sm:$0xff]
        %v371 = vld [vmem:[#allocation4 + $0x80] sm:$0xff]
        %v372 = vld [vmem:[#allocation4 + $0x88] sm:$0xff]
        %v373 = vld [vmem:[#allocation4 + $0x90] sm:$0xff]
        %v374 = vld [vmem:[#allocation4 + $0x98] sm:$0xff]
        %v375 = vld [vmem:[#allocation4 + $0xa0] sm:$0xff]
        %v376 = vld [vmem:[#allocation4 + $0xa8] sm:$0xff]
        %v377 = vld [vmem:[#allocation4 + $0xb0] sm:$0xff]
        %v378 = vld [vmem:[#allocation4 + $0xb8] sm:$0xff]
        %v379 = vld [vmem:[#allocation4 + $0xc0] sm:$0xff]
        %v380 = vld [vmem:[#allocation4 + $0xc8] sm:$0xff]
        %v381 = vld [vmem:[#allocation4 + $0xd0] sm:$0xff]
        %v382 = vld [vmem:[#allocation4 + $0xd8] sm:$0xff]
        %v383 = vld [vmem:[#allocation4 + $0xe0] sm:$0xff]
        %v384 = vld [vmem:[#allocation4 + $0xe8] sm:$0xff]
        %v385 = vld [vmem:[#allocation4 + $0xf0] sm:$0xff]
        %v386 = vld [vmem:[#allocation4 + $0xf8] sm:$0xff]
        %v387 = vld [vmem:[#allocation4 + $0x100] sm:$0xff]
        %v388 = vld [vmem:[#allocation4 + $0x108] sm:$0xff]
        %v389 = vld [vmem:[#allocation4 + $0x110] sm:$0xff]
        %v390 = vld [vmem:[#allocation4 + $0x118] sm:$0xff]
        %v391 = vld [vmem:[#allocation4 + $0x120] sm:$0xff]
        %v392 = vld [vmem:[#allocation4 + $0x128] sm:$0xff]
        %v393 = vld [vmem:[#allocation4 + $0x130] sm:$0xff]
        %v394 = vld [vmem:[#allocation4 + $0x138] sm:$0xff]
        %v395 = vld [vmem:[#allocation4 + $0x140] sm:$0xff]
        %v396 = vld [vmem:[#allocation4 + $0x148] sm:$0xff]
        %v397 = vld [vmem:[#allocation4 + $0x150] sm:$0xff]
        %v398 = vld [vmem:[#allocation4 + $0x158] sm:$0xff]
        %v399 = vld [vmem:[#allocation4 + $0x160] sm:$0xff]
        %v400 = vld [vmem:[#allocation4 + $0x168] sm:$0xff]
        %v401 = vld [vmem:[#allocation4 + $0x170] sm:$0xff]
        %v402 = vld [vmem:[#allocation4 + $0x178] sm:$0xff]
        %v403 = vld [vmem:[#allocation4 + $0x180] sm:$0xff]
        %v404 = vld [vmem:[#allocation4 + $0x188] sm:$0xff]
        %v405 = vld [vmem:[#allocation4 + $0x190] sm:$0xff]
        %v406 = vld [vmem:[#allocation4 + $0x198] sm:$0xff]
        %v407 = vld [vmem:[#allocation4 + $0x1a0] sm:$0xff]
        %v408 = vld [vmem:[#allocation4 + $0x1a8] sm:$0xff]
        %v409 = vld [vmem:[#allocation4 + $0x1b0] sm:$0xff]
        %v410 = vld [vmem:[#allocation4 + $0x1b8] sm:$0xff]
        %v411 = vld [vmem:[#allocation4 + $0x1c0] sm:$0xff]
        %v412 = vld [vmem:[#allocation4 + $0x1c8] sm:$0xff]
        %v413 = vld [vmem:[#allocation4 + $0x1d0] sm:$0xff]
        %v414 = vld [vmem:[#allocation4 + $0x1d8] sm:$0xff]
        %v415 = vld [vmem:[#allocation4 + $0x1e0] sm:$0xff]
        %v416 = vld [vmem:[#allocation4 + $0x1e8] sm:$0xff]
        %v417 = vld [vmem:[#allocation4 + $0x1f0] sm:$0xff]
        %v418 = vld [vmem:[#allocation4 + $0x1f8] sm:$0xff]
        %v419 = vld [vmem:[#allocation4 + $0x200] sm:$0xff]
        %v420 = vld [vmem:[#allocation4 + $0x208] sm:$0xff]
        %v421 = vld [vmem:[#allocation4 + $0x210] sm:$0xff]
        %v422 = vld [vmem:[#allocation4 + $0x218] sm:$0xff]
        %v423 = vld [vmem:[#allocation4 + $0x220] sm:$0xff]
        %v424 = vld [vmem:[#allocation4 + $0x228] sm:$0xff]
        %v425 = vld [vmem:[#allocation4 + $0x230] sm:$0xff]
        %v426 = vld [vmem:[#allocation4 + $0x238] sm:$0xff]
        %v427 = vld [vmem:[#allocation4 + $0x240] sm:$0xff]
        %v428 = vld [vmem:[#allocation4 + $0x248] sm:$0xff]
        %v429 = vld [vmem:[#allocation4 + $0x250] sm:$0xff]
        %v430 = vld [vmem:[#allocation4 + $0x258] sm:$0xff]
        %v431 = vld [vmem:[#allocation4 + $0x260] sm:$0xff]
        %v432 = vld [vmem:[#allocation4 + $0x268] sm:$0xff]
        %v433 = vld [vmem:[#allocation4 + $0x270] sm:$0xff]
        %v434 = vld [vmem:[#allocation4 + $0x278] sm:$0xff]
        %v435 = vld [vmem:[#allocation4 + $0x280] sm:$0xff]
        %v436 = vld [vmem:[#allocation4 + $0x288] sm:$0xff]
        %v437 = vld [vmem:[#allocation4 + $0x290] sm:$0xff]
        %v438 = vld [vmem:[#allocation4 + $0x298] sm:$0xff]
        %v439 = vld [vmem:[#allocation4 + $0x2a0] sm:$0xff]
        %v440 = vld [vmem:[#allocation4 + $0x2a8] sm:$0xff]
        %v441 = vld [vmem:[#allocation4 + $0x2b0] sm:$0xff]
        %v442 = vld [vmem:[#allocation4 + $0x2b8] sm:$0xff]
        %v443 = vld [vmem:[#allocation4 + $0x2c0] sm:$0xff]
        %v444 = vld [vmem:[#allocation4 + $0x2c8] sm:$0xff]
        %v445 = vld [vmem:[#allocation4 + $0x2d0] sm:$0xff]
        %v446 = vld [vmem:[#allocation4 + $0x2d8] sm:$0xff]
        %v447 = vld [vmem:[#allocation4 + $0x2e0] sm:$0xff]
        %v448 = vld [vmem:[#allocation4 + $0x2e8] sm:$0xff]
        %v449 = vld [vmem:[#allocation4 + $0x2f0] sm:$0xff]
        %v450 = vld [vmem:[#allocation4 + $0x2f8] sm:$0xff]
        %v451 = vld [vmem:[#allocation4 + $0x300] sm:$0xff]
        %v452 = vld [vmem:[#allocation4 + $0x308] sm:$0xff]
        %v453 = vld [vmem:[#allocation4 + $0x310] sm:$0xff]
        %v454 = vld [vmem:[#allocation4 + $0x318] sm:$0xff]
        %v455 = vld [vmem:[#allocation4 + $0x320] sm:$0xff]
        %v456 = vld [vmem:[#allocation4 + $0x328] sm:$0xff]
        %v457 = vld [vmem:[#allocation4 + $0x330] sm:$0xff]
        %v458 = vld [vmem:[#allocation4 + $0x338] sm:$0xff]
        %v459 = vld [vmem:[#allocation4 + $0x340] sm:$0xff]
        %v460 = vld [vmem:[#allocation4 + $0x348] sm:$0xff]
        %v461 = vld [vmem:[#allocation4 + $0x350] sm:$0xff]
        %v462 = vld [vmem:[#allocation4 + $0x358] sm:$0xff]
        %v463 = vld [vmem:[#allocation4 + $0x360] sm:$0xff]
        %v464 = vld [vmem:[#allocation4 + $0x368] sm:$0xff]
        %v465 = vld [vmem:[#allocation4 + $0x370] sm:$0xff]
        %v466 = vld [vmem:[#allocation4 + $0x378] sm:$0xff]
        %v467 = vld [vmem:[#allocation4 + $0x380] sm:$0xff]
        %v468 = vld [vmem:[#allocation4 + $0x388] sm:$0xff]
        %v469 = vld [vmem:[#allocation4 + $0x390] sm:$0xff]
        %v470 = vld [vmem:[#allocation4 + $0x398] sm:$0xff]
        %v471 = vld [vmem:[#allocation4 + $0x3a0] sm:$0xff]
        %v472 = vld [vmem:[#allocation4 + $0x3a8] sm:$0xff]
        %v473 = vld [vmem:[#allocation4 + $0x3b0] sm:$0xff]
        %v474 = vld [vmem:[#allocation4 + $0x3b8] sm:$0xff]
        %v475 = vld [vmem:[#allocation4 + $0x3c0] sm:$0xff]
        %v476 = vld [vmem:[#allocation4 + $0x3c8] sm:$0xff]
        %v477 = vld [vmem:[#allocation4 + $0x3d0] sm:$0xff]
        %v478 = vld [vmem:[#allocation4 + $0x3d8] sm:$0xff]
        %v479 = vld [vmem:[#allocation4 + $0x3e0] sm:$0xff]
        %v480 = vld [vmem:[#allocation4 + $0x3e8] sm:$0xff]
        %v481 = vld [vmem:[#allocation4 + $0x3f0] sm:$0xff]
        %v482 = vld [vmem:[#allocation4 + $0x3f8] sm:$0xff]
        %v483 = vld [vmem:[#allocation4 + $0x400] sm:$0xff]
        %v484 = vld [vmem:[#allocation4 + $0x408] sm:$0xff]
        %v485 = vld [vmem:[#allocation4 + $0x410] sm:$0xff]
        %v486 = vld [vmem:[#allocation4 + $0x418] sm:$0xff]
        %v487 = vld [vmem:[#allocation4 + $0x420] sm:$0xff]
        %v488 = vld [vmem:[#allocation4 + $0x428] sm:$0xff]
        %v489 = vld [vmem:[#allocation4 + $0x430] sm:$0xff]
        %v490 = vld [vmem:[#allocation4 + $0x438] sm:$0xff]
        %v491 = vld [vmem:[#allocation4 + $0x440] sm:$0xff]
        %v492 = vld [vmem:[#allocation4 + $0x448] sm:$0xff]
        %v493 = vld [vmem:[#allocation4 + $0x450] sm:$0xff]
        %v494 = vld [vmem:[#allocation4 + $0x458] sm:$0xff]
        %v495 = vld [vmem:[#allocation4 + $0x460] sm:$0xff]
        %v496 = vld [vmem:[#allocation4 + $0x468] sm:$0xff]
        %v497 = vld [vmem:[#allocation4 + $0x470] sm:$0xff]
        %v498 = vld [vmem:[#allocation4 + $0x478] sm:$0xff]
        %v499 = vld [vmem:[#allocation4 + $0x480] sm:$0xff]
        %v500 = vld [vmem:[#allocation4 + $0x488] sm:$0xff]
        %v501 = vld [vmem:[#allocation4 + $0x490] sm:$0xff]
        %v502 = vld [vmem:[#allocation4 + $0x498] sm:$0xff]
        %v503 = vld [vmem:[#allocation4 + $0x4a0] sm:$0xff]
        %v504 = vld [vmem:[#allocation4 + $0x4a8] sm:$0xff]
        %v505 = vld [vmem:[#allocation4 + $0x4b0] sm:$0xff]
        %v506 = vld [vmem:[#allocation4 + $0x4b8] sm:$0xff]
        %v507 = vld [vmem:[#allocation4 + $0x4c0] sm:$0xff]
        %v508 = vld [vmem:[#allocation4 + $0x4c8] sm:$0xff]
        %v509 = vld [vmem:[#allocation4 + $0x4d0] sm:$0xff]
        %v510 = vld [vmem:[#allocation4 + $0x4d8] sm:$0xff]
        %v511 = vld [vmem:[#allocation4 + $0x4e0] sm:$0xff]
        %v512 = vld [vmem:[#allocation4 + $0x4e8] sm:$0xff]
        %v513 = vld [vmem:[#allocation4 + $0x4f0] sm:$0xff]
        %v514 = vld [vmem:[#allocation4 + $0x4f8] sm:$0xff]
        %v515 = vld [vmem:[#allocation4 + $0x500] sm:$0xff]
        %v516 = vld [vmem:[#allocation4 + $0x508] sm:$0xff]
        %v517 = vld [vmem:[#allocation4 + $0x510] sm:$0xff]
        %v518 = vld [vmem:[#allocation4 + $0x518] sm:$0xff]
        %v519 = vld [vmem:[#allocation4 + $0x520] sm:$0xff]
        %v520 = vld [vmem:[#allocation4 + $0x528] sm:$0xff]
        %v521 = vld [vmem:[#allocation4 + $0x530] sm:$0xff]
        %v522 = vld [vmem:[#allocation4 + $0x538] sm:$0xff]
        %v523 = vld [vmem:[#allocation4 + $0x540] sm:$0xff]
        %v524 = vld [vmem:[#allocation4 + $0x548] sm:$0xff]
        %v525 = vld [vmem:[#allocation4 + $0x550] sm:$0xff]
        %v526 = vld [vmem:[#allocation4 + $0x558] sm:$0xff]
        %v527 = vld [vmem:[#allocation4 + $0x560] sm:$0xff]
        %v528 = vld [vmem:[#allocation4 + $0x568] sm:$0xff]
        %v529 = vld [vmem:[#allocation4 + $0x570] sm:$0xff]
        %v530 = vld [vmem:[#allocation4 + $0x578] sm:$0xff]
        %v531 = vld [vmem:[#allocation4 + $0x580] sm:$0xff]
        %v532 = vld [vmem:[#allocation4 + $0x588] sm:$0xff]
        %v533 = vld [vmem:[#allocation4 + $0x590] sm:$0xff]
        %v534 = vld [vmem:[#allocation4 + $0x598] sm:$0xff]
        %v535 = vld [vmem:[#allocation4 + $0x5a0] sm:$0xff]
        %v536 = vld [vmem:[#allocation4 + $0x5a8] sm:$0xff]
        %v537 = vld [vmem:[#allocation4 + $0x5b0] sm:$0xff]
        %v538 = vld [vmem:[#allocation4 + $0x5b8] sm:$0xff]
        %v539 = vld [vmem:[#allocation4 + $0x5c0] sm:$0xff]
        %v540 = vld [vmem:[#allocation4 + $0x5c8] sm:$0xff]
        %v541 = vld [vmem:[#allocation4 + $0x5d0] sm:$0xff]
        %v542 = vld [vmem:[#allocation4 + $0x5d8] sm:$0xff]
        %v543 = vld [vmem:[#allocation4 + $0x5e0] sm:$0xff]
        %v544 = vld [vmem:[#allocation4 + $0x5e8] sm:$0xff]
        %v545 = vld [vmem:[#allocation4 + $0x5f0] sm:$0xff]
        %v546 = vld [vmem:[#allocation4 + $0x5f8] sm:$0xff]
        %v547 = vld [vmem:[#allocation4 + $0x600] sm:$0xff]
        %v548 = vld [vmem:[#allocation4 + $0x608] sm:$0xff]
        %v549 = vld [vmem:[#allocation4 + $0x610] sm:$0xff]
        %v550 = vld [vmem:[#allocation4 + $0x618] sm:$0xff]
        %v551 = vld [vmem:[#allocation4 + $0x620] sm:$0xff]
        %v552 = vld [vmem:[#allocation4 + $0x628] sm:$0xff]
        %v553 = vld [vmem:[#allocation4 + $0x630] sm:$0xff]
        %v554 = vld [vmem:[#allocation4 + $0x638] sm:$0xff]
        %v555 = vld [vmem:[#allocation4 + $0x640] sm:$0xff]
        %v556 = vld [vmem:[#allocation4 + $0x648] sm:$0xff]
        %v557 = vld [vmem:[#allocation4 + $0x650] sm:$0xff]
        %v558 = vld [vmem:[#allocation4 + $0x658] sm:$0xff]
        %v559 = vld [vmem:[#allocation4 + $0x660] sm:$0xff]
        %v560 = vld [vmem:[#allocation4 + $0x668] sm:$0xff]
        %v561 = vld [vmem:[#allocation4 + $0x670] sm:$0xff]
        %v562 = vld [vmem:[#allocation4 + $0x678] sm:$0xff]
        %v563 = vld [vmem:[#allocation4 + $0x680] sm:$0xff]
        %v564 = vld [vmem:[#allocation4 + $0x688] sm:$0xff]
        %v565 = vld [vmem:[#allocation4 + $0x690] sm:$0xff]
        %v566 = vld [vmem:[#allocation4 + $0x698] sm:$0xff]
        %v567 = vld [vmem:[#allocation4 + $0x6a0] sm:$0xff]
        %v568 = vld [vmem:[#allocation4 + $0x6a8] sm:$0xff]
        %v569 = vld [vmem:[#allocation4 + $0x6b0] sm:$0xff]
        %v570 = vld [vmem:[#allocation4 + $0x6b8] sm:$0xff]
        %v571 = vld [vmem:[#allocation4 + $0x6c0] sm:$0xff]
        %v572 = vld [vmem:[#allocation4 + $0x6c8] sm:$0xff]
        %v573 = vld [vmem:[#allocation4 + $0x6d0] sm:$0xff]
        %v574 = vld [vmem:[#allocation4 + $0x6d8] sm:$0xff]
        %v575 = vld [vmem:[#allocation4 + $0x6e0] sm:$0xff]
        %v576 = vld [vmem:[#allocation4 + $0x6e8] sm:$0xff]
        %v577 = vld [vmem:[#allocation4 + $0x6f0] sm:$0xff]
        %v578 = vld [vmem:[#allocation4 + $0x6f8] sm:$0xff]
        %v579 = vld [vmem:[#allocation4 + $0x700] sm:$0xff]
        %v580 = vld [vmem:[#allocation4 + $0x708] sm:$0xff]
        %v581 = vld [vmem:[#allocation4 + $0x710] sm:$0xff]
        %v582 = vld [vmem:[#allocation4 + $0x718] sm:$0xff]
        %v583 = vld [vmem:[#allocation4 + $0x720] sm:$0xff]
        %v584 = vld [vmem:[#allocation4 + $0x728] sm:$0xff]
        %v585 = vld [vmem:[#allocation4 + $0x730] sm:$0xff]
        %v586 = vld [vmem:[#allocation4 + $0x738] sm:$0xff]
        %v587 = vld [vmem:[#allocation4 + $0x740] sm:$0xff]
        %v588 = vld [vmem:[#allocation4 + $0x748] sm:$0xff]
        %v589 = vld [vmem:[#allocation4 + $0x750] sm:$0xff]
        %v590 = vld [vmem:[#allocation4 + $0x758] sm:$0xff]
        %v591 = vld [vmem:[#allocation4 + $0x760] sm:$0xff]
        %v592 = vld [vmem:[#allocation4 + $0x768] sm:$0xff]
        %v593 = vld [vmem:[#allocation4 + $0x770] sm:$0xff]
        %v594 = vld [vmem:[#allocation4 + $0x778] sm:$0xff]
        %v595 = vld [vmem:[#allocation4 + $0x780] sm:$0xff]
        %v596 = vld [vmem:[#allocation4 + $0x788] sm:$0xff]
        %v597 = vld [vmem:[#allocation4 + $0x790] sm:$0xff]
        %v598 = vld [vmem:[#allocation4 + $0x798] sm:$0xff]
        %v599 = vld [vmem:[#allocation4 + $0x7a0] sm:$0xff]
        %v600 = vld [vmem:[#allocation4 + $0x7a8] sm:$0xff]
        %v601 = vld [vmem:[#allocation4 + $0x7b0] sm:$0xff]
        %v602 = vld [vmem:[#allocation4 + $0x7b8] sm:$0xff]
        %v603 = vld [vmem:[#allocation4 + $0x7c0] sm:$0xff]
        %v604 = vld [vmem:[#allocation4 + $0x7c8] sm:$0xff]
        %v605 = vld [vmem:[#allocation4 + $0x7d0] sm:$0xff]
        %v606 = vld [vmem:[#allocation4 + $0x7d8] sm:$0xff]
        %v607 = vld [vmem:[#allocation4 + $0x7e0] sm:$0xff]
        %v608 = vld [vmem:[#allocation4 + $0x7e8] sm:$0xff]
        %v609 = vld [vmem:[#allocation4 + $0x7f0] sm:$0xff]
        %v610 = vld [vmem:[#allocation4 + $0x7f8] sm:$0xff]
        %v611 = vld [vmem:[#allocation4 + $0x800] sm:$0xff]
        %v612 = vld [vmem:[#allocation4 + $0x808] sm:$0xff]
        %v613 = vld [vmem:[#allocation4 + $0x810] sm:$0xff]
        %v614 = vld [vmem:[#allocation4 + $0x818] sm:$0xff]
        %v615 = vld [vmem:[#allocation4 + $0x820] sm:$0xff]
        %v616 = vld [vmem:[#allocation4 + $0x828] sm:$0xff]
        %v617 = vld [vmem:[#allocation4 + $0x830] sm:$0xff]
        %v618 = vld [vmem:[#allocation4 + $0x838] sm:$0xff]
        %v619 = vld [vmem:[#allocation4 + $0x840] sm:$0xff]
        %v620 = vld [vmem:[#allocation4 + $0x848] sm:$0xff]
        %v621 = vld [vmem:[#allocation4 + $0x850] sm:$0xff]
        %v622 = vld [vmem:[#allocation4 + $0x858] sm:$0xff]
        %v623 = vld [vmem:[#allocation4 + $0x860] sm:$0xff]
        %v624 = vld [vmem:[#allocation4 + $0x868] sm:$0xff]
        %v625 = vld [vmem:[#allocation4 + $0x870] sm:$0xff]
        %v626 = vld [vmem:[#allocation4 + $0x878] sm:$0xff]
        %v627 = vld [vmem:[#allocation4 + $0x880] sm:$0xff]
        %v628 = vld [vmem:[#allocation4 + $0x888] sm:$0xff]
        %v629 = vld [vmem:[#allocation4 + $0x890] sm:$0xff]
        %v630 = vld [vmem:[#allocation4 + $0x898] sm:$0xff]
        %v631 = vld [vmem:[#allocation4 + $0x8a0] sm:$0xff]
        %v632 = vld [vmem:[#allocation4 + $0x8a8] sm:$0xff]
        %v633 = vld [vmem:[#allocation4 + $0x8b0] sm:$0xff]
        %v634 = vld [vmem:[#allocation4 + $0x8b8] sm:$0xff]
        %v635 = vld [vmem:[#allocation4 + $0x8c0] sm:$0xff]
        %v636 = vld [vmem:[#allocation4 + $0x8c8] sm:$0xff]
        %v637 = vld [vmem:[#allocation4 + $0x8d0] sm:$0xff]
        %v638 = vld [vmem:[#allocation4 + $0x8d8] sm:$0xff]
        %v639 = vld [vmem:[#allocation4 + $0x8e0] sm:$0xff]
        %v640 = vld [vmem:[#allocation4 + $0x8e8] sm:$0xff]
        %v641 = vld [vmem:[#allocation4 + $0x8f0] sm:$0xff]
        %v642 = vld [vmem:[#allocation4 + $0x8f8] sm:$0xff]
        %v643 = vld [vmem:[#allocation4 + $0x900] sm:$0xff]
        %v644 = vld [vmem:[#allocation4 + $0x908] sm:$0xff]
        %v645 = vld [vmem:[#allocation4 + $0x910] sm:$0xff]
        %v646 = vld [vmem:[#allocation4 + $0x918] sm:$0xff]
        %v647 = vld [vmem:[#allocation4 + $0x920] sm:$0xff]
        %v648 = vld [vmem:[#allocation4 + $0x928] sm:$0xff]
        %v649 = vld [vmem:[#allocation4 + $0x930] sm:$0xff]
        %v650 = vld [vmem:[#allocation4 + $0x938] sm:$0xff]
        %v651 = vld [vmem:[#allocation4 + $0x940] sm:$0xff]
        %v652 = vld [vmem:[#allocation4 + $0x948] sm:$0xff]
        %v653 = vld [vmem:[#allocation4 + $0x950] sm:$0xff]
        %v654 = vld [vmem:[#allocation4 + $0x958] sm:$0xff]
        %v655 = vld [vmem:[#allocation4 + $0x960] sm:$0xff]
        %v656 = vld [vmem:[#allocation4 + $0x968] sm:$0xff]
        %v657 = vld [vmem:[#allocation4 + $0x970] sm:$0xff]
        %v658 = vld [vmem:[#allocation4 + $0x978] sm:$0xff]
        %v659 = vld [vmem:[#allocation4 + $0x980] sm:$0xff]
        %v660 = vld [vmem:[#allocation4 + $0x988] sm:$0xff]
        %v661 = vld [vmem:[#allocation4 + $0x990] sm:$0xff]
        %v662 = vld [vmem:[#allocation4 + $0x998] sm:$0xff]
        %v663 = vld [vmem:[#allocation4 + $0x9a0] sm:$0xff]
        %v664 = vld [vmem:[#allocation4 + $0x9a8] sm:$0xff]
        %v665 = vld [vmem:[#allocation4 + $0x9b0] sm:$0xff]
        %v666 = vld [vmem:[#allocation4 + $0x9b8] sm:$0xff]
        %v667 = vld [vmem:[#allocation4 + $0x9c0] sm:$0xff]
        %v668 = vld [vmem:[#allocation4 + $0x9c8] sm:$0xff]
        %v669 = vld [vmem:[#allocation4 + $0x9d0] sm:$0xff]
        %v670 = vld [vmem:[#allocation4 + $0x9d8] sm:$0xff]
        %v671 = vld [vmem:[#allocation4 + $0x9e0] sm:$0xff]
        %v672 = vld [vmem:[#allocation4 + $0x9e8] sm:$0xff]
        %v673 = vld [vmem:[#allocation4 + $0x9f0] sm:$0xff]
        %v674 = vld [vmem:[#allocation4 + $0x9f8] sm:$0xff]
        %v676 = vcombine.high %v354, %v354
        %678 = vmatprep.subr.mxu0 %v356
        %679 = vmatpush1.msra.mxu0 %v355
        %680 = vmatprep.subr.mxu0 %v366
        %681 = vmatpush1.msra.mxu0 %v365
        %682 = vmatprep.subr.mxu0 %v376
        %683 = vmatpush1.msra.mxu0 %v375
        %684 = vmatprep.subr.mxu0 %v386
        %685 = vmatpush1.msra.mxu0 %v385
        %686 = vmatprep.subr.mxu0 %v396
        %687 = vmatpush1.msra.mxu0 %v395
        %688 = vmatprep.subr.mxu0 %v406
        %689 = vmatpush1.msra.mxu0 %v405
        %690 = vmatprep.subr.mxu0 %v416
        %691 = vmatpush1.msra.mxu0 %v415
        %692 = vmatprep.subr.mxu0 %v426
        %693 = vmatpush1.msra.mxu0 %v425
        %694 = vmatprep.subr.mxu0 %v436
        %695 = vmatpush1.msra.mxu0 %v435
        %696 = vmatprep.subr.mxu0 %v446
        %697 = vmatpush1.msra.mxu0 %v445
        %698 = vmatprep.subr.mxu0 %v456
        %699 = vmatpush1.msra.mxu0 %v455
        %700 = vmatprep.subr.mxu0 %v466
        %701 = vmatpush1.msra.mxu0 %v465
        %702 = vmatprep.subr.mxu0 %v476
        %703 = vmatpush1.msra.mxu0 %v475
        %704 = vmatprep.subr.mxu0 %v486
        %705 = vmatpush1.msra.mxu0 %v485
        %706 = vmatprep.subr.mxu0 %v496
        %707 = vmatpush1.msra.mxu0 %v495
        %708 = vmatprep.subr.mxu0 %v506
        %709 = vmatpush1.msra.mxu0 %v505
        %710 = vmatprep.subr.mxu0 %v516
        %711 = vmatpush1.msra.mxu0 %v515
        %712 = vmatprep.subr.mxu0 %v526
        %713 = vmatpush1.msra.mxu0 %v525
        %714 = vmatprep.subr.mxu0 %v536
        %715 = vmatpush1.msra.mxu0 %v535
        %716 = vmatprep.subr.mxu0 %v546
        %717 = vmatpush1.msra.mxu0 %v545
        %718 = vmatprep.subr.mxu0 %v556
        %719 = vmatpush1.msra.mxu0 %v555
        %720 = vmatprep.subr.mxu0 %v566
        %721 = vmatpush1.msra.mxu0 %v565
        %722 = vmatprep.subr.mxu0 %v576
        %723 = vmatpush1.msra.mxu0 %v575
        %724 = vmatprep.subr.mxu0 %v586
        %725 = vmatpush1.msra.mxu0 %v585
        %726 = vmatprep.subr.mxu0 %v596
        %727 = vmatpush1.msra.mxu0 %v595
        %728 = vmatprep.subr.mxu0 %v606
        %729 = vmatpush1.msra.mxu0 %v605
        %730 = vmatprep.subr.mxu0 %v616
        %731 = vmatpush1.msra.mxu0 %v615
        %732 = vmatprep.subr.mxu0 %v626
        %733 = vmatpush1.msra.mxu0 %v625
        %734 = vmatprep.subr.mxu0 %v636
        %735 = vmatpush1.msra.mxu0 %v635
        %736 = vmatprep.subr.mxu0 %v646
        %737 = vmatpush1.msra.mxu0 %v645
        %738 = vmatprep.subr.mxu0 %v656
        %739 = vmatpush1.msra.mxu0 %v655
        %740 = vmatprep.subr.mxu0 %v666
        %741 = vmatpush1.msra.mxu0 %v665
        %742 = vmatprep.mubr.f32.mxu0 %v676
        %743 = vmatmul.mubr.f32.gmra.mrb[0].mxu0 %v354
        %v744 = vpop.f32.mrb[0].mxu0
        %v745 = vadd.f32 0.0, %v744
        %v746 = vpop.f32.mrb[0].mxu0
        %v747 = vadd.f32 0.0, %v746
        %748 = vdwg.mxu0
        %749 = vmatprep.subr.mxu0 %v358
        %750 = vmatpush1.msra.mxu0 %v357
        %751 = vmatprep.subr.mxu0 %v368
        %752 = vmatpush1.msra.mxu0 %v367
        %753 = vmatprep.subr.mxu0 %v378
        %754 = vmatpush1.msra.mxu0 %v377
        %755 = vmatprep.subr.mxu0 %v388
        %756 = vmatpush1.msra.mxu0 %v387
        %757 = vmatprep.subr.mxu0 %v398
        %758 = vmatpush1.msra.mxu0 %v397
        %759 = vmatprep.subr.mxu0 %v408
        %760 = vmatpush1.msra.mxu0 %v407
        %761 = vmatprep.subr.mxu0 %v418
        %762 = vmatpush1.msra.mxu0 %v417
        %763 = vmatprep.subr.mxu0 %v428
        %764 = vmatpush1.msra.mxu0 %v427
        %765 = vmatprep.subr.mxu0 %v438
        %766 = vmatpush1.msra.mxu0 %v437
        %767 = vmatprep.subr.mxu0 %v448
        %768 = vmatpush1.msra.mxu0 %v447
        %769 = vmatprep.subr.mxu0 %v458
        %770 = vmatpush1.msra.mxu0 %v457
        %771 = vmatprep.subr.mxu0 %v468
        %772 = vmatpush1.msra.mxu0 %v467
        %773 = vmatprep.subr.mxu0 %v478
        %774 = vmatpush1.msra.mxu0 %v477
        %775 = vmatprep.subr.mxu0 %v488
        %776 = vmatpush1.msra.mxu0 %v487
        %777 = vmatprep.subr.mxu0 %v498
        %778 = vmatpush1.msra.mxu0 %v497
        %779 = vmatprep.subr.mxu0 %v508
        %780 = vmatpush1.msra.mxu0 %v507
        %781 = vmatprep.subr.mxu0 %v518
        %782 = vmatpush1.msra.mxu0 %v517
        %783 = vmatprep.subr.mxu0 %v528
        %784 = vmatpush1.msra.mxu0 %v527
        %785 = vmatprep.subr.mxu0 %v538
        %786 = vmatpush1.msra.mxu0 %v537
        %787 = vmatprep.subr.mxu0 %v548
        %788 = vmatpush1.msra.mxu0 %v547
        %789 = vmatprep.subr.mxu0 %v558
        %790 = vmatpush1.msra.mxu0 %v557
        %791 = vmatprep.subr.mxu0 %v568
        %792 = vmatpush1.msra.mxu0 %v567
        %793 = vmatprep.subr.mxu0 %v578
        %794 = vmatpush1.msra.mxu0 %v577
        %795 = vmatprep.subr.mxu0 %v588
        %796 = vmatpush1.msra.mxu0 %v587
        %797 = vmatprep.subr.mxu0 %v598
        %798 = vmatpush1.msra.mxu0 %v597
        %799 = vmatprep.subr.mxu0 %v608
        %800 = vmatpush1.msra.mxu0 %v607
        %801 = vmatprep.subr.mxu0 %v618
        %802 = vmatpush1.msra.mxu0 %v617
        %803 = vmatprep.subr.mxu0 %v628
        %804 = vmatpush1.msra.mxu0 %v627
        %805 = vmatprep.subr.mxu0 %v638
        %806 = vmatpush1.msra.mxu0 %v637
        %807 = vmatprep.subr.mxu0 %v648
        %808 = vmatpush1.msra.mxu0 %v647
        %809 = vmatprep.subr.mxu0 %v658
        %810 = vmatpush1.msra.mxu0 %v657
        %811 = vmatprep.subr.mxu0 %v668
        %812 = vmatpush1.msra.mxu0 %v667
        %813 = vmatprep.mubr.f32.mxu0 %v676
        %814 = vmatmul.mubr.f32.gmra.mrb[0].mxu0 %v354
        %v815 = vpop.f32.mrb[0].mxu0
        %v816 = vadd.f32 0.0, %v815
        %v817 = vpop.f32.mrb[0].mxu0
        %v818 = vadd.f32 0.0, %v817
        %819 = vdwg.mxu0
        %820 = vmatprep.subr.mxu0 %v360
        %821 = vmatpush1.msra.mxu0 %v359
        %822 = vmatprep.subr.mxu0 %v370
        %823 = vmatpush1.msra.mxu0 %v369
        %824 = vmatprep.subr.mxu0 %v380
        %825 = vmatpush1.msra.mxu0 %v379
        %826 = vmatprep.subr.mxu0 %v390
        %827 = vmatpush1.msra.mxu0 %v389
        %828 = vmatprep.subr.mxu0 %v400
        %829 = vmatpush1.msra.mxu0 %v399
        %830 = vmatprep.subr.mxu0 %v410
        %831 = vmatpush1.msra.mxu0 %v409
        %832 = vmatprep.subr.mxu0 %v420
        %833 = vmatpush1.msra.mxu0 %v419
        %834 = vmatprep.subr.mxu0 %v430
        %835 = vmatpush1.msra.mxu0 %v429
        %836 = vmatprep.subr.mxu0 %v440
        %837 = vmatpush1.msra.mxu0 %v439
        %838 = vmatprep.subr.mxu0 %v450
        %839 = vmatpush1.msra.mxu0 %v449
        %840 = vmatprep.subr.mxu0 %v460
        %841 = vmatpush1.msra.mxu0 %v459
        %842 = vmatprep.subr.mxu0 %v470
        %843 = vmatpush1.msra.mxu0 %v469
        %844 = vmatprep.subr.mxu0 %v480
        %845 = vmatpush1.msra.mxu0 %v479
        %846 = vmatprep.subr.mxu0 %v490
        %847 = vmatpush1.msra.mxu0 %v489
        %848 = vmatprep.subr.mxu0 %v500
        %849 = vmatpush1.msra.mxu0 %v499
        %850 = vmatprep.subr.mxu0 %v510
        %851 = vmatpush1.msra.mxu0 %v509
        %852 = vmatprep.subr.mxu0 %v520
        %853 = vmatpush1.msra.mxu0 %v519
        %854 = vmatprep.subr.mxu0 %v530
        %855 = vmatpush1.msra.mxu0 %v529
        %856 = vmatprep.subr.mxu0 %v540
        %857 = vmatpush1.msra.mxu0 %v539
        %858 = vmatprep.subr.mxu0 %v550
        %859 = vmatpush1.msra.mxu0 %v549
        %860 = vmatprep.subr.mxu0 %v560
        %861 = vmatpush1.msra.mxu0 %v559
        %862 = vmatprep.subr.mxu0 %v570
        %863 = vmatpush1.msra.mxu0 %v569
        %864 = vmatprep.subr.mxu0 %v580
        %865 = vmatpush1.msra.mxu0 %v579
        %866 = vmatprep.subr.mxu0 %v590
        %867 = vmatpush1.msra.mxu0 %v589
        %868 = vmatprep.subr.mxu0 %v600
        %869 = vmatpush1.msra.mxu0 %v599
        %870 = vmatprep.subr.mxu0 %v610
        %871 = vmatpush1.msra.mxu0 %v609
        %872 = vmatprep.subr.mxu0 %v620
        %873 = vmatpush1.msra.mxu0 %v619
        %874 = vmatprep.subr.mxu0 %v630
        %875 = vmatpush1.msra.mxu0 %v629
        %876 = vmatprep.subr.mxu0 %v640
        %877 = vmatpush1.msra.mxu0 %v639
        %878 = vmatprep.subr.mxu0 %v650
        %879 = vmatpush1.msra.mxu0 %v649
        %880 = vmatprep.subr.mxu0 %v660
        %881 = vmatpush1.msra.mxu0 %v659
        %882 = vmatprep.subr.mxu0 %v670
        %883 = vmatpush1.msra.mxu0 %v669
        %884 = vmatprep.mubr.f32.mxu0 %v676
        %885 = vmatmul.mubr.f32.gmra.mrb[0].mxu0 %v354
        %v886 = vpop.f32.mrb[0].mxu0
        %v887 = vadd.f32 0.0, %v886
        %v888 = vpop.f32.mrb[0].mxu0
        %v889 = vadd.f32 0.0, %v888
        %890 = vdwg.mxu0
        %891 = vmatprep.subr.mxu0 %v362
        %892 = vmatpush1.msra.mxu0 %v361
        %893 = vmatprep.subr.mxu0 %v372
        %894 = vmatpush1.msra.mxu0 %v371
        %895 = vmatprep.subr.mxu0 %v382
        %896 = vmatpush1.msra.mxu0 %v381
        %897 = vmatprep.subr.mxu0 %v392
        %898 = vmatpush1.msra.mxu0 %v391
        %899 = vmatprep.subr.mxu0 %v402
        %900 = vmatpush1.msra.mxu0 %v401
        %901 = vmatprep.subr.mxu0 %v412
        %902 = vmatpush1.msra.mxu0 %v411
        %903 = vmatprep.subr.mxu0 %v422
        %904 = vmatpush1.msra.mxu0 %v421
        %905 = vmatprep.subr.mxu0 %v432
        %906 = vmatpush1.msra.mxu0 %v431
        %907 = vmatprep.subr.mxu0 %v442
        %908 = vmatpush1.msra.mxu0 %v441
        %909 = vmatprep.subr.mxu0 %v452
        %910 = vmatpush1.msra.mxu0 %v451
        %911 = vmatprep.subr.mxu0 %v462
        %912 = vmatpush1.msra.mxu0 %v461
        %913 = vmatprep.subr.mxu0 %v472
        %914 = vmatpush1.msra.mxu0 %v471
        %915 = vmatprep.subr.mxu0 %v482
        %916 = vmatpush1.msra.mxu0 %v481
        %917 = vmatprep.subr.mxu0 %v492
        %918 = vmatpush1.msra.mxu0 %v491
        %919 = vmatprep.subr.mxu0 %v502
        %920 = vmatpush1.msra.mxu0 %v501
        %921 = vmatprep.subr.mxu0 %v512
        %922 = vmatpush1.msra.mxu0 %v511
        %923 = vmatprep.subr.mxu0 %v522
        %924 = vmatpush1.msra.mxu0 %v521
        %925 = vmatprep.subr.mxu0 %v532
        %926 = vmatpush1.msra.mxu0 %v531
        %927 = vmatprep.subr.mxu0 %v542
        %928 = vmatpush1.msra.mxu0 %v541
        %929 = vmatprep.subr.mxu0 %v552
        %930 = vmatpush1.msra.mxu0 %v551
        %931 = vmatprep.subr.mxu0 %v562
        %932 = vmatpush1.msra.mxu0 %v561
        %933 = vmatprep.subr.mxu0 %v572
        %934 = vmatpush1.msra.mxu0 %v571
        %935 = vmatprep.subr.mxu0 %v582
        %936 = vmatpush1.msra.mxu0 %v581
        %937 = vmatprep.subr.mxu0 %v592
        %938 = vmatpush1.msra.mxu0 %v591
        %939 = vmatprep.subr.mxu0 %v602
        %940 = vmatpush1.msra.mxu0 %v601
        %941 = vmatprep.subr.mxu0 %v612
        %942 = vmatpush1.msra.mxu0 %v611
        %943 = vmatprep.subr.mxu0 %v622
        %944 = vmatpush1.msra.mxu0 %v621
        %945 = vmatprep.subr.mxu0 %v632
        %946 = vmatpush1.msra.mxu0 %v631
        %947 = vmatprep.subr.mxu0 %v642
        %948 = vmatpush1.msra.mxu0 %v641
        %949 = vmatprep.subr.mxu0 %v652
        %950 = vmatpush1.msra.mxu0 %v651
        %951 = vmatprep.subr.mxu0 %v662
        %952 = vmatpush1.msra.mxu0 %v661
        %953 = vmatprep.subr.mxu0 %v672
        %954 = vmatpush1.msra.mxu0 %v671
        %955 = vmatprep.mubr.f32.mxu0 %v676
        %956 = vmatmul.mubr.f32.gmra.mrb[0].mxu0 %v354
        %v957 = vpop.f32.mrb[0].mxu0
        %v958 = vadd.f32 0.0, %v957
        %v959 = vpop.f32.mrb[0].mxu0
        %v960 = vadd.f32 0.0, %v959
        %961 = vdwg.mxu0
        %962 = vmatprep.subr.mxu0 %v364
        %963 = vmatpush1.msra.mxu0 %v363
        %964 = vmatprep.subr.mxu0 %v374
        %965 = vmatpush1.msra.mxu0 %v373
        %966 = vmatprep.subr.mxu0 %v384
        %967 = vmatpush1.msra.mxu0 %v383
        %968 = vmatprep.subr.mxu0 %v394
        %969 = vmatpush1.msra.mxu0 %v393
        %970 = vmatprep.subr.mxu0 %v404
        %971 = vmatpush1.msra.mxu0 %v403
        %972 = vmatprep.subr.mxu0 %v414
        %973 = vmatpush1.msra.mxu0 %v413
        %974 = vmatprep.subr.mxu0 %v424
        %975 = vmatpush1.msra.mxu0 %v423
        %976 = vmatprep.subr.mxu0 %v434
        %977 = vmatpush1.msra.mxu0 %v433
        %978 = vmatprep.subr.mxu0 %v444
        %979 = vmatpush1.msra.mxu0 %v443
        %980 = vmatprep.subr.mxu0 %v454
        %981 = vmatpush1.msra.mxu0 %v453
        %982 = vmatprep.subr.mxu0 %v464
        %983 = vmatpush1.msra.mxu0 %v463
        %984 = vmatprep.subr.mxu0 %v474
        %985 = vmatpush1.msra.mxu0 %v473
        %986 = vmatprep.subr.mxu0 %v484
        %987 = vmatpush1.msra.mxu0 %v483
        %988 = vmatprep.subr.mxu0 %v494
        %989 = vmatpush1.msra.mxu0 %v493
        %990 = vmatprep.subr.mxu0 %v504
        %991 = vmatpush1.msra.mxu0 %v503
        %992 = vmatprep.subr.mxu0 %v514
        %993 = vmatpush1.msra.mxu0 %v513
        %994 = vmatprep.subr.mxu0 %v524
        %995 = vmatpush1.msra.mxu0 %v523
        %996 = vmatprep.subr.mxu0 %v534
        %997 = vmatpush1.msra.mxu0 %v533
        %998 = vmatprep.subr.mxu0 %v544
        %999 = vmatpush1.msra.mxu0 %v543
        %1000 = vmatprep.subr.mxu0 %v554
        %1001 = vmatpush1.msra.mxu0 %v553
        %1002 = vmatprep.subr.mxu0 %v564
        %1003 = vmatpush1.msra.mxu0 %v563
        %1004 = vmatprep.subr.mxu0 %v574
        %1005 = vmatpush1.msra.mxu0 %v573
        %1006 = vmatprep.subr.mxu0 %v584
        %1007 = vmatpush1.msra.mxu0 %v583
        %1008 = vmatprep.subr.mxu0 %v594
        %1009 = vmatpush1.msra.mxu0 %v593
        %1010 = vmatprep.subr.mxu0 %v604
        %1011 = vmatpush1.msra.mxu0 %v603
        %1012 = vmatprep.subr.mxu0 %v614
        %1013 = vmatpush1.msra.mxu0 %v613
        %1014 = vmatprep.subr.mxu0 %v624
        %1015 = vmatpush1.msra.mxu0 %v623
        %1016 = vmatprep.subr.mxu0 %v634
        %1017 = vmatpush1.msra.mxu0 %v633
        %1018 = vmatprep.subr.mxu0 %v644
        %1019 = vmatpush1.msra.mxu0 %v643
        %1020 = vmatprep.subr.mxu0 %v654
        %1021 = vmatpush1.msra.mxu0 %v653
        %1022 = vmatprep.subr.mxu0 %v664
        %1023 = vmatpush1.msra.mxu0 %v663
        %1024 = vmatprep.subr.mxu0 %v674
        %1025 = vmatpush1.msra.mxu0 %v673
        %1026 = vmatprep.mubr.f32.mxu0 %v676
        %1027 = vmatmul.mubr.f32.gmra.mrb[0].mxu0 %v354
        %v1028 = vpop.f32.mrb[0].mxu0
        %v1029 = vadd.f32 0.0, %v1028
        %v1030 = vpop.f32.mrb[0].mxu0
        %v1031 = vadd.f32 0.0, %v1030
        %1032 = vdwg.mxu0
        %1033 = vst [vmem:[#allocation2] sm:$0xf] %v745
        %1034 = vst [vmem:[#allocation2 + $0x8] sm:$0xf] %v747
        %1035 = vst [vmem:[#allocation2 + $0x10] sm:$0xf] %v816
        %1036 = vst [vmem:[#allocation2 + $0x18] sm:$0xf] %v818
        %1037 = vst [vmem:[#allocation2 + $0x20] sm:$0xf] %v887
        %1038 = vst [vmem:[#allocation2 + $0x28] sm:$0xf] %v889
        %1039 = vst [vmem:[#allocation2 + $0x30] sm:$0xf] %v958
        %1040 = vst [vmem:[#allocation2 + $0x38] sm:$0xf] %v960
        %1041 = vst [vmem:[#allocation2 + $0x40] sm:$0xf] %v1029
        %1042 = vst [vmem:[#allocation2 + $0x48] sm:$0xf] %v1031
        %v1043 = vld [vmem:[%s348] sm:$0xff]
        %v1044 = vld [vmem:[%s348 + $0x8] sm:$0xff]
        %v1045 = vld [vmem:[%s348 + $0x10] sm:$0xff]
        %v1046 = vld [vmem:[%s348 + $0x18] sm:$0xff]
        %v1047 = vld [vmem:[%s348 + $0x20] sm:$0xff]
        %v1053 = vcombine.low %v1043, %v1043
        %v1054 = vcombine.low %v1044, %v1044
        %v1055 = vcombine.low %v1045, %v1045
        %v1056 = vcombine.low %v1046, %v1046
        %v1057 = vcombine.low %v1047, %v1047
        %1063 = vst [vmem:[#allocation2] sm:$0xf0] %v1053
        %1064 = vst [vmem:[#allocation2 + $0x8] sm:$0xf0] %v1043
        %1065 = vst [vmem:[#allocation2 + $0x10] sm:$0xf0] %v1054
        %1066 = vst [vmem:[#allocation2 + $0x18] sm:$0xf0] %v1044
        %1067 = vst [vmem:[#allocation2 + $0x20] sm:$0xf0] %v1055
        %1068 = vst [vmem:[#allocation2 + $0x28] sm:$0xf0] %v1045
        %1069 = vst [vmem:[#allocation2 + $0x30] sm:$0xf0] %v1056
        %1070 = vst [vmem:[#allocation2 + $0x38] sm:$0xf0] %v1046
        %1071 = vst [vmem:[#allocation2 + $0x40] sm:$0xf0] %v1057
        %1072 = vst [vmem:[#allocation2 + $0x48] sm:$0xf0] %v1047
        %v1073 = vld [vmem:[#allocation2] sm:$0xff]
        %v1074 = vld [vmem:[#allocation2 + $0x8] sm:$0xff]
        %v1075 = vld [vmem:[#allocation2 + $0x10] sm:$0xff]
        %v1076 = vld [vmem:[#allocation2 + $0x18] sm:$0xff]
        %v1077 = vld [vmem:[#allocation2 + $0x20] sm:$0xff]
        %v1078 = vld [vmem:[#allocation2 + $0x28] sm:$0xff]
        %v1079 = vld [vmem:[#allocation2 + $0x30] sm:$0xff]
        %v1080 = vld [vmem:[#allocation2 + $0x38] sm:$0xff]
        %v1081 = vld [vmem:[#allocation2 + $0x40] sm:$0xff]
        %v1082 = vld [vmem:[#allocation2 + $0x48] sm:$0xff]
        %1093 = vrot.lane.b32.xlu0 %v1073, 127
        %v1094 = vpop.permute.xlu0 %1093
        %1095 = vrot.lane.b32.xlu0 %v1074, 127
        %v1096 = vpop.permute.xlu0 %1095
        %1097 = vrot.lane.b32.xlu0 %v1075, 127
        %v1098 = vpop.permute.xlu0 %1097
        %1099 = vrot.lane.b32.xlu0 %v1076, 127
        %v1100 = vpop.permute.xlu0 %1099
        %1101 = vrot.lane.b32.xlu0 %v1077, 127
        %v1102 = vpop.permute.xlu0 %1101
        %1103 = vrot.lane.b32.xlu0 %v1078, 127
        %v1104 = vpop.permute.xlu0 %1103
        %1105 = vrot.lane.b32.xlu0 %v1079, 127
        %v1106 = vpop.permute.xlu0 %1105
        %1107 = vrot.lane.b32.xlu0 %v1080, 127
        %v1108 = vpop.permute.xlu0 %1107
        %1109 = vrot.lane.b32.xlu0 %v1081, 127
        %v1110 = vpop.permute.xlu0 %1109
        %1111 = vrot.lane.b32.xlu0 %v1082, 127
        %v1112 = vpop.permute.xlu0 %1111
        %vm1113 = vcmask 1039360
        %v1114 = vsel %vm1113, %v1094, %v1096
        %v1115 = vsel %vm1113, %v1096, %v1098
        %v1116 = vsel %vm1113, %v1098, %v1100
        %v1117 = vsel %vm1113, %v1100, %v1102
        %v1118 = vsel %vm1113, %v1102, %v1104
        %v1119 = vsel %vm1113, %v1104, %v1106
        %v1120 = vsel %vm1113, %v1106, %v1108
        %v1121 = vsel %vm1113, %v1108, %v1110
        %v1122 = vsel %vm1113, %v1110, %v1112
        %1123 = vrot.lane.b32.xlu0 %v1073, 126
        %v1124 = vpop.permute.xlu0 %1123
        %1125 = vrot.lane.b32.xlu0 %v1074, 126
        %v1126 = vpop.permute.xlu0 %1125
        %1127 = vrot.lane.b32.xlu0 %v1075, 126
        %v1128 = vpop.permute.xlu0 %1127
        %1129 = vrot.lane.b32.xlu0 %v1076, 126
        %v1130 = vpop.permute.xlu0 %1129
        %1131 = vrot.lane.b32.xlu0 %v1077, 126
        %v1132 = vpop.permute.xlu0 %1131
        %1133 = vrot.lane.b32.xlu0 %v1078, 126
        %v1134 = vpop.permute.xlu0 %1133
        %1135 = vrot.lane.b32.xlu0 %v1079, 126
        %v1136 = vpop.permute.xlu0 %1135
        %1137 = vrot.lane.b32.xlu0 %v1080, 126
        %v1138 = vpop.permute.xlu0 %1137
        %1139 = vrot.lane.b32.xlu0 %v1081, 126
        %v1140 = vpop.permute.xlu0 %1139
        %1141 = vrot.lane.b32.xlu0 %v1082, 126
        %v1142 = vpop.permute.xlu0 %1141
        %vm1143 = vcmask 1031168
        %v1144 = vsel %vm1143, %v1124, %v1126
        %v1145 = vsel %vm1143, %v1126, %v1128
        %v1146 = vsel %vm1143, %v1128, %v1130
        %v1147 = vsel %vm1143, %v1130, %v1132
        %v1148 = vsel %vm1143, %v1132, %v1134
        %v1149 = vsel %vm1143, %v1134, %v1136
        %v1150 = vsel %vm1143, %v1136, %v1138
        %v1151 = vsel %vm1143, %v1138, %v1140
        %v1152 = vsel %vm1143, %v1140, %v1142
        %1153 = vrot.lane.b32.xlu0 %v1073, 94
        %v1154 = vpop.permute.xlu0 %1153
        %1155 = vrot.lane.b32.xlu0 %v1074, 94
        %v1156 = vpop.permute.xlu0 %1155
        %1157 = vrot.lane.b32.xlu0 %v1075, 94
        %v1158 = vpop.permute.xlu0 %1157
        %1159 = vrot.lane.b32.xlu0 %v1076, 94
        %v1160 = vpop.permute.xlu0 %1159
        %1161 = vrot.lane.b32.xlu0 %v1077, 94
        %v1162 = vpop.permute.xlu0 %1161
        %1163 = vrot.lane.b32.xlu0 %v1078, 94
        %v1164 = vpop.permute.xlu0 %1163
        %1165 = vrot.lane.b32.xlu0 %v1079, 94
        %v1166 = vpop.permute.xlu0 %1165
        %1167 = vrot.lane.b32.xlu0 %v1080, 94
        %v1168 = vpop.permute.xlu0 %1167
        %1169 = vrot.lane.b32.xlu0 %v1081, 94
        %v1170 = vpop.permute.xlu0 %1169
        %1171 = vrot.lane.b32.xlu0 %v1082, 94
        %v1172 = vpop.permute.xlu0 %1171
        %vm1173 = vcmask 769024
        %v1174 = vsel %vm1173, %v1154, %v1156
        %v1175 = vsel %vm1173, %v1156, %v1158
        %v1176 = vsel %vm1173, %v1158, %v1160
        %v1177 = vsel %vm1173, %v1160, %v1162
        %v1178 = vsel %vm1173, %v1162, %v1164
        %v1179 = vsel %vm1173, %v1164, %v1166
        %v1180 = vsel %vm1173, %v1166, %v1168
        %v1181 = vsel %vm1173, %v1168, %v1170
        %v1182 = vsel %vm1173, %v1170, %v1172
        %1183 = vrot.lane.b32.xlu0 %v1074, 93
        %v1184 = vpop.permute.xlu0 %1183
        %1185 = vrot.lane.b32.xlu0 %v1075, 93
        %v1186 = vpop.permute.xlu0 %1185
        %1187 = vrot.lane.b32.xlu0 %v1076, 93
        %v1188 = vpop.permute.xlu0 %1187
        %1189 = vrot.lane.b32.xlu0 %v1077, 93
        %v1190 = vpop.permute.xlu0 %1189
        %1191 = vrot.lane.b32.xlu0 %v1078, 93
        %v1192 = vpop.permute.xlu0 %1191
        %1193 = vrot.lane.b32.xlu0 %v1079, 93
        %v1194 = vpop.permute.xlu0 %1193
        %1195 = vrot.lane.b32.xlu0 %v1080, 93
        %v1196 = vpop.permute.xlu0 %1195
        %1197 = vrot.lane.b32.xlu0 %v1081, 93
        %v1198 = vpop.permute.xlu0 %1197
        %1199 = vrot.lane.b32.xlu0 %v1082, 93
        %v1200 = vpop.permute.xlu0 %1199
        %vm1201 = vcmask 760832
        %v1202 = vsel %vm1201, %v1184, %v1186
        %v1203 = vsel %vm1201, %v1186, %v1188
        %v1204 = vsel %vm1201, %v1188, %v1190
        %v1205 = vsel %vm1201, %v1190, %v1192
        %v1206 = vsel %vm1201, %v1192, %v1194
        %v1207 = vsel %vm1201, %v1194, %v1196
        %v1208 = vsel %vm1201, %v1196, %v1198
        %v1209 = vsel %vm1201, %v1198, %v1200
        %1210 = vrot.lane.b32.xlu0 %v1074, 92
        %v1211 = vpop.permute.xlu0 %1210
        %1212 = vrot.lane.b32.xlu0 %v1075, 92
        %v1213 = vpop.permute.xlu0 %1212
        %1214 = vrot.lane.b32.xlu0 %v1076, 92
        %v1215 = vpop.permute.xlu0 %1214
        %1216 = vrot.lane.b32.xlu0 %v1077, 92
        %v1217 = vpop.permute.xlu0 %1216
        %1218 = vrot.lane.b32.xlu0 %v1078, 92
        %v1219 = vpop.permute.xlu0 %1218
        %1220 = vrot.lane.b32.xlu0 %v1079, 92
        %v1221 = vpop.permute.xlu0 %1220
        %1222 = vrot.lane.b32.xlu0 %v1080, 92
        %v1223 = vpop.permute.xlu0 %1222
        %1224 = vrot.lane.b32.xlu0 %v1081, 92
        %v1225 = vpop.permute.xlu0 %1224
        %1226 = vrot.lane.b32.xlu0 %v1082, 92
        %v1227 = vpop.permute.xlu0 %1226
        %vm1228 = vcmask 752640
        %v1229 = vsel %vm1228, %v1211, %v1213
        %v1230 = vsel %vm1228, %v1213, %v1215
        %v1231 = vsel %vm1228, %v1215, %v1217
        %v1232 = vsel %vm1228, %v1217, %v1219
        %v1233 = vsel %vm1228, %v1219, %v1221
        %v1234 = vsel %vm1228, %v1221, %v1223
        %v1235 = vsel %vm1228, %v1223, %v1225
        %v1236 = vsel %vm1228, %v1225, %v1227
        %1237 = vrot.lane.b32.xlu0 %v1074, 60
        %v1238 = vpop.permute.xlu0 %1237
        %1239 = vrot.lane.b32.xlu0 %v1075, 60
        %v1240 = vpop.permute.xlu0 %1239
        %1241 = vrot.lane.b32.xlu0 %v1076, 60
        %v1242 = vpop.permute.xlu0 %1241
        %1243 = vrot.lane.b32.xlu0 %v1077, 60
        %v1244 = vpop.permute.xlu0 %1243
        %1245 = vrot.lane.b32.xlu0 %v1078, 60
        %v1246 = vpop.permute.xlu0 %1245
        %1247 = vrot.lane.b32.xlu0 %v1079, 60
        %v1248 = vpop.permute.xlu0 %1247
        %1249 = vrot.lane.b32.xlu0 %v1080, 60
        %v1250 = vpop.permute.xlu0 %1249
        %1251 = vrot.lane.b32.xlu0 %v1081, 60
        %v1252 = vpop.permute.xlu0 %1251
        %1253 = vrot.lane.b32.xlu0 %v1082, 60
        %v1254 = vpop.permute.xlu0 %1253
        %vm1255 = vcmask 490496
        %v1256 = vsel %vm1255, %v1238, %v1240
        %v1257 = vsel %vm1255, %v1240, %v1242
        %v1258 = vsel %vm1255, %v1242, %v1244
        %v1259 = vsel %vm1255, %v1244, %v1246
        %v1260 = vsel %vm1255, %v1246, %v1248
        %v1261 = vsel %vm1255, %v1248, %v1250
        %v1262 = vsel %vm1255, %v1250, %v1252
        %v1263 = vsel %vm1255, %v1252, %v1254
        %1264 = vrot.lane.b32.xlu0 %v1074, 59
        %v1265 = vpop.permute.xlu0 %1264
        %1266 = vrot.lane.b32.xlu0 %v1075, 59
        %v1267 = vpop.permute.xlu0 %1266
        %1268 = vrot.lane.b32.xlu0 %v1076, 59
        %v1269 = vpop.permute.xlu0 %1268
        %1270 = vrot.lane.b32.xlu0 %v1077, 59
        %v1271 = vpop.permute.xlu0 %1270
        %1272 = vrot.lane.b32.xlu0 %v1078, 59
        %v1273 = vpop.permute.xlu0 %1272
        %1274 = vrot.lane.b32.xlu0 %v1079, 59
        %v1275 = vpop.permute.xlu0 %1274
        %1276 = vrot.lane.b32.xlu0 %v1080, 59
        %v1277 = vpop.permute.xlu0 %1276
        %1278 = vrot.lane.b32.xlu0 %v1081, 59
        %v1279 = vpop.permute.xlu0 %1278
        %1280 = vrot.lane.b32.xlu0 %v1082, 59
        %v1281 = vpop.permute.xlu0 %1280
        %vm1282 = vcmask 482304
        %v1283 = vsel %vm1282, %v1265, %v1267
        %v1284 = vsel %vm1282, %v1267, %v1269
        %v1285 = vsel %vm1282, %v1269, %v1271
        %v1286 = vsel %vm1282, %v1271, %v1273
        %v1287 = vsel %vm1282, %v1273, %v1275
        %v1288 = vsel %vm1282, %v1275, %v1277
        %v1289 = vsel %vm1282, %v1277, %v1279
        %v1290 = vsel %vm1282, %v1279, %v1281
        %1291 = vrot.lane.b32.xlu0 %v1074, 58
        %v1292 = vpop.permute.xlu0 %1291
        %1293 = vrot.lane.b32.xlu0 %v1075, 58
        %v1294 = vpop.permute.xlu0 %1293
        %1295 = vrot.lane.b32.xlu0 %v1076, 58
        %v1296 = vpop.permute.xlu0 %1295
        %1297 = vrot.lane.b32.xlu0 %v1077, 58
        %v1298 = vpop.permute.xlu0 %1297
        %1299 = vrot.lane.b32.xlu0 %v1078, 58
        %v1300 = vpop.permute.xlu0 %1299
        %1301 = vrot.lane.b32.xlu0 %v1079, 58
        %v1302 = vpop.permute.xlu0 %1301
        %1303 = vrot.lane.b32.xlu0 %v1080, 58
        %v1304 = vpop.permute.xlu0 %1303
        %1305 = vrot.lane.b32.xlu0 %v1081, 58
        %v1306 = vpop.permute.xlu0 %1305
        %1307 = vrot.lane.b32.xlu0 %v1082, 58
        %v1308 = vpop.permute.xlu0 %1307
        %vm1309 = vcmask 474112
        %v1310 = vsel %vm1309, %v1292, %v1294
        %v1311 = vsel %vm1309, %v1294, %v1296
        %v1312 = vsel %vm1309, %v1296, %v1298
        %v1313 = vsel %vm1309, %v1298, %v1300
        %v1314 = vsel %vm1309, %v1300, %v1302
        %v1315 = vsel %vm1309, %v1302, %v1304
        %v1316 = vsel %vm1309, %v1304, %v1306
        %v1317 = vsel %vm1309, %v1306, %v1308
        %v1318 = vld [vmem:[%s3] sm:$0xf]
        %v1319 = vld [vmem:[%s4] sm:$0xf]
        %1321 = vset.pattern.permute.xlu0 0
        %1322 = vperm.xlu0 %1321, %v1319
        %v1323 = vpop.permute.xlu0 %1322
        %1325 = vrot.lane.b32.xlu0 %v1073, 35
        %v1326 = vpop.permute.xlu0 %1325
        %1327 = vrot.lane.b32.xlu0 %v1074, 35
        %v1328 = vpop.permute.xlu0 %1327
        %1329 = vrot.lane.b32.xlu0 %v1075, 35
        %v1330 = vpop.permute.xlu0 %1329
        %1331 = vrot.lane.b32.xlu0 %v1076, 35
        %v1332 = vpop.permute.xlu0 %1331
        %1333 = vrot.lane.b32.xlu0 %v1077, 35
        %v1334 = vpop.permute.xlu0 %1333
        %1335 = vrot.lane.b32.xlu0 %v1078, 35
        %v1336 = vpop.permute.xlu0 %1335
        %1337 = vrot.lane.b32.xlu0 %v1079, 35
        %v1338 = vpop.permute.xlu0 %1337
        %1339 = vrot.lane.b32.xlu0 %v1080, 35
        %v1340 = vpop.permute.xlu0 %1339
        %1341 = vrot.lane.b32.xlu0 %v1081, 35
        %v1342 = vpop.permute.xlu0 %1341
        %1343 = vrot.lane.b32.xlu0 %v1082, 35
        %v1344 = vpop.permute.xlu0 %1343
        %1345 = vrot.lane.b32.xlu0 %v1114, 35
        %v1346 = vpop.permute.xlu0 %1345
        %1347 = vrot.lane.b32.xlu0 %v1115, 35
        %v1348 = vpop.permute.xlu0 %1347
        %1349 = vrot.lane.b32.xlu0 %v1116, 35
        %v1350 = vpop.permute.xlu0 %1349
        %1351 = vrot.lane.b32.xlu0 %v1117, 35
        %v1352 = vpop.permute.xlu0 %1351
        %1353 = vrot.lane.b32.xlu0 %v1118, 35
        %v1354 = vpop.permute.xlu0 %1353
        %1355 = vrot.lane.b32.xlu0 %v1119, 35
        %v1356 = vpop.permute.xlu0 %1355
        %1357 = vrot.lane.b32.xlu0 %v1120, 35
        %v1358 = vpop.permute.xlu0 %1357
        %1359 = vrot.lane.b32.xlu0 %v1121, 35
        %v1360 = vpop.permute.xlu0 %1359
        %1361 = vrot.lane.b32.xlu0 %v1122, 35
        %v1362 = vpop.permute.xlu0 %1361
        %1363 = vrot.lane.b32.xlu0 %v1112, 35
        %v1364 = vpop.permute.xlu0 %1363
        %1365 = vrot.lane.b32.xlu0 %v1144, 35
        %v1366 = vpop.permute.xlu0 %1365
        %1367 = vrot.lane.b32.xlu0 %v1145, 35
        %v1368 = vpop.permute.xlu0 %1367
        %1369 = vrot.lane.b32.xlu0 %v1146, 35
        %v1370 = vpop.permute.xlu0 %1369
        %1371 = vrot.lane.b32.xlu0 %v1147, 35
        %v1372 = vpop.permute.xlu0 %1371
        %1373 = vrot.lane.b32.xlu0 %v1148, 35
        %v1374 = vpop.permute.xlu0 %1373
        %1375 = vrot.lane.b32.xlu0 %v1149, 35
        %v1376 = vpop.permute.xlu0 %1375
        %1377 = vrot.lane.b32.xlu0 %v1150, 35
        %v1378 = vpop.permute.xlu0 %1377
        %1379 = vrot.lane.b32.xlu0 %v1151, 35
        %v1380 = vpop.permute.xlu0 %1379
        %1381 = vrot.lane.b32.xlu0 %v1152, 35
        %v1382 = vpop.permute.xlu0 %1381
        %1383 = vrot.lane.b32.xlu0 %v1142, 35
        %v1384 = vpop.permute.xlu0 %1383
        %1385 = vrot.lane.b32.xlu0 %v1174, 35
        %v1386 = vpop.permute.xlu0 %1385
        %1387 = vrot.lane.b32.xlu0 %v1175, 35
        %v1388 = vpop.permute.xlu0 %1387
        %1389 = vrot.lane.b32.xlu0 %v1176, 35
        %v1390 = vpop.permute.xlu0 %1389
        %1391 = vrot.lane.b32.xlu0 %v1177, 35
        %v1392 = vpop.permute.xlu0 %1391
        %1393 = vrot.lane.b32.xlu0 %v1178, 35
        %v1394 = vpop.permute.xlu0 %1393
        %1395 = vrot.lane.b32.xlu0 %v1179, 35
        %v1396 = vpop.permute.xlu0 %1395
        %1397 = vrot.lane.b32.xlu0 %v1180, 35
        %v1398 = vpop.permute.xlu0 %1397
        %1399 = vrot.lane.b32.xlu0 %v1181, 35
        %v1400 = vpop.permute.xlu0 %1399
        %1401 = vrot.lane.b32.xlu0 %v1182, 35
        %v1402 = vpop.permute.xlu0 %1401
        %1403 = vrot.lane.b32.xlu0 %v1172, 35
        %v1404 = vpop.permute.xlu0 %1403
        %1405 = vrot.lane.b32.xlu0 %v1184, 35
        %v1406 = vpop.permute.xlu0 %1405
        %1407 = vrot.lane.b32.xlu0 %v1202, 35
        %v1408 = vpop.permute.xlu0 %1407
        %1409 = vrot.lane.b32.xlu0 %v1203, 35
        %v1410 = vpop.permute.xlu0 %1409
        %1411 = vrot.lane.b32.xlu0 %v1204, 35
        %v1412 = vpop.permute.xlu0 %1411
        %1413 = vrot.lane.b32.xlu0 %v1205, 35
        %v1414 = vpop.permute.xlu0 %1413
        %1415 = vrot.lane.b32.xlu0 %v1206, 35
        %v1416 = vpop.permute.xlu0 %1415
        %1417 = vrot.lane.b32.xlu0 %v1207, 35
        %v1418 = vpop.permute.xlu0 %1417
        %1419 = vrot.lane.b32.xlu0 %v1208, 35
        %v1420 = vpop.permute.xlu0 %1419
        %1421 = vrot.lane.b32.xlu0 %v1209, 35
        %v1422 = vpop.permute.xlu0 %1421
        %1423 = vrot.lane.b32.xlu0 %v1200, 35
        %v1424 = vpop.permute.xlu0 %1423
        %1425 = vrot.lane.b32.xlu0 %v1211, 35
        %v1426 = vpop.permute.xlu0 %1425
        %1427 = vrot.lane.b32.xlu0 %v1229, 35
        %v1428 = vpop.permute.xlu0 %1427
        %1429 = vrot.lane.b32.xlu0 %v1230, 35
        %v1430 = vpop.permute.xlu0 %1429
        %1431 = vrot.lane.b32.xlu0 %v1231, 35
        %v1432 = vpop.permute.xlu0 %1431
        %1433 = vrot.lane.b32.xlu0 %v1232, 35
        %v1434 = vpop.permute.xlu0 %1433
        %1435 = vrot.lane.b32.xlu0 %v1233, 35
        %v1436 = vpop.permute.xlu0 %1435
        %1437 = vrot.lane.b32.xlu0 %v1234, 35
        %v1438 = vpop.permute.xlu0 %1437
        %1439 = vrot.lane.b32.xlu0 %v1235, 35
        %v1440 = vpop.permute.xlu0 %1439
        %1441 = vrot.lane.b32.xlu0 %v1236, 35
        %v1442 = vpop.permute.xlu0 %1441
        %1443 = vrot.lane.b32.xlu0 %v1227, 35
        %v1444 = vpop.permute.xlu0 %1443
        %1445 = vrot.lane.b32.xlu0 %v1238, 35
        %v1446 = vpop.permute.xlu0 %1445
        %1447 = vrot.lane.b32.xlu0 %v1256, 35
        %v1448 = vpop.permute.xlu0 %1447
        %1449 = vrot.lane.b32.xlu0 %v1257, 35
        %v1450 = vpop.permute.xlu0 %1449
        %1451 = vrot.lane.b32.xlu0 %v1258, 35
        %v1452 = vpop.permute.xlu0 %1451
        %1453 = vrot.lane.b32.xlu0 %v1259, 35
        %v1454 = vpop.permute.xlu0 %1453
        %1455 = vrot.lane.b32.xlu0 %v1260, 35
        %v1456 = vpop.permute.xlu0 %1455
        %1457 = vrot.lane.b32.xlu0 %v1261, 35
        %v1458 = vpop.permute.xlu0 %1457
        %1459 = vrot.lane.b32.xlu0 %v1262, 35
        %v1460 = vpop.permute.xlu0 %1459
        %1461 = vrot.lane.b32.xlu0 %v1263, 35
        %v1462 = vpop.permute.xlu0 %1461
        %1463 = vrot.lane.b32.xlu0 %v1254, 35
        %v1464 = vpop.permute.xlu0 %1463
        %1465 = vrot.lane.b32.xlu0 %v1265, 35
        %v1466 = vpop.permute.xlu0 %1465
        %1467 = vrot.lane.b32.xlu0 %v1283, 35
        %v1468 = vpop.permute.xlu0 %1467
        %1469 = vrot.lane.b32.xlu0 %v1284, 35
        %v1470 = vpop.permute.xlu0 %1469
        %1471 = vrot.lane.b32.xlu0 %v1285, 35
        %v1472 = vpop.permute.xlu0 %1471
        %1473 = vrot.lane.b32.xlu0 %v1286, 35
        %v1474 = vpop.permute.xlu0 %1473
        %1475 = vrot.lane.b32.xlu0 %v1287, 35
        %v1476 = vpop.permute.xlu0 %1475
        %1477 = vrot.lane.b32.xlu0 %v1288, 35
        %v1478 = vpop.permute.xlu0 %1477
        %1479 = vrot.lane.b32.xlu0 %v1289, 35
        %v1480 = vpop.permute.xlu0 %1479
        %1481 = vrot.lane.b32.xlu0 %v1290, 35
        %v1482 = vpop.permute.xlu0 %1481
        %1483 = vrot.lane.b32.xlu0 %v1281, 35
        %v1484 = vpop.permute.xlu0 %1483
        %1485 = vrot.lane.b32.xlu0 %v1292, 35
        %v1486 = vpop.permute.xlu0 %1485
        %1487 = vrot.lane.b32.xlu0 %v1310, 35
        %v1488 = vpop.permute.xlu0 %1487
        %1489 = vrot.lane.b32.xlu0 %v1311, 35
        %v1490 = vpop.permute.xlu0 %1489
        %1491 = vrot.lane.b32.xlu0 %v1312, 35
        %v1492 = vpop.permute.xlu0 %1491
        %1493 = vrot.lane.b32.xlu0 %v1313, 35
        %v1494 = vpop.permute.xlu0 %1493
        %1495 = vrot.lane.b32.xlu0 %v1314, 35
        %v1496 = vpop.permute.xlu0 %1495
        %1497 = vrot.lane.b32.xlu0 %v1315, 35
        %v1498 = vpop.permute.xlu0 %1497
        %1499 = vrot.lane.b32.xlu0 %v1316, 35
        %v1500 = vpop.permute.xlu0 %1499
        %1501 = vrot.lane.b32.xlu0 %v1317, 35
        %v1502 = vpop.permute.xlu0 %1501
        %1503 = vrot.lane.b32.xlu0 %v1308, 35
        %v1504 = vpop.permute.xlu0 %1503
        %vm1505 = vcmask 285696
        %v1506 = vsel %vm1505, %v1326, %v1328
        %v1507 = vsel %vm1505, %v1328, %v1330
        %v1508 = vsel %vm1505, %v1330, %v1332
        %v1509 = vsel %vm1505, %v1332, %v1334
        %v1510 = vsel %vm1505, %v1334, %v1336
        %v1511 = vsel %vm1505, %v1336, %v1338
        %v1512 = vsel %vm1505, %v1338, %v1340
        %v1513 = vsel %vm1505, %v1340, %v1342
        %v1514 = vsel %vm1505, %v1342, %v1344
        %v1515 = vsel %vm1505, %v1346, %v1348
        %v1516 = vsel %vm1505, %v1348, %v1350
        %v1517 = vsel %vm1505, %v1350, %v1352
        %v1518 = vsel %vm1505, %v1352, %v1354
        %v1519 = vsel %vm1505, %v1354, %v1356
        %v1520 = vsel %vm1505, %v1356, %v1358
        %v1521 = vsel %vm1505, %v1358, %v1360
        %v1522 = vsel %vm1505, %v1360, %v1362
        %v1523 = vsel %vm1505, %v1362, %v1364
        %v1524 = vsel %vm1505, %v1366, %v1368
        %v1525 = vsel %vm1505, %v1368, %v1370
        %v1526 = vsel %vm1505, %v1370, %v1372
        %v1527 = vsel %vm1505, %v1372, %v1374
        %v1528 = vsel %vm1505, %v1374, %v1376
        %v1529 = vsel %vm1505, %v1376, %v1378
        %v1530 = vsel %vm1505, %v1378, %v1380
        %v1531 = vsel %vm1505, %v1380, %v1382
        %v1532 = vsel %vm1505, %v1382, %v1384
        %v1533 = vsel %vm1505, %v1386, %v1388
        %v1534 = vsel %vm1505, %v1388, %v1390
        %v1535 = vsel %vm1505, %v1390, %v1392
        %v1536 = vsel %vm1505, %v1392, %v1394
        %v1537 = vsel %vm1505, %v1394, %v1396
        %v1538 = vsel %vm1505, %v1396, %v1398
        %v1539 = vsel %vm1505, %v1398, %v1400
        %v1540 = vsel %vm1505, %v1400, %v1402
        %v1541 = vsel %vm1505, %v1402, %v1404
        %v1542 = vsel %vm1505, %v1406, %v1408
        %v1543 = vsel %vm1505, %v1408, %v1410
        %v1544 = vsel %vm1505, %v1410, %v1412
        %v1545 = vsel %vm1505, %v1412, %v1414
        %v1546 = vsel %vm1505, %v1414, %v1416
        %v1547 = vsel %vm1505, %v1416, %v1418
        %v1548 = vsel %vm1505, %v1418, %v1420
        %v1549 = vsel %vm1505, %v1420, %v1422
        %v1550 = vsel %vm1505, %v1422, %v1424
        %v1551 = vsel %vm1505, %v1426, %v1428
        %v1552 = vsel %vm1505, %v1428, %v1430
        %v1553 = vsel %vm1505, %v1430, %v1432
        %v1554 = vsel %vm1505, %v1432, %v1434
        %v1555 = vsel %vm1505, %v1434, %v1436
        %v1556 = vsel %vm1505, %v1436, %v1438
        %v1557 = vsel %vm1505, %v1438, %v1440
        %v1558 = vsel %vm1505, %v1440, %v1442
        %v1559 = vsel %vm1505, %v1442, %v1444
        %v1560 = vsel %vm1505, %v1446, %v1448
        %v1561 = vsel %vm1505, %v1448, %v1450
        %v1562 = vsel %vm1505, %v1450, %v1452
        %v1563 = vsel %vm1505, %v1452, %v1454
        %v1564 = vsel %vm1505, %v1454, %v1456
        %v1565 = vsel %vm1505, %v1456, %v1458
        %v1566 = vsel %vm1505, %v1458, %v1460
        %v1567 = vsel %vm1505, %v1460, %v1462
        %v1568 = vsel %vm1505, %v1462, %v1464
        %v1569 = vsel %vm1505, %v1466, %v1468
        %v1570 = vsel %vm1505, %v1468, %v1470
        %v1571 = vsel %vm1505, %v1470, %v1472
        %v1572 = vsel %vm1505, %v1472, %v1474
        %v1573 = vsel %vm1505, %v1474, %v1476
        %v1574 = vsel %vm1505, %v1476, %v1478
        %v1575 = vsel %vm1505, %v1478, %v1480
        %v1576 = vsel %vm1505, %v1480, %v1482
        %v1577 = vsel %vm1505, %v1482, %v1484
        %v1578 = vsel %vm1505, %v1486, %v1488
        %v1579 = vsel %vm1505, %v1488, %v1490
        %v1580 = vsel %vm1505, %v1490, %v1492
        %v1581 = vsel %vm1505, %v1492, %v1494
        %v1582 = vsel %vm1505, %v1494, %v1496
        %v1583 = vsel %vm1505, %v1496, %v1498
        %v1584 = vsel %vm1505, %v1498, %v1500
        %v1585 = vsel %vm1505, %v1500, %v1502
        %v1586 = vsel %vm1505, %v1502, %v1504
        %vm1668 = vcmask 588800
        %v1670 = vsel %vm1668, %v1318, 0
        %1672 = vmatprep.subr.mxu0 %v1507
        %1673 = vmatpush1.msra.mxu0 %v1506
        %1674 = vmatprep.subr.mxu0 %v1516
        %1675 = vmatpush1.msra.mxu0 %v1515
        %1676 = vmatprep.subr.mxu0 %v1525
        %1677 = vmatpush1.msra.mxu0 %v1524
        %1678 = vmatprep.subr.mxu0 %v1534
        %1679 = vmatpush1.msra.mxu0 %v1533
        %1680 = vmatprep.subr.mxu0 %v1543
        %1681 = vmatpush1.msra.mxu0 %v1542
        %1682 = vmatprep.subr.mxu0 %v1552
        %1683 = vmatpush1.msra.mxu0 %v1551
        %1684 = vmatprep.subr.mxu0 %v1561
        %1685 = vmatpush1.msra.mxu0 %v1560
        %1686 = vmatprep.subr.mxu0 %v1570
        %1687 = vmatpush1.msra.mxu0 %v1569
        %1688 = vmatprep.subr.mxu0 %v1579
        %1689 = vmatpush1.msra.mxu0 %v1578
        %1690 = vmatprep.subr.mxu0 0.0
        %1691 = vmatpush1.msra.mxu0 0.0
        %1692 = vmatprep.subr.mxu0 0.0
        %1693 = vmatpush1.msra.mxu0 0.0
        %1694 = vmatprep.subr.mxu0 0.0
        %1695 = vmatpush1.msra.mxu0 0.0
        %1696 = vmatprep.subr.mxu0 0.0
        %1697 = vmatpush1.msra.mxu0 0.0
        %1698 = vmatprep.subr.mxu0 0.0
        %1699 = vmatpush1.msra.mxu0 0.0
        %1700 = vmatprep.subr.mxu0 0.0
        %1701 = vmatpush1.msra.mxu0 0.0
        %1702 = vmatprep.subr.mxu0 0.0
        %1703 = vmatpush1.msra.mxu0 0.0
        %1704 = vmatprep.subr.mxu0 0.0
        %1705 = vmatpush1.msra.mxu0 0.0
        %1706 = vmatprep.subr.mxu0 0.0
        %1707 = vmatpush1.msra.mxu0 0.0
        %1708 = vmatprep.subr.mxu0 0.0
        %1709 = vmatpush1.msra.mxu0 0.0
        %1710 = vmatprep.subr.mxu0 0.0
        %1711 = vmatpush1.msra.mxu0 0.0
        %1712 = vmatprep.subr.mxu0 0.0
        %1713 = vmatpush1.msra.mxu0 0.0
        %1714 = vmatprep.subr.mxu0 0.0
        %1715 = vmatpush1.msra.mxu0 0.0
        %1716 = vmatprep.subr.mxu0 0.0
        %1717 = vmatpush1.msra.mxu0 0.0
        %1718 = vmatprep.subr.mxu0 0.0
        %1719 = vmatpush1.msra.mxu0 0.0
        %1720 = vmatprep.subr.mxu0 0.0
        %1721 = vmatpush1.msra.mxu0 0.0
        %1722 = vmatprep.subr.mxu0 0.0
        %1723 = vmatpush1.msra.mxu0 0.0
        %1724 = vmatprep.subr.mxu0 0.0
        %1725 = vmatpush1.msra.mxu0 0.0
        %1726 = vmatprep.subr.mxu0 0.0
        %1727 = vmatpush1.msra.mxu0 0.0
        %1728 = vmatprep.subr.mxu0 0.0
        %1729 = vmatpush1.msra.mxu0 0.0
        %1730 = vmatprep.subr.mxu0 0.0
        %1731 = vmatpush1.msra.mxu0 0.0
        %1732 = vmatprep.subr.mxu0 0.0
        %1733 = vmatpush1.msra.mxu0 0.0
        %1734 = vmatprep.subr.mxu0 0.0
        %1735 = vmatpush1.msra.mxu0 0.0
        %1736 = vmatprep.mubr.f32.mxu0 0.0
        %1737 = vmatmul.mubr.f32.gmra.mrb[0].mxu0 %v1670
        %v1738 = vpop.f32.mrb[0].mxu0
        %v1739 = vadd.f32 %v1323, %v1738
        %v1740 = vpop.f32.mrb[0].mxu0
        %v1741 = vadd.f32 %v1323, %v1740
        %1742 = vdwg.mxu0
        %1743 = vmatprep.subr.mxu0 %v1509
        %1744 = vmatpush1.msra.mxu0 %v1508
        %1745 = vmatprep.subr.mxu0 %v1518
        %1746 = vmatpush1.msra.mxu0 %v1517
        %1747 = vmatprep.subr.mxu0 %v1527
        %1748 = vmatpush1.msra.mxu0 %v1526
        %1749 = vmatprep.subr.mxu0 %v1536
        %1750 = vmatpush1.msra.mxu0 %v1535
        %1751 = vmatprep.subr.mxu0 %v1545
        %1752 = vmatpush1.msra.mxu0 %v1544
        %1753 = vmatprep.subr.mxu0 %v1554
        %1754 = vmatpush1.msra.mxu0 %v1553
        %1755 = vmatprep.subr.mxu0 %v1563
        %1756 = vmatpush1.msra.mxu0 %v1562
        %1757 = vmatprep.subr.mxu0 %v1572
        %1758 = vmatpush1.msra.mxu0 %v1571
        %1759 = vmatprep.subr.mxu0 %v1581
        %1760 = vmatpush1.msra.mxu0 %v1580
        %1761 = vmatprep.subr.mxu0 0.0
        %1762 = vmatpush1.msra.mxu0 0.0
        %1763 = vmatprep.subr.mxu0 0.0
        %1764 = vmatpush1.msra.mxu0 0.0
        %1765 = vmatprep.subr.mxu0 0.0
        %1766 = vmatpush1.msra.mxu0 0.0
        %1767 = vmatprep.subr.mxu0 0.0
        %1768 = vmatpush1.msra.mxu0 0.0
        %1769 = vmatprep.subr.mxu0 0.0
        %1770 = vmatpush1.msra.mxu0 0.0
        %1771 = vmatprep.subr.mxu0 0.0
        %1772 = vmatpush1.msra.mxu0 0.0
        %1773 = vmatprep.subr.mxu0 0.0
        %1774 = vmatpush1.msra.mxu0 0.0
        %1775 = vmatprep.subr.mxu0 0.0
        %1776 = vmatpush1.msra.mxu0 0.0
        %1777 = vmatprep.subr.mxu0 0.0
        %1778 = vmatpush1.msra.mxu0 0.0
        %1779 = vmatprep.subr.mxu0 0.0
        %1780 = vmatpush1.msra.mxu0 0.0
        %1781 = vmatprep.subr.mxu0 0.0
        %1782 = vmatpush1.msra.mxu0 0.0
        %1783 = vmatprep.subr.mxu0 0.0
        %1784 = vmatpush1.msra.mxu0 0.0
        %1785 = vmatprep.subr.mxu0 0.0
        %1786 = vmatpush1.msra.mxu0 0.0
        %1787 = vmatprep.subr.mxu0 0.0
        %1788 = vmatpush1.msra.mxu0 0.0
        %1789 = vmatprep.subr.mxu0 0.0
        %1790 = vmatpush1.msra.mxu0 0.0
        %1791 = vmatprep.subr.mxu0 0.0
        %1792 = vmatpush1.msra.mxu0 0.0
        %1793 = vmatprep.subr.mxu0 0.0
        %1794 = vmatpush1.msra.mxu0 0.0
        %1795 = vmatprep.subr.mxu0 0.0
        %1796 = vmatpush1.msra.mxu0 0.0
        %1797 = vmatprep.subr.mxu0 0.0
        %1798 = vmatpush1.msra.mxu0 0.0
        %1799 = vmatprep.subr.mxu0 0.0
        %1800 = vmatpush1.msra.mxu0 0.0
        %1801 = vmatprep.subr.mxu0 0.0
        %1802 = vmatpush1.msra.mxu0 0.0
        %1803 = vmatprep.subr.mxu0 0.0
        %1804 = vmatpush1.msra.mxu0 0.0
        %1805 = vmatprep.subr.mxu0 0.0
        %1806 = vmatpush1.msra.mxu0 0.0
        %1807 = vmatprep.mubr.f32.mxu0 0.0
        %1808 = vmatmul.mubr.f32.gmra.mrb[0].mxu0 %v1670
        %v1809 = vpop.f32.mrb[0].mxu0
        %v1810 = vadd.f32 %v1323, %v1809
        %v1811 = vpop.f32.mrb[0].mxu0
        %v1812 = vadd.f32 %v1323, %v1811
        %1813 = vdwg.mxu0
        %1814 = vmatprep.subr.mxu0 %v1511
        %1815 = vmatpush1.msra.mxu0 %v1510
        %1816 = vmatprep.subr.mxu0 %v1520
        %1817 = vmatpush1.msra.mxu0 %v1519
        %1818 = vmatprep.subr.mxu0 %v1529
        %1819 = vmatpush1.msra.mxu0 %v1528
        %1820 = vmatprep.subr.mxu0 %v1538
        %1821 = vmatpush1.msra.mxu0 %v1537
        %1822 = vmatprep.subr.mxu0 %v1547
        %1823 = vmatpush1.msra.mxu0 %v1546
        %1824 = vmatprep.subr.mxu0 %v1556
        %1825 = vmatpush1.msra.mxu0 %v1555
        %1826 = vmatprep.subr.mxu0 %v1565
        %1827 = vmatpush1.msra.mxu0 %v1564
        %1828 = vmatprep.subr.mxu0 %v1574
        %1829 = vmatpush1.msra.mxu0 %v1573
        %1830 = vmatprep.subr.mxu0 %v1583
        %1831 = vmatpush1.msra.mxu0 %v1582
        %1832 = vmatprep.subr.mxu0 0.0
        %1833 = vmatpush1.msra.mxu0 0.0
        %1834 = vmatprep.subr.mxu0 0.0
        %1835 = vmatpush1.msra.mxu0 0.0
        %1836 = vmatprep.subr.mxu0 0.0
        %1837 = vmatpush1.msra.mxu0 0.0
        %1838 = vmatprep.subr.mxu0 0.0
        %1839 = vmatpush1.msra.mxu0 0.0
        %1840 = vmatprep.subr.mxu0 0.0
        %1841 = vmatpush1.msra.mxu0 0.0
        %1842 = vmatprep.subr.mxu0 0.0
        %1843 = vmatpush1.msra.mxu0 0.0
        %1844 = vmatprep.subr.mxu0 0.0
        %1845 = vmatpush1.msra.mxu0 0.0
        %1846 = vmatprep.subr.mxu0 0.0
        %1847 = vmatpush1.msra.mxu0 0.0
        %1848 = vmatprep.subr.mxu0 0.0
        %1849 = vmatpush1.msra.mxu0 0.0
        %1850 = vmatprep.subr.mxu0 0.0
        %1851 = vmatpush1.msra.mxu0 0.0
        %1852 = vmatprep.subr.mxu0 0.0
        %1853 = vmatpush1.msra.mxu0 0.0
        %1854 = vmatprep.subr.mxu0 0.0
        %1855 = vmatpush1.msra.mxu0 0.0
        %1856 = vmatprep.subr.mxu0 0.0
        %1857 = vmatpush1.msra.mxu0 0.0
        %1858 = vmatprep.subr.mxu0 0.0
        %1859 = vmatpush1.msra.mxu0 0.0
        %1860 = vmatprep.subr.mxu0 0.0
        %1861 = vmatpush1.msra.mxu0 0.0
        %1862 = vmatprep.subr.mxu0 0.0
        %1863 = vmatpush1.msra.mxu0 0.0
        %1864 = vmatprep.subr.mxu0 0.0
        %1865 = vmatpush1.msra.mxu0 0.0
        %1866 = vmatprep.subr.mxu0 0.0
        %1867 = vmatpush1.msra.mxu0 0.0
        %1868 = vmatprep.subr.mxu0 0.0
        %1869 = vmatpush1.msra.mxu0 0.0
        %1870 = vmatprep.subr.mxu0 0.0
        %1871 = vmatpush1.msra.mxu0 0.0
        %1872 = vmatprep.subr.mxu0 0.0
        %1873 = vmatpush1.msra.mxu0 0.0
        %1874 = vmatprep.subr.mxu0 0.0
        %1875 = vmatpush1.msra.mxu0 0.0
        %1876 = vmatprep.subr.mxu0 0.0
        %1877 = vmatpush1.msra.mxu0 0.0
        %1878 = vmatprep.mubr.f32.mxu0 0.0
        %1879 = vmatmul.mubr.f32.gmra.mrb[0].mxu0 %v1670
        %v1880 = vpop.f32.mrb[0].mxu0
        %v1881 = vadd.f32 %v1323, %v1880
        %v1882 = vpop.f32.mrb[0].mxu0
        %v1883 = vadd.f32 %v1323, %v1882
        %1884 = vdwg.mxu0
        %1885 = vmatprep.subr.mxu0 %v1513
        %1886 = vmatpush1.msra.mxu0 %v1512
        %1887 = vmatprep.subr.mxu0 %v1522
        %1888 = vmatpush1.msra.mxu0 %v1521
        %1889 = vmatprep.subr.mxu0 %v1531
        %1890 = vmatpush1.msra.mxu0 %v1530
        %1891 = vmatprep.subr.mxu0 %v1540
        %1892 = vmatpush1.msra.mxu0 %v1539
        %1893 = vmatprep.subr.mxu0 %v1549
        %1894 = vmatpush1.msra.mxu0 %v1548
        %1895 = vmatprep.subr.mxu0 %v1558
        %1896 = vmatpush1.msra.mxu0 %v1557
        %1897 = vmatprep.subr.mxu0 %v1567
        %1898 = vmatpush1.msra.mxu0 %v1566
        %1899 = vmatprep.subr.mxu0 %v1576
        %1900 = vmatpush1.msra.mxu0 %v1575
        %1901 = vmatprep.subr.mxu0 %v1585
        %1902 = vmatpush1.msra.mxu0 %v1584
        %1903 = vmatprep.subr.mxu0 0.0
        %1904 = vmatpush1.msra.mxu0 0.0
        %1905 = vmatprep.subr.mxu0 0.0
        %1906 = vmatpush1.msra.mxu0 0.0
        %1907 = vmatprep.subr.mxu0 0.0
        %1908 = vmatpush1.msra.mxu0 0.0
        %1909 = vmatprep.subr.mxu0 0.0
        %1910 = vmatpush1.msra.mxu0 0.0
        %1911 = vmatprep.subr.mxu0 0.0
        %1912 = vmatpush1.msra.mxu0 0.0
        %1913 = vmatprep.subr.mxu0 0.0
        %1914 = vmatpush1.msra.mxu0 0.0
        %1915 = vmatprep.subr.mxu0 0.0
        %1916 = vmatpush1.msra.mxu0 0.0
        %1917 = vmatprep.subr.mxu0 0.0
        %1918 = vmatpush1.msra.mxu0 0.0
        %1919 = vmatprep.subr.mxu0 0.0
        %1920 = vmatpush1.msra.mxu0 0.0
        %1921 = vmatprep.subr.mxu0 0.0
        %1922 = vmatpush1.msra.mxu0 0.0
        %1923 = vmatprep.subr.mxu0 0.0
        %1924 = vmatpush1.msra.mxu0 0.0
        %1925 = vmatprep.subr.mxu0 0.0
        %1926 = vmatpush1.msra.mxu0 0.0
        %1927 = vmatprep.subr.mxu0 0.0
        %1928 = vmatpush1.msra.mxu0 0.0
        %1929 = vmatprep.subr.mxu0 0.0
        %1930 = vmatpush1.msra.mxu0 0.0
        %1931 = vmatprep.subr.mxu0 0.0
        %1932 = vmatpush1.msra.mxu0 0.0
        %1933 = vmatprep.subr.mxu0 0.0
        %1934 = vmatpush1.msra.mxu0 0.0
        %1935 = vmatprep.subr.mxu0 0.0
        %1936 = vmatpush1.msra.mxu0 0.0
        %1937 = vmatprep.subr.mxu0 0.0
        %1938 = vmatpush1.msra.mxu0 0.0
        %1939 = vmatprep.subr.mxu0 0.0
        %1940 = vmatpush1.msra.mxu0 0.0
        %1941 = vmatprep.subr.mxu0 0.0
        %1942 = vmatpush1.msra.mxu0 0.0
        %1943 = vmatprep.subr.mxu0 0.0
        %1944 = vmatpush1.msra.mxu0 0.0
        %1945 = vmatprep.subr.mxu0 0.0
        %1946 = vmatpush1.msra.mxu0 0.0
        %1947 = vmatprep.subr.mxu0 0.0
        %1948 = vmatpush1.msra.mxu0 0.0
        %1949 = vmatprep.mubr.f32.mxu0 0.0
        %1950 = vmatmul.mubr.f32.gmra.mrb[0].mxu0 %v1670
        %v1951 = vpop.f32.mrb[0].mxu0
        %v1952 = vadd.f32 %v1323, %v1951
        %v1953 = vpop.f32.mrb[0].mxu0
        %v1954 = vadd.f32 %v1323, %v1953
        %1955 = vdwg.mxu0
        %1956 = vmatprep.subr.mxu0 0.0
        %1957 = vmatpush1.msra.mxu0 %v1514
        %1958 = vmatprep.subr.mxu0 0.0
        %1959 = vmatpush1.msra.mxu0 %v1523
        %1960 = vmatprep.subr.mxu0 0.0
        %1961 = vmatpush1.msra.mxu0 %v1532
        %1962 = vmatprep.subr.mxu0 0.0
        %1963 = vmatpush1.msra.mxu0 %v1541
        %1964 = vmatprep.subr.mxu0 0.0
        %1965 = vmatpush1.msra.mxu0 %v1550
        %1966 = vmatprep.subr.mxu0 0.0
        %1967 = vmatpush1.msra.mxu0 %v1559
        %1968 = vmatprep.subr.mxu0 0.0
        %1969 = vmatpush1.msra.mxu0 %v1568
        %1970 = vmatprep.subr.mxu0 0.0
        %1971 = vmatpush1.msra.mxu0 %v1577
        %1972 = vmatprep.subr.mxu0 0.0
        %1973 = vmatpush1.msra.mxu0 %v1586
        %1974 = vmatprep.subr.mxu0 0.0
        %1975 = vmatpush1.msra.mxu0 0.0
        %1976 = vmatprep.subr.mxu0 0.0
        %1977 = vmatpush1.msra.mxu0 0.0
        %1978 = vmatprep.subr.mxu0 0.0
        %1979 = vmatpush1.msra.mxu0 0.0
        %1980 = vmatprep.subr.mxu0 0.0
        %1981 = vmatpush1.msra.mxu0 0.0
        %1982 = vmatprep.subr.mxu0 0.0
        %1983 = vmatpush1.msra.mxu0 0.0
        %1984 = vmatprep.subr.mxu0 0.0
        %1985 = vmatpush1.msra.mxu0 0.0
        %1986 = vmatprep.subr.mxu0 0.0
        %1987 = vmatpush1.msra.mxu0 0.0
        %1988 = vmatprep.subr.mxu0 0.0
        %1989 = vmatpush1.msra.mxu0 0.0
        %1990 = vmatprep.subr.mxu0 0.0
        %1991 = vmatpush1.msra.mxu0 0.0
        %1992 = vmatprep.subr.mxu0 0.0
        %1993 = vmatpush1.msra.mxu0 0.0
        %1994 = vmatprep.subr.mxu0 0.0
        %1995 = vmatpush1.msra.mxu0 0.0
        %1996 = vmatprep.subr.mxu0 0.0
        %1997 = vmatpush1.msra.mxu0 0.0
        %1998 = vmatprep.subr.mxu0 0.0
        %1999 = vmatpush1.msra.mxu0 0.0
        %2000 = vmatprep.subr.mxu0 0.0
        %2001 = vmatpush1.msra.mxu0 0.0
        %2002 = vmatprep.subr.mxu0 0.0
        %2003 = vmatpush1.msra.mxu0 0.0
        %2004 = vmatprep.subr.mxu0 0.0
        %2005 = vmatpush1.msra.mxu0 0.0
        %2006 = vmatprep.subr.mxu0 0.0
        %2007 = vmatpush1.msra.mxu0 0.0
        %2008 = vmatprep.subr.mxu0 0.0
        %2009 = vmatpush1.msra.mxu0 0.0
        %2010 = vmatprep.subr.mxu0 0.0
        %2011 = vmatpush1.msra.mxu0 0.0
        %2012 = vmatprep.subr.mxu0 0.0
        %2013 = vmatpush1.msra.mxu0 0.0
        %2014 = vmatprep.subr.mxu0 0.0
        %2015 = vmatpush1.msra.mxu0 0.0
        %2016 = vmatprep.subr.mxu0 0.0
        %2017 = vmatpush1.msra.mxu0 0.0
        %2018 = vmatprep.subr.mxu0 0.0
        %2019 = vmatpush1.msra.mxu0 0.0
        %2020 = vmatprep.mubr.f32.mxu0 0.0
        %2021 = vmatmul.mubr.f32.gmra.mrb[0].mxu0 %v1670
        %v2022 = vpop.f32.mrb[0].mxu0
        %v2023 = vadd.f32 %v1323, %v2022
        %v2024 = vpop.f32.mrb[0].mxu0
        %2025 = vdwg.mxu0
        %v2026 = vmax.f32 %v1739, 0.0
        %v2027 = vmax.f32 %v1741, 0.0
        %v2028 = vmax.f32 %v1810, 0.0
        %v2029 = vmax.f32 %v1812, 0.0
        %v2030 = vmax.f32 %v1881, 0.0
        %v2031 = vmax.f32 %v1883, 0.0
        %v2032 = vmax.f32 %v1952, 0.0
        %v2033 = vmax.f32 %v1954, 0.0
        %v2034 = vmax.f32 %v2023, 0.0
        %v2035 = vld [vmem:[#allocation6] sm:$0xff]
        %v2036 = vld [vmem:[#allocation6 + $0x8] sm:$0x1]
        %v2039 = vlaneseq
        %v2040 = vshrl.u32 %v2039, 7
        %v2041 = vsub.s32 0, %v2040
        %v2042 = vrot.slane %v2035, %v2041
        %v2043 = vlaneseq
        %v2044 = vshrl.u32 %v2043, 7
        %v2045 = vsub.s32 1, %v2044
        %v2046 = vrot.slane %v2035, %v2045
        %v2047 = vlaneseq
        %v2048 = vshrl.u32 %v2047, 7
        %v2049 = vsub.s32 2, %v2048
        %v2050 = vrot.slane %v2035, %v2049
        %v2051 = vlaneseq
        %v2052 = vshrl.u32 %v2051, 7
        %v2053 = vsub.s32 3, %v2052
        %v2054 = vrot.slane %v2035, %v2053
        %v2055 = vlaneseq
        %v2056 = vshrl.u32 %v2055, 7
        %v2057 = vsub.s32 4, %v2056
        %v2058 = vrot.slane %v2035, %v2057
        %v2059 = vlaneseq
        %v2060 = vshrl.u32 %v2059, 7
        %v2061 = vsub.s32 5, %v2060
        %v2062 = vrot.slane %v2035, %v2061
        %v2063 = vlaneseq
        %v2064 = vshrl.u32 %v2063, 7
        %v2065 = vsub.s32 6, %v2064
        %v2066 = vrot.slane %v2035, %v2065
        %v2067 = vlaneseq
        %v2068 = vshrl.u32 %v2067, 7
        %v2069 = vsub.s32 7, %v2068
        %v2070 = vrot.slane %v2035, %v2069
        %v2071 = vlaneseq
        %v2072 = vshrl.u32 %v2071, 7
        %v2073 = vsub.s32 0, %v2072
        %v2074 = vrot.slane %v2036, %v2073
        %v2084 = vmul.f32 %v2026, %v2042
        %v2085 = vmul.f32 %v2027, %v2046
        %v2086 = vmul.f32 %v2028, %v2050
        %v2087 = vmul.f32 %v2029, %v2054
        %v2088 = vmul.f32 %v2030, %v2058
        %v2089 = vmul.f32 %v2031, %v2062
        %v2090 = vmul.f32 %v2032, %v2066
        %v2091 = vmul.f32 %v2033, %v2070
        %v2092 = vmul.f32 %v2034, %v2074
        %2093 = vst [vmem:[#allocation3] sm:$0xff] 0.0
        %2094 = vst [vmem:[#allocation3 + $0x8] sm:$0xff] 0.0
        %2095 = vst [vmem:[#allocation3 + $0x10] sm:$0xff] 0.0
        %2096 = vst [vmem:[#allocation3 + $0x18] sm:$0xff] 0.0
        %2097 = vst [vmem:[#allocation3 + $0x20] sm:$0xff] 0.0
        %v2106 = vcombine.low %v2084, %v2085
        %v2107 = vcombine.low %v2086, %v2087
        %v2108 = vcombine.low %v2088, %v2089
        %v2109 = vcombine.low %v2090, %v2091
        %2114 = vst [vmem:[#allocation3 + $0x4] sm:$0xff] %v2106
        %2115 = vst [vmem:[#allocation3 + $0xc] sm:$0xff] %v2107
        %2116 = vst [vmem:[#allocation3 + $0x14] sm:$0xff] %v2108
        %2117 = vst [vmem:[#allocation3 + $0x1c] sm:$0xff] %v2109
        %vm2118 = vcmask 519168
        %2119 = vst.msk [vmem:[#allocation3 + $0x24] sm:$0xf] %vm2118, %v2092
        %v2120 = vld [vmem:[#allocation3] sm:$0xff]
        %v2121 = vld [vmem:[#allocation3 + $0x8] sm:$0xff]
        %v2122 = vld [vmem:[#allocation3 + $0x10] sm:$0xff]
        %v2123 = vld [vmem:[#allocation3 + $0x18] sm:$0xff]
        %v2124 = vld [vmem:[#allocation3 + $0x20] sm:$0xff]
        %v2130 = vcombine.high %v2120, %v2120
        %v2131 = vcombine.high %v2121, %v2121
        %v2132 = vcombine.high %v2122, %v2122
        %v2133 = vcombine.high %v2123, %v2123
        %v2134 = vcombine.high %v2124, %v2124
        %v2140 = vcombine.low %v2120, %v2120
        %v2141 = vcombine.low %v2121, %v2121
        %v2142 = vcombine.low %v2122, %v2122
        %v2143 = vcombine.low %v2123, %v2123
        %v2144 = vcombine.low %v2124, %v2124
        %2145 = vrot.lane.b32.xlu0 %v2140, 127
        %v2146 = vpop.permute.xlu0 %2145
        %2147 = vrot.lane.b32.xlu0 %v2120, 127
        %v2148 = vpop.permute.xlu0 %2147
        %2149 = vrot.lane.b32.xlu0 %v2141, 127
        %v2150 = vpop.permute.xlu0 %2149
        %2151 = vrot.lane.b32.xlu0 %v2121, 127
        %v2152 = vpop.permute.xlu0 %2151
        %2153 = vrot.lane.b32.xlu0 %v2142, 127
        %v2154 = vpop.permute.xlu0 %2153
        %2155 = vrot.lane.b32.xlu0 %v2122, 127
        %v2156 = vpop.permute.xlu0 %2155
        %2157 = vrot.lane.b32.xlu0 %v2143, 127
        %v2158 = vpop.permute.xlu0 %2157
        %2159 = vrot.lane.b32.xlu0 %v2123, 127
        %v2160 = vpop.permute.xlu0 %2159
        %2161 = vrot.lane.b32.xlu0 %v2144, 127
        %v2162 = vpop.permute.xlu0 %2161
        %2163 = vrot.lane.b32.xlu0 %v2124, 127
        %v2164 = vpop.permute.xlu0 %2163
        %v2165 = vsel %vm1113, %v2146, %v2148
        %v2166 = vsel %vm1113, %v2148, %v2150
        %v2167 = vsel %vm1113, %v2150, %v2152
        %v2168 = vsel %vm1113, %v2152, %v2154
        %v2169 = vsel %vm1113, %v2154, %v2156
        %v2170 = vsel %vm1113, %v2156, %v2158
        %v2171 = vsel %vm1113, %v2158, %v2160
        %v2172 = vsel %vm1113, %v2160, %v2162
        %v2173 = vsel %vm1113, %v2162, %v2164
        %2184 = vrot.lane.b32.xlu0 %v2120, 126
        %v2185 = vpop.permute.xlu0 %2184
        %2186 = vrot.lane.b32.xlu0 %v2130, 126
        %v2187 = vpop.permute.xlu0 %2186
        %2188 = vrot.lane.b32.xlu0 %v2121, 126
        %v2189 = vpop.permute.xlu0 %2188
        %2190 = vrot.lane.b32.xlu0 %v2131, 126
        %v2191 = vpop.permute.xlu0 %2190
        %2192 = vrot.lane.b32.xlu0 %v2122, 126
        %v2193 = vpop.permute.xlu0 %2192
        %2194 = vrot.lane.b32.xlu0 %v2132, 126
        %v2195 = vpop.permute.xlu0 %2194
        %2196 = vrot.lane.b32.xlu0 %v2123, 126
        %v2197 = vpop.permute.xlu0 %2196
        %2198 = vrot.lane.b32.xlu0 %v2133, 126
        %v2199 = vpop.permute.xlu0 %2198
        %2200 = vrot.lane.b32.xlu0 %v2124, 126
        %v2201 = vpop.permute.xlu0 %2200
        %2202 = vrot.lane.b32.xlu0 %v2134, 126
        %v2203 = vpop.permute.xlu0 %2202
        %v2204 = vsel %vm1143, %v2185, %v2187
        %v2205 = vsel %vm1143, %v2187, %v2189
        %v2206 = vsel %vm1143, %v2189, %v2191
        %v2207 = vsel %vm1143, %v2191, %v2193
        %v2208 = vsel %vm1143, %v2193, %v2195
        %v2209 = vsel %vm1143, %v2195, %v2197
        %v2210 = vsel %vm1143, %v2197, %v2199
        %v2211 = vsel %vm1143, %v2199, %v2201
        %v2212 = vsel %vm1143, %v2201, %v2203
        %2223 = vrot.lane.b32.xlu0 %v2140, 94
        %v2224 = vpop.permute.xlu0 %2223
        %2225 = vrot.lane.b32.xlu0 %v2120, 94
        %v2226 = vpop.permute.xlu0 %2225
        %2227 = vrot.lane.b32.xlu0 %v2141, 94
        %v2228 = vpop.permute.xlu0 %2227
        %2229 = vrot.lane.b32.xlu0 %v2121, 94
        %v2230 = vpop.permute.xlu0 %2229
        %2231 = vrot.lane.b32.xlu0 %v2142, 94
        %v2232 = vpop.permute.xlu0 %2231
        %2233 = vrot.lane.b32.xlu0 %v2122, 94
        %v2234 = vpop.permute.xlu0 %2233
        %2235 = vrot.lane.b32.xlu0 %v2143, 94
        %v2236 = vpop.permute.xlu0 %2235
        %2237 = vrot.lane.b32.xlu0 %v2123, 94
        %v2238 = vpop.permute.xlu0 %2237
        %2239 = vrot.lane.b32.xlu0 %v2144, 94
        %v2240 = vpop.permute.xlu0 %2239
        %2241 = vrot.lane.b32.xlu0 %v2124, 94
        %v2242 = vpop.permute.xlu0 %2241
        %v2243 = vsel %vm1173, %v2224, %v2226
        %v2244 = vsel %vm1173, %v2226, %v2228
        %v2245 = vsel %vm1173, %v2228, %v2230
        %v2246 = vsel %vm1173, %v2230, %v2232
        %v2247 = vsel %vm1173, %v2232, %v2234
        %v2248 = vsel %vm1173, %v2234, %v2236
        %v2249 = vsel %vm1173, %v2236, %v2238
        %v2250 = vsel %vm1173, %v2238, %v2240
        %v2251 = vsel %vm1173, %v2240, %v2242
        %2262 = vrot.lane.b32.xlu0 %v2130, 93
        %v2263 = vpop.permute.xlu0 %2262
        %2264 = vrot.lane.b32.xlu0 %v2121, 93
        %v2265 = vpop.permute.xlu0 %2264
        %2266 = vrot.lane.b32.xlu0 %v2131, 93
        %v2267 = vpop.permute.xlu0 %2266
        %2268 = vrot.lane.b32.xlu0 %v2122, 93
        %v2269 = vpop.permute.xlu0 %2268
        %2270 = vrot.lane.b32.xlu0 %v2132, 93
        %v2271 = vpop.permute.xlu0 %2270
        %2272 = vrot.lane.b32.xlu0 %v2123, 93
        %v2273 = vpop.permute.xlu0 %2272
        %2274 = vrot.lane.b32.xlu0 %v2133, 93
        %v2275 = vpop.permute.xlu0 %2274
        %2276 = vrot.lane.b32.xlu0 %v2124, 93
        %v2277 = vpop.permute.xlu0 %2276
        %2278 = vrot.lane.b32.xlu0 %v2134, 93
        %v2279 = vpop.permute.xlu0 %2278
        %v2280 = vsel %vm1201, %v2263, %v2265
        %v2281 = vsel %vm1201, %v2265, %v2267
        %v2282 = vsel %vm1201, %v2267, %v2269
        %v2283 = vsel %vm1201, %v2269, %v2271
        %v2284 = vsel %vm1201, %v2271, %v2273
        %v2285 = vsel %vm1201, %v2273, %v2275
        %v2286 = vsel %vm1201, %v2275, %v2277
        %v2287 = vsel %vm1201, %v2277, %v2279
        %2298 = vrot.lane.b32.xlu0 %v2120, 92
        %v2299 = vpop.permute.xlu0 %2298
        %2300 = vrot.lane.b32.xlu0 %v2141, 92
        %v2301 = vpop.permute.xlu0 %2300
        %2302 = vrot.lane.b32.xlu0 %v2121, 92
        %v2303 = vpop.permute.xlu0 %2302
        %2304 = vrot.lane.b32.xlu0 %v2142, 92
        %v2305 = vpop.permute.xlu0 %2304
        %2306 = vrot.lane.b32.xlu0 %v2122, 92
        %v2307 = vpop.permute.xlu0 %2306
        %2308 = vrot.lane.b32.xlu0 %v2143, 92
        %v2309 = vpop.permute.xlu0 %2308
        %2310 = vrot.lane.b32.xlu0 %v2123, 92
        %v2311 = vpop.permute.xlu0 %2310
        %2312 = vrot.lane.b32.xlu0 %v2144, 92
        %v2313 = vpop.permute.xlu0 %2312
        %2314 = vrot.lane.b32.xlu0 %v2124, 92
        %v2315 = vpop.permute.xlu0 %2314
        %v2316 = vsel %vm1228, %v2299, %v2301
        %v2317 = vsel %vm1228, %v2301, %v2303
        %v2318 = vsel %vm1228, %v2303, %v2305
        %v2319 = vsel %vm1228, %v2305, %v2307
        %v2320 = vsel %vm1228, %v2307, %v2309
        %v2321 = vsel %vm1228, %v2309, %v2311
        %v2322 = vsel %vm1228, %v2311, %v2313
        %v2323 = vsel %vm1228, %v2313, %v2315
        %2334 = vrot.lane.b32.xlu0 %v2130, 60
        %v2335 = vpop.permute.xlu0 %2334
        %2336 = vrot.lane.b32.xlu0 %v2121, 60
        %v2337 = vpop.permute.xlu0 %2336
        %2338 = vrot.lane.b32.xlu0 %v2131, 60
        %v2339 = vpop.permute.xlu0 %2338
        %2340 = vrot.lane.b32.xlu0 %v2122, 60
        %v2341 = vpop.permute.xlu0 %2340
        %2342 = vrot.lane.b32.xlu0 %v2132, 60
        %v2343 = vpop.permute.xlu0 %2342
        %2344 = vrot.lane.b32.xlu0 %v2123, 60
        %v2345 = vpop.permute.xlu0 %2344
        %2346 = vrot.lane.b32.xlu0 %v2133, 60
        %v2347 = vpop.permute.xlu0 %2346
        %2348 = vrot.lane.b32.xlu0 %v2124, 60
        %v2349 = vpop.permute.xlu0 %2348
        %2350 = vrot.lane.b32.xlu0 %v2134, 60
        %v2351 = vpop.permute.xlu0 %2350
        %v2352 = vsel %vm1255, %v2335, %v2337
        %v2353 = vsel %vm1255, %v2337, %v2339
        %v2354 = vsel %vm1255, %v2339, %v2341
        %v2355 = vsel %vm1255, %v2341, %v2343
        %v2356 = vsel %vm1255, %v2343, %v2345
        %v2357 = vsel %vm1255, %v2345, %v2347
        %v2358 = vsel %vm1255, %v2347, %v2349
        %v2359 = vsel %vm1255, %v2349, %v2351
        %2370 = vrot.lane.b32.xlu0 %v2120, 59
        %v2371 = vpop.permute.xlu0 %2370
        %2372 = vrot.lane.b32.xlu0 %v2141, 59
        %v2373 = vpop.permute.xlu0 %2372
        %2374 = vrot.lane.b32.xlu0 %v2121, 59
        %v2375 = vpop.permute.xlu0 %2374
        %2376 = vrot.lane.b32.xlu0 %v2142, 59
        %v2377 = vpop.permute.xlu0 %2376
        %2378 = vrot.lane.b32.xlu0 %v2122, 59
        %v2379 = vpop.permute.xlu0 %2378
        %2380 = vrot.lane.b32.xlu0 %v2143, 59
        %v2381 = vpop.permute.xlu0 %2380
        %2382 = vrot.lane.b32.xlu0 %v2123, 59
        %v2383 = vpop.permute.xlu0 %2382
        %2384 = vrot.lane.b32.xlu0 %v2144, 59
        %v2385 = vpop.permute.xlu0 %2384
        %2386 = vrot.lane.b32.xlu0 %v2124, 59
        %v2387 = vpop.permute.xlu0 %2386
        %v2388 = vsel %vm1282, %v2371, %v2373
        %v2389 = vsel %vm1282, %v2373, %v2375
        %v2390 = vsel %vm1282, %v2375, %v2377
        %v2391 = vsel %vm1282, %v2377, %v2379
        %v2392 = vsel %vm1282, %v2379, %v2381
        %v2393 = vsel %vm1282, %v2381, %v2383
        %v2394 = vsel %vm1282, %v2383, %v2385
        %v2395 = vsel %vm1282, %v2385, %v2387
        %2406 = vrot.lane.b32.xlu0 %v2130, 58
        %v2407 = vpop.permute.xlu0 %2406
        %2408 = vrot.lane.b32.xlu0 %v2121, 58
        %v2409 = vpop.permute.xlu0 %2408
        %2410 = vrot.lane.b32.xlu0 %v2131, 58
        %v2411 = vpop.permute.xlu0 %2410
        %2412 = vrot.lane.b32.xlu0 %v2122, 58
        %v2413 = vpop.permute.xlu0 %2412
        %2414 = vrot.lane.b32.xlu0 %v2132, 58
        %v2415 = vpop.permute.xlu0 %2414
        %2416 = vrot.lane.b32.xlu0 %v2123, 58
        %v2417 = vpop.permute.xlu0 %2416
        %2418 = vrot.lane.b32.xlu0 %v2133, 58
        %v2419 = vpop.permute.xlu0 %2418
        %2420 = vrot.lane.b32.xlu0 %v2124, 58
        %v2421 = vpop.permute.xlu0 %2420
        %2422 = vrot.lane.b32.xlu0 %v2134, 58
        %v2423 = vpop.permute.xlu0 %2422
        %v2424 = vsel %vm1309, %v2407, %v2409
        %v2425 = vsel %vm1309, %v2409, %v2411
        %v2426 = vsel %vm1309, %v2411, %v2413
        %v2427 = vsel %vm1309, %v2413, %v2415
        %v2428 = vsel %vm1309, %v2415, %v2417
        %v2429 = vsel %vm1309, %v2417, %v2419
        %v2430 = vsel %vm1309, %v2419, %v2421
        %v2431 = vsel %vm1309, %v2421, %v2423
        %vm2432 = vcmask 1043456
        %v2433 = vsel %vm2432, %v2120, %v2165
        %v2434 = vsel %vm2432, %v2130, %v2166
        %v2435 = vsel %vm2432, %v2121, %v2167
        %v2436 = vsel %vm2432, %v2131, %v2168
        %v2437 = vsel %vm2432, %v2122, %v2169
        %v2438 = vsel %vm2432, %v2132, %v2170
        %v2439 = vsel %vm2432, %v2123, %v2171
        %v2440 = vsel %vm2432, %v2133, %v2172
        %v2441 = vsel %vm2432, %v2124, %v2173
        %v2442 = vsel %vm2432, %v2134, %v2164
        %v2443 = vsel %vm2432, %v2204, %v2243
        %v2444 = vsel %vm2432, %v2205, %v2244
        %v2445 = vsel %vm2432, %v2206, %v2245
        %v2446 = vsel %vm2432, %v2207, %v2246
        %v2447 = vsel %vm2432, %v2208, %v2247
        %v2448 = vsel %vm2432, %v2209, %v2248
        %v2449 = vsel %vm2432, %v2210, %v2249
        %v2450 = vsel %vm2432, %v2211, %v2250
        %v2451 = vsel %vm2432, %v2212, %v2251
        %v2452 = vsel %vm2432, %v2203, %v2242
        %v2453 = vsel %vm2432, %v2263, %v2299
        %v2454 = vsel %vm2432, %v2280, %v2316
        %v2455 = vsel %vm2432, %v2281, %v2317
        %v2456 = vsel %vm2432, %v2282, %v2318
        %v2457 = vsel %vm2432, %v2283, %v2319
        %v2458 = vsel %vm2432, %v2284, %v2320
        %v2459 = vsel %vm2432, %v2285, %v2321
        %v2460 = vsel %vm2432, %v2286, %v2322
        %v2461 = vsel %vm2432, %v2287, %v2323
        %v2462 = vsel %vm2432, %v2279, %v2315
        %v2463 = vsel %vm2432, %v2335, %v2371
        %v2464 = vsel %vm2432, %v2352, %v2388
        %v2465 = vsel %vm2432, %v2353, %v2389
        %v2466 = vsel %vm2432, %v2354, %v2390
        %v2467 = vsel %vm2432, %v2355, %v2391
        %v2468 = vsel %vm2432, %v2356, %v2392
        %v2469 = vsel %vm2432, %v2357, %v2393
        %v2470 = vsel %vm2432, %v2358, %v2394
        %v2471 = vsel %vm2432, %v2359, %v2395
        %v2472 = vsel %vm2432, %v2351, %v2387
        %v2473 = vld [vmem:[%s5] sm:$0xf]
        %v2474 = vld [vmem:[%s6] sm:$0xf]
        %2476 = vset.pattern.permute.xlu0 0
        %2477 = vperm.xlu0 %2476, %v2474
        %v2478 = vpop.permute.xlu0 %2477
        %2520 = vrot.lane.b32.xlu0 %v2433, 35
        %v2521 = vpop.permute.xlu0 %2520
        %2522 = vrot.lane.b32.xlu0 %v2434, 35
        %v2523 = vpop.permute.xlu0 %2522
        %2524 = vrot.lane.b32.xlu0 %v2435, 35
        %v2525 = vpop.permute.xlu0 %2524
        %2526 = vrot.lane.b32.xlu0 %v2436, 35
        %v2527 = vpop.permute.xlu0 %2526
        %2528 = vrot.lane.b32.xlu0 %v2437, 35
        %v2529 = vpop.permute.xlu0 %2528
        %2530 = vrot.lane.b32.xlu0 %v2438, 35
        %v2531 = vpop.permute.xlu0 %2530
        %2532 = vrot.lane.b32.xlu0 %v2439, 35
        %v2533 = vpop.permute.xlu0 %2532
        %2534 = vrot.lane.b32.xlu0 %v2440, 35
        %v2535 = vpop.permute.xlu0 %2534
        %2536 = vrot.lane.b32.xlu0 %v2441, 35
        %v2537 = vpop.permute.xlu0 %2536
        %2538 = vrot.lane.b32.xlu0 %v2442, 35
        %v2539 = vpop.permute.xlu0 %2538
        %2540 = vrot.lane.b32.xlu0 %v2443, 35
        %v2541 = vpop.permute.xlu0 %2540
        %2542 = vrot.lane.b32.xlu0 %v2444, 35
        %v2543 = vpop.permute.xlu0 %2542
        %2544 = vrot.lane.b32.xlu0 %v2445, 35
        %v2545 = vpop.permute.xlu0 %2544
        %2546 = vrot.lane.b32.xlu0 %v2446, 35
        %v2547 = vpop.permute.xlu0 %2546
        %2548 = vrot.lane.b32.xlu0 %v2447, 35
        %v2549 = vpop.permute.xlu0 %2548
        %2550 = vrot.lane.b32.xlu0 %v2448, 35
        %v2551 = vpop.permute.xlu0 %2550
        %2552 = vrot.lane.b32.xlu0 %v2449, 35
        %v2553 = vpop.permute.xlu0 %2552
        %2554 = vrot.lane.b32.xlu0 %v2450, 35
        %v2555 = vpop.permute.xlu0 %2554
        %2556 = vrot.lane.b32.xlu0 %v2451, 35
        %v2557 = vpop.permute.xlu0 %2556
        %2558 = vrot.lane.b32.xlu0 %v2452, 35
        %v2559 = vpop.permute.xlu0 %2558
        %2560 = vrot.lane.b32.xlu0 %v2453, 35
        %v2561 = vpop.permute.xlu0 %2560
        %2562 = vrot.lane.b32.xlu0 %v2454, 35
        %v2563 = vpop.permute.xlu0 %2562
        %2564 = vrot.lane.b32.xlu0 %v2455, 35
        %v2565 = vpop.permute.xlu0 %2564
        %2566 = vrot.lane.b32.xlu0 %v2456, 35
        %v2567 = vpop.permute.xlu0 %2566
        %2568 = vrot.lane.b32.xlu0 %v2457, 35
        %v2569 = vpop.permute.xlu0 %2568
        %2570 = vrot.lane.b32.xlu0 %v2458, 35
        %v2571 = vpop.permute.xlu0 %2570
        %2572 = vrot.lane.b32.xlu0 %v2459, 35
        %v2573 = vpop.permute.xlu0 %2572
        %2574 = vrot.lane.b32.xlu0 %v2460, 35
        %v2575 = vpop.permute.xlu0 %2574
        %2576 = vrot.lane.b32.xlu0 %v2461, 35
        %v2577 = vpop.permute.xlu0 %2576
        %2578 = vrot.lane.b32.xlu0 %v2462, 35
        %v2579 = vpop.permute.xlu0 %2578
        %2580 = vrot.lane.b32.xlu0 %v2463, 35
        %v2581 = vpop.permute.xlu0 %2580
        %2582 = vrot.lane.b32.xlu0 %v2464, 35
        %v2583 = vpop.permute.xlu0 %2582
        %2584 = vrot.lane.b32.xlu0 %v2465, 35
        %v2585 = vpop.permute.xlu0 %2584
        %2586 = vrot.lane.b32.xlu0 %v2466, 35
        %v2587 = vpop.permute.xlu0 %2586
        %2588 = vrot.lane.b32.xlu0 %v2467, 35
        %v2589 = vpop.permute.xlu0 %2588
        %2590 = vrot.lane.b32.xlu0 %v2468, 35
        %v2591 = vpop.permute.xlu0 %2590
        %2592 = vrot.lane.b32.xlu0 %v2469, 35
        %v2593 = vpop.permute.xlu0 %2592
        %2594 = vrot.lane.b32.xlu0 %v2470, 35
        %v2595 = vpop.permute.xlu0 %2594
        %2596 = vrot.lane.b32.xlu0 %v2471, 35
        %v2597 = vpop.permute.xlu0 %2596
        %2598 = vrot.lane.b32.xlu0 %v2472, 35
        %v2599 = vpop.permute.xlu0 %2598
        %2600 = vrot.lane.b32.xlu0 %v2407, 35
        %v2601 = vpop.permute.xlu0 %2600
        %2602 = vrot.lane.b32.xlu0 %v2424, 35
        %v2603 = vpop.permute.xlu0 %2602
        %2604 = vrot.lane.b32.xlu0 %v2425, 35
        %v2605 = vpop.permute.xlu0 %2604
        %2606 = vrot.lane.b32.xlu0 %v2426, 35
        %v2607 = vpop.permute.xlu0 %2606
        %2608 = vrot.lane.b32.xlu0 %v2427, 35
        %v2609 = vpop.permute.xlu0 %2608
        %2610 = vrot.lane.b32.xlu0 %v2428, 35
        %v2611 = vpop.permute.xlu0 %2610
        %2612 = vrot.lane.b32.xlu0 %v2429, 35
        %v2613 = vpop.permute.xlu0 %2612
        %2614 = vrot.lane.b32.xlu0 %v2430, 35
        %v2615 = vpop.permute.xlu0 %2614
        %2616 = vrot.lane.b32.xlu0 %v2431, 35
        %v2617 = vpop.permute.xlu0 %2616
        %2618 = vrot.lane.b32.xlu0 %v2423, 35
        %v2619 = vpop.permute.xlu0 %2618
        %v2620 = vsel %vm1505, %v2521, %v2523
        %v2621 = vsel %vm1505, %v2523, %v2525
        %v2622 = vsel %vm1505, %v2525, %v2527
        %v2623 = vsel %vm1505, %v2527, %v2529
        %v2624 = vsel %vm1505, %v2529, %v2531
        %v2625 = vsel %vm1505, %v2531, %v2533
        %v2626 = vsel %vm1505, %v2533, %v2535
        %v2627 = vsel %vm1505, %v2535, %v2537
        %v2628 = vsel %vm1505, %v2537, %v2539
        %v2629 = vsel %vm1505, %v2541, %v2543
        %v2630 = vsel %vm1505, %v2543, %v2545
        %v2631 = vsel %vm1505, %v2545, %v2547
        %v2632 = vsel %vm1505, %v2547, %v2549
        %v2633 = vsel %vm1505, %v2549, %v2551
        %v2634 = vsel %vm1505, %v2551, %v2553
        %v2635 = vsel %vm1505, %v2553, %v2555
        %v2636 = vsel %vm1505, %v2555, %v2557
        %v2637 = vsel %vm1505, %v2557, %v2559
        %v2638 = vsel %vm1505, %v2561, %v2563
        %v2639 = vsel %vm1505, %v2563, %v2565
        %v2640 = vsel %vm1505, %v2565, %v2567
        %v2641 = vsel %vm1505, %v2567, %v2569
        %v2642 = vsel %vm1505, %v2569, %v2571
        %v2643 = vsel %vm1505, %v2571, %v2573
        %v2644 = vsel %vm1505, %v2573, %v2575
        %v2645 = vsel %vm1505, %v2575, %v2577
        %v2646 = vsel %vm1505, %v2577, %v2579
        %v2647 = vsel %vm1505, %v2581, %v2583
        %v2648 = vsel %vm1505, %v2583, %v2585
        %v2649 = vsel %vm1505, %v2585, %v2587
        %v2650 = vsel %vm1505, %v2587, %v2589
        %v2651 = vsel %vm1505, %v2589, %v2591
        %v2652 = vsel %vm1505, %v2591, %v2593
        %v2653 = vsel %vm1505, %v2593, %v2595
        %v2654 = vsel %vm1505, %v2595, %v2597
        %v2655 = vsel %vm1505, %v2597, %v2599
        %v2656 = vsel %vm1505, %v2601, %v2603
        %v2657 = vsel %vm1505, %v2603, %v2605
        %v2658 = vsel %vm1505, %v2605, %v2607
        %v2659 = vsel %vm1505, %v2607, %v2609
        %v2660 = vsel %vm1505, %v2609, %v2611
        %v2661 = vsel %vm1505, %v2611, %v2613
        %v2662 = vsel %vm1505, %v2613, %v2615
        %v2663 = vsel %vm1505, %v2615, %v2617
        %v2664 = vsel %vm1505, %v2617, %v2619
        %vm2701 = vcmask 293888
        %v2703 = vsel %vm2701, %v2473, 0
        %v2705 = vsel %vm2432, %v2656, 0
        %v2707 = vsel %vm2432, %v2657, 0
        %v2709 = vsel %vm2432, %v2658, 0
        %v2711 = vsel %vm2432, %v2659, 0
        %v2713 = vsel %vm2432, %v2660, 0
        %v2715 = vsel %vm2432, %v2661, 0
        %v2717 = vsel %vm2432, %v2662, 0
        %v2719 = vsel %vm2432, %v2663, 0
        %v2721 = vsel %vm2432, %v2664, 0
        %2723 = vmatprep.subr.mxu0 %v2621
        %2724 = vmatpush1.msra.mxu0 %v2620
        %2725 = vmatprep.subr.mxu0 %v2630
        %2726 = vmatpush1.msra.mxu0 %v2629
        %2727 = vmatprep.subr.mxu0 %v2639
        %2728 = vmatpush1.msra.mxu0 %v2638
        %2729 = vmatprep.subr.mxu0 %v2648
        %2730 = vmatpush1.msra.mxu0 %v2647
        %2731 = vmatprep.subr.mxu0 %v2707
        %2732 = vmatpush1.msra.mxu0 %v2705
        %2733 = vmatprep.subr.mxu0 0.0
        %2734 = vmatpush1.msra.mxu0 0.0
        %2735 = vmatprep.subr.mxu0 0.0
        %2736 = vmatpush1.msra.mxu0 0.0
        %2737 = vmatprep.subr.mxu0 0.0
        %2738 = vmatpush1.msra.mxu0 0.0
        %2739 = vmatprep.subr.mxu0 0.0
        %2740 = vmatpush1.msra.mxu0 0.0
        %2741 = vmatprep.subr.mxu0 0.0
        %2742 = vmatpush1.msra.mxu0 0.0
        %2743 = vmatprep.subr.mxu0 0.0
        %2744 = vmatpush1.msra.mxu0 0.0
        %2745 = vmatprep.subr.mxu0 0.0
        %2746 = vmatpush1.msra.mxu0 0.0
        %2747 = vmatprep.subr.mxu0 0.0
        %2748 = vmatpush1.msra.mxu0 0.0
        %2749 = vmatprep.subr.mxu0 0.0
        %2750 = vmatpush1.msra.mxu0 0.0
        %2751 = vmatprep.subr.mxu0 0.0
        %2752 = vmatpush1.msra.mxu0 0.0
        %2753 = vmatprep.subr.mxu0 0.0
        %2754 = vmatpush1.msra.mxu0 0.0
        %2755 = vmatprep.subr.mxu0 0.0
        %2756 = vmatpush1.msra.mxu0 0.0
        %2757 = vmatprep.subr.mxu0 0.0
        %2758 = vmatpush1.msra.mxu0 0.0
        %2759 = vmatprep.subr.mxu0 0.0
        %2760 = vmatpush1.msra.mxu0 0.0
        %2761 = vmatprep.subr.mxu0 0.0
        %2762 = vmatpush1.msra.mxu0 0.0
        %2763 = vmatprep.subr.mxu0 0.0
        %2764 = vmatpush1.msra.mxu0 0.0
        %2765 = vmatprep.subr.mxu0 0.0
        %2766 = vmatpush1.msra.mxu0 0.0
        %2767 = vmatprep.subr.mxu0 0.0
        %2768 = vmatpush1.msra.mxu0 0.0
        %2769 = vmatprep.subr.mxu0 0.0
        %2770 = vmatpush1.msra.mxu0 0.0
        %2771 = vmatprep.subr.mxu0 0.0
        %2772 = vmatpush1.msra.mxu0 0.0
        %2773 = vmatprep.subr.mxu0 0.0
        %2774 = vmatpush1.msra.mxu0 0.0
        %2775 = vmatprep.subr.mxu0 0.0
        %2776 = vmatpush1.msra.mxu0 0.0
        %2777 = vmatprep.subr.mxu0 0.0
        %2778 = vmatpush1.msra.mxu0 0.0
        %2779 = vmatprep.subr.mxu0 0.0
        %2780 = vmatpush1.msra.mxu0 0.0
        %2781 = vmatprep.subr.mxu0 0.0
        %2782 = vmatpush1.msra.mxu0 0.0
        %2783 = vmatprep.subr.mxu0 0.0
        %2784 = vmatpush1.msra.mxu0 0.0
        %2785 = vmatprep.subr.mxu0 0.0
        %2786 = vmatpush1.msra.mxu0 0.0
        %2787 = vmatprep.mubr.f32.mxu0 0.0
        %2788 = vmatmul.mubr.f32.gmra.mrb[0].mxu0 %v2703
        %v2789 = vpop.f32.mrb[0].mxu0
        %v2790 = vadd.f32 %v2478, %v2789
        %v2791 = vpop.f32.mrb[0].mxu0
        %v2792 = vadd.f32 %v2478, %v2791
        %2793 = vdwg.mxu0
        %2794 = vmatprep.subr.mxu0 %v2623
        %2795 = vmatpush1.msra.mxu0 %v2622
        %2796 = vmatprep.subr.mxu0 %v2632
        %2797 = vmatpush1.msra.mxu0 %v2631
        %2798 = vmatprep.subr.mxu0 %v2641
        %2799 = vmatpush1.msra.mxu0 %v2640
        %2800 = vmatprep.subr.mxu0 %v2650
        %2801 = vmatpush1.msra.mxu0 %v2649
        %2802 = vmatprep.subr.mxu0 %v2711
        %2803 = vmatpush1.msra.mxu0 %v2709
        %2804 = vmatprep.subr.mxu0 0.0
        %2805 = vmatpush1.msra.mxu0 0.0
        %2806 = vmatprep.subr.mxu0 0.0
        %2807 = vmatpush1.msra.mxu0 0.0
        %2808 = vmatprep.subr.mxu0 0.0
        %2809 = vmatpush1.msra.mxu0 0.0
        %2810 = vmatprep.subr.mxu0 0.0
        %2811 = vmatpush1.msra.mxu0 0.0
        %2812 = vmatprep.subr.mxu0 0.0
        %2813 = vmatpush1.msra.mxu0 0.0
        %2814 = vmatprep.subr.mxu0 0.0
        %2815 = vmatpush1.msra.mxu0 0.0
        %2816 = vmatprep.subr.mxu0 0.0
        %2817 = vmatpush1.msra.mxu0 0.0
        %2818 = vmatprep.subr.mxu0 0.0
        %2819 = vmatpush1.msra.mxu0 0.0
        %2820 = vmatprep.subr.mxu0 0.0
        %2821 = vmatpush1.msra.mxu0 0.0
        %2822 = vmatprep.subr.mxu0 0.0
        %2823 = vmatpush1.msra.mxu0 0.0
        %2824 = vmatprep.subr.mxu0 0.0
        %2825 = vmatpush1.msra.mxu0 0.0
        %2826 = vmatprep.subr.mxu0 0.0
        %2827 = vmatpush1.msra.mxu0 0.0
        %2828 = vmatprep.subr.mxu0 0.0
        %2829 = vmatpush1.msra.mxu0 0.0
        %2830 = vmatprep.subr.mxu0 0.0
        %2831 = vmatpush1.msra.mxu0 0.0
        %2832 = vmatprep.subr.mxu0 0.0
        %2833 = vmatpush1.msra.mxu0 0.0
        %2834 = vmatprep.subr.mxu0 0.0
        %2835 = vmatpush1.msra.mxu0 0.0
        %2836 = vmatprep.subr.mxu0 0.0
        %2837 = vmatpush1.msra.mxu0 0.0
        %2838 = vmatprep.subr.mxu0 0.0
        %2839 = vmatpush1.msra.mxu0 0.0
        %2840 = vmatprep.subr.mxu0 0.0
        %2841 = vmatpush1.msra.mxu0 0.0
        %2842 = vmatprep.subr.mxu0 0.0
        %2843 = vmatpush1.msra.mxu0 0.0
        %2844 = vmatprep.subr.mxu0 0.0
        %2845 = vmatpush1.msra.mxu0 0.0
        %2846 = vmatprep.subr.mxu0 0.0
        %2847 = vmatpush1.msra.mxu0 0.0
        %2848 = vmatprep.subr.mxu0 0.0
        %2849 = vmatpush1.msra.mxu0 0.0
        %2850 = vmatprep.subr.mxu0 0.0
        %2851 = vmatpush1.msra.mxu0 0.0
        %2852 = vmatprep.subr.mxu0 0.0
        %2853 = vmatpush1.msra.mxu0 0.0
        %2854 = vmatprep.subr.mxu0 0.0
        %2855 = vmatpush1.msra.mxu0 0.0
        %2856 = vmatprep.subr.mxu0 0.0
        %2857 = vmatpush1.msra.mxu0 0.0
        %2858 = vmatprep.mubr.f32.mxu0 0.0
        %2859 = vmatmul.mubr.f32.gmra.mrb[0].mxu0 %v2703
        %v2860 = vpop.f32.mrb[0].mxu0
        %v2861 = vadd.f32 %v2478, %v2860
        %v2862 = vpop.f32.mrb[0].mxu0
        %v2863 = vadd.f32 %v2478, %v2862
        %2864 = vdwg.mxu0
        %2865 = vmatprep.subr.mxu0 %v2625
        %2866 = vmatpush1.msra.mxu0 %v2624
        %2867 = vmatprep.subr.mxu0 %v2634
        %2868 = vmatpush1.msra.mxu0 %v2633
        %2869 = vmatprep.subr.mxu0 %v2643
        %2870 = vmatpush1.msra.mxu0 %v2642
        %2871 = vmatprep.subr.mxu0 %v2652
        %2872 = vmatpush1.msra.mxu0 %v2651
        %2873 = vmatprep.subr.mxu0 %v2715
        %2874 = vmatpush1.msra.mxu0 %v2713
        %2875 = vmatprep.subr.mxu0 0.0
        %2876 = vmatpush1.msra.mxu0 0.0
        %2877 = vmatprep.subr.mxu0 0.0
        %2878 = vmatpush1.msra.mxu0 0.0
        %2879 = vmatprep.subr.mxu0 0.0
        %2880 = vmatpush1.msra.mxu0 0.0
        %2881 = vmatprep.subr.mxu0 0.0
        %2882 = vmatpush1.msra.mxu0 0.0
        %2883 = vmatprep.subr.mxu0 0.0
        %2884 = vmatpush1.msra.mxu0 0.0
        %2885 = vmatprep.subr.mxu0 0.0
        %2886 = vmatpush1.msra.mxu0 0.0
        %2887 = vmatprep.subr.mxu0 0.0
        %2888 = vmatpush1.msra.mxu0 0.0
        %2889 = vmatprep.subr.mxu0 0.0
        %2890 = vmatpush1.msra.mxu0 0.0
        %2891 = vmatprep.subr.mxu0 0.0
        %2892 = vmatpush1.msra.mxu0 0.0
        %2893 = vmatprep.subr.mxu0 0.0
        %2894 = vmatpush1.msra.mxu0 0.0
        %2895 = vmatprep.subr.mxu0 0.0
        %2896 = vmatpush1.msra.mxu0 0.0
        %2897 = vmatprep.subr.mxu0 0.0
        %2898 = vmatpush1.msra.mxu0 0.0
        %2899 = vmatprep.subr.mxu0 0.0
        %2900 = vmatpush1.msra.mxu0 0.0
        %2901 = vmatprep.subr.mxu0 0.0
        %2902 = vmatpush1.msra.mxu0 0.0
        %2903 = vmatprep.subr.mxu0 0.0
        %2904 = vmatpush1.msra.mxu0 0.0
        %2905 = vmatprep.subr.mxu0 0.0
        %2906 = vmatpush1.msra.mxu0 0.0
        %2907 = vmatprep.subr.mxu0 0.0
        %2908 = vmatpush1.msra.mxu0 0.0
        %2909 = vmatprep.subr.mxu0 0.0
        %2910 = vmatpush1.msra.mxu0 0.0
        %2911 = vmatprep.subr.mxu0 0.0
        %2912 = vmatpush1.msra.mxu0 0.0
        %2913 = vmatprep.subr.mxu0 0.0
        %2914 = vmatpush1.msra.mxu0 0.0
        %2915 = vmatprep.subr.mxu0 0.0
        %2916 = vmatpush1.msra.mxu0 0.0
        %2917 = vmatprep.subr.mxu0 0.0
        %2918 = vmatpush1.msra.mxu0 0.0
        %2919 = vmatprep.subr.mxu0 0.0
        %2920 = vmatpush1.msra.mxu0 0.0
        %2921 = vmatprep.subr.mxu0 0.0
        %2922 = vmatpush1.msra.mxu0 0.0
        %2923 = vmatprep.subr.mxu0 0.0
        %2924 = vmatpush1.msra.mxu0 0.0
        %2925 = vmatprep.subr.mxu0 0.0
        %2926 = vmatpush1.msra.mxu0 0.0
        %2927 = vmatprep.subr.mxu0 0.0
        %2928 = vmatpush1.msra.mxu0 0.0
        %2929 = vmatprep.mubr.f32.mxu0 0.0
        %2930 = vmatmul.mubr.f32.gmra.mrb[0].mxu0 %v2703
        %v2931 = vpop.f32.mrb[0].mxu0
        %v2932 = vadd.f32 %v2478, %v2931
        %v2933 = vpop.f32.mrb[0].mxu0
        %v2934 = vadd.f32 %v2478, %v2933
        %2935 = vdwg.mxu0
        %2936 = vmatprep.subr.mxu0 %v2627
        %2937 = vmatpush1.msra.mxu0 %v2626
        %2938 = vmatprep.subr.mxu0 %v2636
        %2939 = vmatpush1.msra.mxu0 %v2635
        %2940 = vmatprep.subr.mxu0 %v2645
        %2941 = vmatpush1.msra.mxu0 %v2644
        %2942 = vmatprep.subr.mxu0 %v2654
        %2943 = vmatpush1.msra.mxu0 %v2653
        %2944 = vmatprep.subr.mxu0 %v2719
        %2945 = vmatpush1.msra.mxu0 %v2717
        %2946 = vmatprep.subr.mxu0 0.0
        %2947 = vmatpush1.msra.mxu0 0.0
        %2948 = vmatprep.subr.mxu0 0.0
        %2949 = vmatpush1.msra.mxu0 0.0
        %2950 = vmatprep.subr.mxu0 0.0
        %2951 = vmatpush1.msra.mxu0 0.0
        %2952 = vmatprep.subr.mxu0 0.0
        %2953 = vmatpush1.msra.mxu0 0.0
        %2954 = vmatprep.subr.mxu0 0.0
        %2955 = vmatpush1.msra.mxu0 0.0
        %2956 = vmatprep.subr.mxu0 0.0
        %2957 = vmatpush1.msra.mxu0 0.0
        %2958 = vmatprep.subr.mxu0 0.0
        %2959 = vmatpush1.msra.mxu0 0.0
        %2960 = vmatprep.subr.mxu0 0.0
        %2961 = vmatpush1.msra.mxu0 0.0
        %2962 = vmatprep.subr.mxu0 0.0
        %2963 = vmatpush1.msra.mxu0 0.0
        %2964 = vmatprep.subr.mxu0 0.0
        %2965 = vmatpush1.msra.mxu0 0.0
        %2966 = vmatprep.subr.mxu0 0.0
        %2967 = vmatpush1.msra.mxu0 0.0
        %2968 = vmatprep.subr.mxu0 0.0
        %2969 = vmatpush1.msra.mxu0 0.0
        %2970 = vmatprep.subr.mxu0 0.0
        %2971 = vmatpush1.msra.mxu0 0.0
        %2972 = vmatprep.subr.mxu0 0.0
        %2973 = vmatpush1.msra.mxu0 0.0
        %2974 = vmatprep.subr.mxu0 0.0
        %2975 = vmatpush1.msra.mxu0 0.0
        %2976 = vmatprep.subr.mxu0 0.0
        %2977 = vmatpush1.msra.mxu0 0.0
        %2978 = vmatprep.subr.mxu0 0.0
        %2979 = vmatpush1.msra.mxu0 0.0
        %2980 = vmatprep.subr.mxu0 0.0
        %2981 = vmatpush1.msra.mxu0 0.0
        %2982 = vmatprep.subr.mxu0 0.0
        %2983 = vmatpush1.msra.mxu0 0.0
        %2984 = vmatprep.subr.mxu0 0.0
        %2985 = vmatpush1.msra.mxu0 0.0
        %2986 = vmatprep.subr.mxu0 0.0
        %2987 = vmatpush1.msra.mxu0 0.0
        %2988 = vmatprep.subr.mxu0 0.0
        %2989 = vmatpush1.msra.mxu0 0.0
        %2990 = vmatprep.subr.mxu0 0.0
        %2991 = vmatpush1.msra.mxu0 0.0
        %2992 = vmatprep.subr.mxu0 0.0
        %2993 = vmatpush1.msra.mxu0 0.0
        %2994 = vmatprep.subr.mxu0 0.0
        %2995 = vmatpush1.msra.mxu0 0.0
        %2996 = vmatprep.subr.mxu0 0.0
        %2997 = vmatpush1.msra.mxu0 0.0
        %2998 = vmatprep.subr.mxu0 0.0
        %2999 = vmatpush1.msra.mxu0 0.0
        %3000 = vmatprep.mubr.f32.mxu0 0.0
        %3001 = vmatmul.mubr.f32.gmra.mrb[0].mxu0 %v2703
        %v3002 = vpop.f32.mrb[0].mxu0
        %v3003 = vadd.f32 %v2478, %v3002
        %v3004 = vpop.f32.mrb[0].mxu0
        %v3005 = vadd.f32 %v2478, %v3004
        %3006 = vdwg.mxu0
        %3007 = vmatprep.subr.mxu0 0.0
        %3008 = vmatpush1.msra.mxu0 %v2628
        %3009 = vmatprep.subr.mxu0 0.0
        %3010 = vmatpush1.msra.mxu0 %v2637
        %3011 = vmatprep.subr.mxu0 0.0
        %3012 = vmatpush1.msra.mxu0 %v2646
        %3013 = vmatprep.subr.mxu0 0.0
        %3014 = vmatpush1.msra.mxu0 %v2655
        %3015 = vmatprep.subr.mxu0 0.0
        %3016 = vmatpush1.msra.mxu0 %v2721
        %3017 = vmatprep.subr.mxu0 0.0
        %3018 = vmatpush1.msra.mxu0 0.0
        %3019 = vmatprep.subr.mxu0 0.0
        %3020 = vmatpush1.msra.mxu0 0.0
        %3021 = vmatprep.subr.mxu0 0.0
        %3022 = vmatpush1.msra.mxu0 0.0
        %3023 = vmatprep.subr.mxu0 0.0
        %3024 = vmatpush1.msra.mxu0 0.0
        %3025 = vmatprep.subr.mxu0 0.0
        %3026 = vmatpush1.msra.mxu0 0.0
        %3027 = vmatprep.subr.mxu0 0.0
        %3028 = vmatpush1.msra.mxu0 0.0
        %3029 = vmatprep.subr.mxu0 0.0
        %3030 = vmatpush1.msra.mxu0 0.0
        %3031 = vmatprep.subr.mxu0 0.0
        %3032 = vmatpush1.msra.mxu0 0.0
        %3033 = vmatprep.subr.mxu0 0.0
        %3034 = vmatpush1.msra.mxu0 0.0
        %3035 = vmatprep.subr.mxu0 0.0
        %3036 = vmatpush1.msra.mxu0 0.0
        %3037 = vmatprep.subr.mxu0 0.0
        %3038 = vmatpush1.msra.mxu0 0.0
        %3039 = vmatprep.subr.mxu0 0.0
        %3040 = vmatpush1.msra.mxu0 0.0
        %3041 = vmatprep.subr.mxu0 0.0
        %3042 = vmatpush1.msra.mxu0 0.0
        %3043 = vmatprep.subr.mxu0 0.0
        %3044 = vmatpush1.msra.mxu0 0.0
        %3045 = vmatprep.subr.mxu0 0.0
        %3046 = vmatpush1.msra.mxu0 0.0
        %3047 = vmatprep.subr.mxu0 0.0
        %3048 = vmatpush1.msra.mxu0 0.0
        %3049 = vmatprep.subr.mxu0 0.0
        %3050 = vmatpush1.msra.mxu0 0.0
        %3051 = vmatprep.subr.mxu0 0.0
        %3052 = vmatpush1.msra.mxu0 0.0
        %3053 = vmatprep.subr.mxu0 0.0
        %3054 = vmatpush1.msra.mxu0 0.0
        %3055 = vmatprep.subr.mxu0 0.0
        %3056 = vmatpush1.msra.mxu0 0.0
        %3057 = vmatprep.subr.mxu0 0.0
        %3058 = vmatpush1.msra.mxu0 0.0
        %3059 = vmatprep.subr.mxu0 0.0
        %3060 = vmatpush1.msra.mxu0 0.0
        %3061 = vmatprep.subr.mxu0 0.0
        %3062 = vmatpush1.msra.mxu0 0.0
        %3063 = vmatprep.subr.mxu0 0.0
        %3064 = vmatpush1.msra.mxu0 0.0
        %3065 = vmatprep.subr.mxu0 0.0
        %3066 = vmatpush1.msra.mxu0 0.0
        %3067 = vmatprep.subr.mxu0 0.0
        %3068 = vmatpush1.msra.mxu0 0.0
        %3069 = vmatprep.subr.mxu0 0.0
        %3070 = vmatpush1.msra.mxu0 0.0
        %3071 = vmatprep.mubr.f32.mxu0 0.0
        %3072 = vmatmul.mubr.f32.gmra.mrb[0].mxu0 %v2703
        %v3073 = vpop.f32.mrb[0].mxu0
        %v3074 = vadd.f32 %v2478, %v3073
        %v3075 = vpop.f32.mrb[0].mxu0
        %3076 = vdwg.mxu0
        %v3077 = vmax.f32 %v2790, 0.0
        %v3078 = vmax.f32 %v2792, 0.0
        %v3079 = vmax.f32 %v2861, 0.0
        %v3080 = vmax.f32 %v2863, 0.0
        %v3081 = vmax.f32 %v2932, 0.0
        %v3082 = vmax.f32 %v2934, 0.0
        %v3083 = vmax.f32 %v3003, 0.0
        %v3084 = vmax.f32 %v3005, 0.0
        %v3085 = vmax.f32 %v3074, 0.0
        %v3094 = vcombine.low %v3077, %v3078
        %v3095 = vcombine.low %v3079, %v3080
        %v3096 = vcombine.low %v3081, %v3082
        %v3097 = vcombine.low %v3083, %v3084
        %3102 = vst [vmem:[%s353] sm:$0xff] %v3094
        %3103 = vst [vmem:[%s353 + $0x8] sm:$0xff] %v3095
        %3104 = vst [vmem:[%s353 + $0x10] sm:$0xff] %v3096
        %3105 = vst [vmem:[%s353 + $0x18] sm:$0xff] %v3097
        %3106 = vst.msk [vmem:[%s353 + $0x20] sm:$0xf] %vm2118, %v3085
        %p3107 = scmp.lt.s32.totalorder %s21, 1
        %s3108 = scalar_select %p3107, %s21, 1
        %s3109 = smul.addr %s3108, 9
        %s3110 = smul.addr %s3109, 4
        %s3111 = scalar_lea.vmem %s8, %s3110
        // Predicated region
        $region61: #{unet_up_forward.1} parent=51 // pred_check
          %p3112 = pneg %p217
        $region62: #{unet_up_forward.1} parent=51 // pred_check_branch
          %3114 = sbr.rel (%p3112) target = $region64
        $region63: #{unet_up_forward.1} parent=51 // pred_region
          _
        $region64: #{unet_up_forward.1} parent=51 // pred_fallthru
          _
      $region52: #{unet_up_forward.1} parent=5 // pred_fallthru
        _
      %p3115 = scmp.le.s32.totalorder 2, %s16
      // Predicated region
      $region65: #{unet_up_forward.1} parent=5 // pred_check
        %p3116 = pneg %p3115
      $region66: #{unet_up_forward.1} parent=5 // pred_check_branch
        %3118 = sbr.rel (%p3116) target = $region68
      $region67: #{unet_up_forward.1} parent=5 // pred_region
        %s3119 = ssub.s32 %s16, 2
        // Predicated region
        $region69: #{unet_up_forward.1} parent=67 // pred_check
          %p3120 = pneg %p223
        $region70: #{unet_up_forward.1} parent=67 // pred_check_branch
          %3122 = sbr.rel (%p3120) target = $region72
        $region71: #{unet_up_forward.1} parent=67 // pred_region
          %p3123 = scmp.lt.s32.totalorder %s22, 1
          %s3124 = scalar_select %p3123, %s22, 1
          %s3125 = smul.addr %s3124, 9
          %s3126 = smul.addr %s3125, 4
          %s3127 = scalar_lea.vmem %s8, %s3126
        $region72: #{unet_up_forward.1} parent=67 // pred_fallthru
          _
      $region68: #{unet_up_forward.1} parent=5 // pred_fallthru
        _
    $region6: #{unet_up_forward.1} parent=1 // loop_footer
      %s20 = sadd.s32 1, %s16
    $region7: #{unet_up_forward.1} parent=1 // loop_footer_branch
      %15 = sbr.rel target = $region3
    $region8: #{unet_up_forward.1} parent=1 // loop_exit
      _
    %3128 = vsyncpa [#allocation5], 1
    %s3129 = scalar_lea.sflag [#allocation5], 1
    %3130 = vsyncpa %s3129, 1
    %3131 = vsyncpa [#allocation7], 1

</llo_original>
